<compile_context>
chip_gen: v7x
topology: tpu7x:2x2x1
jax: 0.10.0
libtpu: 0.0.40
codegen_flags: <defaults>
</compile_context>

<pallas_src>
import functools

import jax
import jax.numpy as jnp
from jax import lax
from jax.experimental import pallas as pl
from jax.experimental.pallas import tpu as pltpu

LANE = 128  # TPU lane width; channel dims are padded up to a multiple of this.


def _round_up(v, m):
    return (v + m - 1) // m * m


def _conv_block_kernel(x_ref, w1_ref, b1_ref, w2_ref, b2_ref, w3_ref, b3_ref,
                       o_ref, pad_ref, *, H, W, C):
    """One batch image per grid step (NHWC, channels lane-dense).

    x_ref  : (1, H, W, Cin_p)  bf16 input tile
    w1_ref : (Cin_p, C)        bf16 1x1 conv weight
    w2_ref : (9*C, C)          bf16 3x3 conv weight (BN folded, im2col layout)
    w3_ref : (9*C, C)          bf16 3x3 conv weight (BN folded, im2col layout)
    b*_ref : (1, 1, C)         f32 biases (BN folded for b2/b3)
    o_ref  : (1, H, W, C)      f32 output tile (also holds the residual)
    pad_ref: (H+2, W+2, C)     f32 VMEM scratch (zero border, activation interior)
    """
    dn = (((2,), (0,)), ((), ()))   # contract lhs last dim with rhs first dim

    # Zero only the 1-pixel border of the scratch; the interior is fully
    # rewritten before every use.  Done per grid step (not under
    # pl.when(program_id == 0)) so it remains correct when the "parallel"
    # grid axis is sharded across TensorCores (each core owns its own scratch).
    zrow = jnp.zeros((1, W + 2, C), jnp.float32)
    zcol = jnp.zeros((H, 1, C), jnp.float32)
    pad_ref[0:1, :, :] = zrow
    pad_ref[H + 1:H + 2, :, :] = zrow
    pad_ref[1:H + 1, 0:1, :] = zcol
    pad_ref[1:H + 1, W + 1:W + 2, :] = zcol

    # --- 1x1 channel-transform conv: bf16 MXU matmul, f32 accumulation ------
    t = lax.dot_general(x_ref[0], w1_ref[...], dn,
                        preferred_element_type=jnp.float32) + b1_ref[...]
    # Park the residual in the output block instead of a separate live value.
    o_ref[0] = t

    def conv3x3(a, w_ref, b):
        # im2col: write the activation into the padded-scratch interior,
        # gather the 9 shifted windows along the lane axis (each 128-aligned)
        # and do ONE MXU matmul with K = 9*C.
        pad_ref[1:H + 1, 1:W + 1, :] = a
        cols = [pad_ref[dy:dy + H, dx:dx + W, :]
                for dy in range(3) for dx in range(3)]
        col9 = jnp.concatenate(cols, axis=-1).astype(jnp.bfloat16)  # (H,W,9C)
        y = lax.dot_general(col9, w_ref[...], dn,
                            preferred_element_type=jnp.float32)
        return y + b

    # --- double 3x3 conv with folded BN, ReLU between ------------------------
    y = jnp.maximum(conv3x3(t, w2_ref, b2_ref[...]), 0.0)
    y = conv3x3(y, w3_ref, b3_ref[...])

    # --- residual add + final ReLU -------------------------------------------
    o_ref[0] = jnp.maximum(y + o_ref[0], 0.0)


def convolution_block(x_nchw, params):
    """Pallas implementation of Convolution_Block.forward (inference-mode BN).

    Accepts / returns NCHW to match the PyTorch module; internally runs NHWC
    with channels zero-padded to a multiple of 128 (lane-dense), bf16 matmul
    operands and f32 accumulation.
    """
    w1, b1, w2, b2, w3, b3 = params          # original (unpadded) sizes, f32
    N, Cin, H, W = x_nchw.shape
    Cout = w1.shape[-1]
    Cin_p = _round_up(Cin, LANE)
    C_p = _round_up(Cout, LANE)

    # NCHW -> NHWC (kept only to preserve the PyTorch interface; callers that
    # are already NHWC should drop this and the output transpose).
    x = jnp.transpose(x_nchw, (0, 2, 3, 1)).astype(jnp.float32)
    x = jnp.pad(x, ((0, 0), (0, 0), (0, 0), (0, Cin_p - Cin)))
    x = x.astype(jnp.bfloat16)

    w1p = jnp.pad(w1, ((0, Cin_p - Cin), (0, C_p - Cout))).astype(jnp.bfloat16)
    b1p = jnp.pad(b1, (0, C_p - Cout)).reshape(1, 1, C_p).astype(jnp.float32)

    def prep3x3(w, b):
        # HWIO (3,3,C,C) -> im2col matrix (9*C, C); row = (dy*3+dx)*C + ci
        wp = jnp.pad(w, ((0, 0), (0, 0), (0, C_p - Cout), (0, C_p - Cout)))
        wp = wp.reshape(9 * C_p, C_p).astype(jnp.bfloat16)
        bp = jnp.pad(b, (0, C_p - Cout)).reshape(1, 1, C_p).astype(jnp.float32)
        return wp, bp

    w2p, b2p = prep3x3(w2, b2)
    w3p, b3p = prep3x3(w3, b3)

    kernel = functools.partial(_conv_block_kernel, H=H, W=W, C=C_p)

    def full(a):
        return pl.BlockSpec(a.shape, lambda n: (0,) * a.ndim)

    # NOTE: at realistic (large H, W) sizes on v7x (64 MiB VMEM) add a second
    # grid axis over H row-tiles with a 1-row halo and raise vmem_limit_bytes;
    # at these shapes the whole-image block uses only a few MiB of VMEM.
    out_nhwc = pl.pallas_call(
        kernel,
        out_shape=jax.ShapeDtypeStruct((N, H, W, C_p), jnp.float32),
        grid_spec=pltpu.PrefetchScalarGridSpec(
            num_scalar_prefetch=0,
            grid=(N,),
            in_specs=[
                pl.BlockSpec((1, H, W, Cin_p), lambda n: (n, 0, 0, 0)),
                full(w1p), full(b1p),
                full(w2p), full(b2p),
                full(w3p), full(b3p),
            ],
            out_specs=pl.BlockSpec((1, H, W, C_p), lambda n: (n, 0, 0, 0)),
            scratch_shapes=[pltpu.VMEM((H + 2, W + 2, C_p), jnp.float32)],
        ),
        compiler_params=pltpu.CompilerParams(
            dimension_semantics=("parallel",)),
    )(x, w1p, b1p, w2p, b2p, w3p, b3p)

    out = out_nhwc[..., :Cout]                       # drop lane padding
    return jnp.transpose(out, (0, 3, 1, 2))          # back to NCHW


def make_params(key, in_channels, out_channels):
    """Deterministic synthetic parameters; BN folded into the 3x3 convs."""
    ks = jax.random.split(key, 14)
    eps = 1e-5

    # 1x1 conv: PyTorch weight (Cout, Cin, 1, 1) -> (Cin, Cout)
    w1 = 0.1 * jax.random.normal(ks[0], (out_channels, in_channels, 1, 1))
    b1 = 0.1 * jax.random.normal(ks[1], (out_channels,))
    w1 = jnp.transpose(w1[:, :, 0, 0], (1, 0))

    def conv3x3_bn(kw, kb, kg, kbeta, km, kv):
        # PyTorch weight (Cout, Cout, 3, 3) -> HWIO (3, 3, Cin, Cout)
        w = 0.1 * jax.random.normal(kw, (out_channels, out_channels, 3, 3))
        b = 0.1 * jax.random.normal(kb, (out_channels,))
        gamma = 1.0 + 0.1 * jax.random.normal(kg, (out_channels,))
        beta = 0.1 * jax.random.normal(kbeta, (out_channels,))
        mean = 0.1 * jax.random.normal(km, (out_channels,))
        var = jax.random.uniform(kv, (out_channels,), minval=0.5, maxval=1.5)
        scale = gamma / jnp.sqrt(var + eps)
        w_hwio = jnp.transpose(w, (2, 3, 1, 0))
        w_fold = w_hwio * scale[None, None, None, :]
        b_fold = (b - mean) * scale + beta
        return w_fold.astype(jnp.float32), b_fold.astype(jnp.float32)

    w2, b2 = conv3x3_bn(*ks[2:8])
    w3, b3 = conv3x3_bn(*ks[8:14])

    return (w1.astype(jnp.float32), b1.astype(jnp.float32), w2, b2, w3, b3)


def reference_forward(x_nchw, params):
    """Pure-JAX reference (lax.conv) matching the kernel's precision policy:
    bf16-rounded operands, f32 accumulation."""
    w1, b1, w2, b2, w3, b3 = params
    bf = lambda a: a.astype(jnp.bfloat16).astype(jnp.float32)
    x = bf(jnp.transpose(x_nchw, (0, 2, 3, 1)))       # NHWC
    dn = ("NHWC", "HWIO", "NHWC")

    def conv(x, w, b, pad):
        y = lax.conv_general_dilated(x, w, (1, 1), [(pad, pad), (pad, pad)],
                                     dimension_numbers=dn,
                                     precision=lax.Precision.HIGHEST)
        return y + b

    t = conv(x, bf(w1)[None, None], b1, 0)
    residual = t
    y = jnp.maximum(conv(bf(t), bf(w2), b2, 1), 0.0)
    y = conv(bf(y), bf(w3), b3, 1)
    out = jnp.maximum(y + residual, 0.0)
    return jnp.transpose(out, (0, 3, 1, 2))


if __name__ == "__main__":
    key = jax.random.PRNGKey(0)
    k_x, k_p = jax.random.split(key)

    N, Cin, Cout, H, W = 2, 4, 8, 16, 16
    x = jax.random.normal(k_x, (N, Cin, H, W), dtype=jnp.float32)
    params = make_params(k_p, Cin, Cout)

    out = jax.block_until_ready(convolution_block(x, params))
    ref = jax.block_until_ready(reference_forward(x, params))

    assert out.shape == (N, Cout, H, W)
    assert jnp.allclose(out, ref, rtol=2e-3, atol=2e-3), "mismatch vs reference"

    print("KERNEL_OK")
</pallas_src>

<mosaic_0001>
module attributes {stable_mosaic.version = 11 : i64} {
  func.func @_conv_block_kernel(%arg0: i32, %arg1: memref<1x16x16x128xbf16, #tpu.memory_space<vmem>>, %arg2: memref<128x128xbf16, #tpu.memory_space<vmem>>, %arg3: memref<1x1x128xf32, #tpu.memory_space<vmem>>, %arg4: memref<1152x128xbf16, #tpu.memory_space<vmem>>, %arg5: memref<1x1x128xf32, #tpu.memory_space<vmem>>, %arg6: memref<1152x128xbf16, #tpu.memory_space<vmem>>, %arg7: memref<1x1x128xf32, #tpu.memory_space<vmem>>, %arg8: memref<1x16x16x128xf32, #tpu.memory_space<vmem>>, %arg9: memref<18x18x128xf32, #tpu.memory_space<vmem>>) attributes {dimension_semantics = [#tpu.dimension_semantics<parallel>], iteration_bounds = array<i64: 2>, scalar_prefetch = 0 : i64, scratch_operands = 1 : i64, tpu.core_type = #tpu.core_type<tc>, window_params = [{transform_indices = @transform_0, window_bounds = array<i64: 1, 16, 16, 128>}, {pipeline_mode = #tpu.pipeline_mode<synchronous>, transform_indices = @transform_1, window_bounds = array<i64: 128, 128>}, {pipeline_mode = #tpu.pipeline_mode<synchronous>, transform_indices = @transform_2, window_bounds = array<i64: 1, 1, 128>}, {pipeline_mode = #tpu.pipeline_mode<synchronous>, transform_indices = @transform_3, window_bounds = array<i64: 1152, 128>}, {pipeline_mode = #tpu.pipeline_mode<synchronous>, transform_indices = @transform_4, window_bounds = array<i64: 1, 1, 128>}, {pipeline_mode = #tpu.pipeline_mode<synchronous>, transform_indices = @transform_5, window_bounds = array<i64: 1152, 128>}, {pipeline_mode = #tpu.pipeline_mode<synchronous>, transform_indices = @transform_6, window_bounds = array<i64: 1, 1, 128>}, {transform_indices = @transform_7, window_bounds = array<i64: 1, 16, 16, 128>}]} {
    %cst = arith.constant 0.000000e+00 : f32
    %0 = vector.broadcast %cst : f32 to vector<1x18x128xf32>
    %cst_0 = arith.constant 0.000000e+00 : f32
    %1 = vector.broadcast %cst_0 : f32 to vector<16x1x128xf32>
    %c0 = arith.constant 0 : index
    %c0_1 = arith.constant 0 : index
    %c0_2 = arith.constant 0 : index
    %2 = vector.load %arg9[%c0, %c0_1, %c0_2] : memref<18x18x128xf32, #tpu.memory_space<vmem>>, vector<1x18x128xf32>
    tpu.vector_store %arg9[%c0, %c0_1, %c0_2], %0 {strides = array<i32>} : memref<18x18x128xf32, #tpu.memory_space<vmem>>, vector<1x18x128xf32>,
    %c17 = arith.constant 17 : index
    %c0_3 = arith.constant 0 : index
    %c0_4 = arith.constant 0 : index
    %3 = vector.load %arg9[%c17, %c0_3, %c0_4] : memref<18x18x128xf32, #tpu.memory_space<vmem>>, vector<1x18x128xf32>
    tpu.vector_store %arg9[%c17, %c0_3, %c0_4], %0 {strides = array<i32>} : memref<18x18x128xf32, #tpu.memory_space<vmem>>, vector<1x18x128xf32>,
    %c1 = arith.constant 1 : index
    %c0_5 = arith.constant 0 : index
    %c0_6 = arith.constant 0 : index
    %4 = vector.load %arg9[%c1, %c0_5, %c0_6] : memref<18x18x128xf32, #tpu.memory_space<vmem>>, vector<16x1x128xf32>
    tpu.vector_store %arg9[%c1, %c0_5, %c0_6], %1 {strides = array<i32>} : memref<18x18x128xf32, #tpu.memory_space<vmem>>, vector<16x1x128xf32>,
    %c1_7 = arith.constant 1 : index
    %c17_8 = arith.constant 17 : index
    %c0_9 = arith.constant 0 : index
    %5 = vector.load %arg9[%c1_7, %c17_8, %c0_9] : memref<18x18x128xf32, #tpu.memory_space<vmem>>, vector<16x1x128xf32>
    tpu.vector_store %arg9[%c1_7, %c17_8, %c0_9], %1 {strides = array<i32>} : memref<18x18x128xf32, #tpu.memory_space<vmem>>, vector<16x1x128xf32>,
    %c0_10 = arith.constant 0 : index
    %c0_11 = arith.constant 0 : index
    %c0_12 = arith.constant 0 : index
    %c0_13 = arith.constant 0 : index
    %6 = vector.load %arg1[%c0_10, %c0_11, %c0_12, %c0_13] : memref<1x16x16x128xbf16, #tpu.memory_space<vmem>>, vector<1x16x16x128xbf16>
    %7 = vector.shape_cast %6 : vector<1x16x16x128xbf16> to vector<16x16x128xbf16>
    %c0_14 = arith.constant 0 : index
    %c0_15 = arith.constant 0 : index
    %8 = vector.load %arg2[%c0_14, %c0_15] : memref<128x128xbf16, #tpu.memory_space<vmem>>, vector<128x128xbf16>
    %cst_16 = arith.constant dense<0.000000e+00> : vector<16x16x128xf32>
    %9 = tpu.matmul %7, %8, %cst_16 {dimension_numbers = #tpu.dot_dimension_numbers<[2], [0], [0, 1], [1], [0, 0, 0, 1, 1, 1], [], []>} : vector<16x16x128xbf16>, vector<128x128xbf16>, vector<16x16x128xf32> -> vector<16x16x128xf32>
    %c0_17 = arith.constant 0 : index
    %c0_18 = arith.constant 0 : index
    %c0_19 = arith.constant 0 : index
    %10 = vector.load %arg3[%c0_17, %c0_18, %c0_19] : memref<1x1x128xf32, #tpu.memory_space<vmem>>, vector<1x1x128xf32>
    %11 = vector.broadcast %10 : vector<1x1x128xf32> to vector<16x16x128xf32>
    %12 = arith.addf %9, %11 : vector<16x16x128xf32>
    %c0_20 = arith.constant 0 : index
    %c0_21 = arith.constant 0 : index
    %c0_22 = arith.constant 0 : index
    %c0_23 = arith.constant 0 : index
    %13 = vector.load %arg8[%c0_20, %c0_21, %c0_22, %c0_23] : memref<1x16x16x128xf32, #tpu.memory_space<vmem>>, vector<1x16x16x128xf32>
    %14 = vector.shape_cast %13 : vector<1x16x16x128xf32> to vector<16x16x128xf32>
    %15 = vector.shape_cast %12 : vector<16x16x128xf32> to vector<1x16x16x128xf32>
    tpu.vector_store %arg8[%c0_20, %c0_21, %c0_22, %c0_23], %15 {strides = array<i32>} : memref<1x16x16x128xf32, #tpu.memory_space<vmem>>, vector<1x16x16x128xf32>,
    %c0_24 = arith.constant 0 : index
    %c0_25 = arith.constant 0 : index
    %c0_26 = arith.constant 0 : index
    %16 = vector.load %arg5[%c0_24, %c0_25, %c0_26] : memref<1x1x128xf32, #tpu.memory_space<vmem>>, vector<1x1x128xf32>
    %c1_27 = arith.constant 1 : index
    %c1_28 = arith.constant 1 : index
    %c0_29 = arith.constant 0 : index
    %17 = vector.load %arg9[%c1_27, %c1_28, %c0_29] : memref<18x18x128xf32, #tpu.memory_space<vmem>>, vector<16x16x128xf32>
    tpu.vector_store %arg9[%c1_27, %c1_28, %c0_29], %12 {strides = array<i32>} : memref<18x18x128xf32, #tpu.memory_space<vmem>>, vector<16x16x128xf32>,
    %c0_30 = arith.constant 0 : index
    %c0_31 = arith.constant 0 : index
    %c0_32 = arith.constant 0 : index
    %18 = vector.load %arg9[%c0_30, %c0_31, %c0_32] : memref<18x18x128xf32, #tpu.memory_space<vmem>>, vector<16x16x128xf32>
    %c0_33 = arith.constant 0 : index
    %c1_34 = arith.constant 1 : index
    %c0_35 = arith.constant 0 : index
    %19 = vector.load %arg9[%c0_33, %c1_34, %c0_35] : memref<18x18x128xf32, #tpu.memory_space<vmem>>, vector<16x16x128xf32>
    %c0_36 = arith.constant 0 : index
    %c2 = arith.constant 2 : index
    %c0_37 = arith.constant 0 : index
    %20 = vector.load %arg9[%c0_36, %c2, %c0_37] : memref<18x18x128xf32, #tpu.memory_space<vmem>>, vector<16x16x128xf32>
    %c1_38 = arith.constant 1 : index
    %c0_39 = arith.constant 0 : index
    %c0_40 = arith.constant 0 : index
    %21 = vector.load %arg9[%c1_38, %c0_39, %c0_40] : memref<18x18x128xf32, #tpu.memory_space<vmem>>, vector<16x16x128xf32>
    %c1_41 = arith.constant 1 : index
    %c1_42 = arith.constant 1 : index
    %c0_43 = arith.constant 0 : index
    %22 = vector.load %arg9[%c1_41, %c1_42, %c0_43] : memref<18x18x128xf32, #tpu.memory_space<vmem>>, vector<16x16x128xf32>
    %c1_44 = arith.constant 1 : index
    %c2_45 = arith.constant 2 : index
    %c0_46 = arith.constant 0 : index
    %23 = vector.load %arg9[%c1_44, %c2_45, %c0_46] : memref<18x18x128xf32, #tpu.memory_space<vmem>>, vector<16x16x128xf32>
    %c2_47 = arith.constant 2 : index
    %c0_48 = arith.constant 0 : index
    %c0_49 = arith.constant 0 : index
    %24 = vector.load %arg9[%c2_47, %c0_48, %c0_49] : memref<18x18x128xf32, #tpu.memory_space<vmem>>, vector<16x16x128xf32>
    %c2_50 = arith.constant 2 : index
    %c1_51 = arith.constant 1 : index
    %c0_52 = arith.constant 0 : index
    %25 = vector.load %arg9[%c2_50, %c1_51, %c0_52] : memref<18x18x128xf32, #tpu.memory_space<vmem>>, vector<16x16x128xf32>
    %c2_53 = arith.constant 2 : index
    %c2_54 = arith.constant 2 : index
    %c0_55 = arith.constant 0 : index
    %26 = vector.load %arg9[%c2_53, %c2_54, %c0_55] : memref<18x18x128xf32, #tpu.memory_space<vmem>>, vector<16x16x128xf32>
    %27 = tpu.concatenate %18, %19, %20, %21, %22, %23, %24, %25, %26 in 2 : vector<16x16x128xf32>, vector<16x16x128xf32>, vector<16x16x128xf32>, vector<16x16x128xf32>, vector<16x16x128xf32>, vector<16x16x128xf32>, vector<16x16x128xf32>, vector<16x16x128xf32>, vector<16x16x128xf32> -> vector<16x16x1152xf32>
    %28 = arith.truncf %27 : vector<16x16x1152xf32> to vector<16x16x1152xbf16>
    %c0_56 = arith.constant 0 : index
    %c0_57 = arith.constant 0 : index
    %29 = vector.load %arg4[%c0_56, %c0_57] : memref<1152x128xbf16, #tpu.memory_space<vmem>>, vector<1152x128xbf16>
    %cst_58 = arith.constant dense<0.000000e+00> : vector<16x16x128xf32>
    %30 = tpu.matmul %28, %29, %cst_58 {dimension_numbers = #tpu.dot_dimension_numbers<[2], [0], [0, 1], [1], [0, 0, 0, 1, 1, 1], [], []>} : vector<16x16x1152xbf16>, vector<1152x128xbf16>, vector<16x16x128xf32> -> vector<16x16x128xf32>
    %31 = vector.broadcast %16 : vector<1x1x128xf32> to vector<16x16x128xf32>
    %32 = arith.addf %30, %31 : vector<16x16x128xf32>
    %cst_59 = arith.constant 0.000000e+00 : f32
    %33 = vector.broadcast %cst_59 : f32 to vector<16x16x128xf32>
    %34 = arith.maximumf %32, %33 : vector<16x16x128xf32>
    %c0_60 = arith.constant 0 : index
    %c0_61 = arith.constant 0 : index
    %c0_62 = arith.constant 0 : index
    %35 = vector.load %arg7[%c0_60, %c0_61, %c0_62] : memref<1x1x128xf32, #tpu.memory_space<vmem>>, vector<1x1x128xf32>
    %c1_63 = arith.constant 1 : index
    %c1_64 = arith.constant 1 : index
    %c0_65 = arith.constant 0 : index
    %36 = vector.load %arg9[%c1_63, %c1_64, %c0_65] : memref<18x18x128xf32, #tpu.memory_space<vmem>>, vector<16x16x128xf32>
    tpu.vector_store %arg9[%c1_63, %c1_64, %c0_65], %34 {strides = array<i32>} : memref<18x18x128xf32, #tpu.memory_space<vmem>>, vector<16x16x128xf32>,
    %c0_66 = arith.constant 0 : index
    %c0_67 = arith.constant 0 : index
    %c0_68 = arith.constant 0 : index
    %37 = vector.load %arg9[%c0_66, %c0_67, %c0_68] : memref<18x18x128xf32, #tpu.memory_space<vmem>>, vector<16x16x128xf32>
    %c0_69 = arith.constant 0 : index
    %c1_70 = arith.constant 1 : index
    %c0_71 = arith.constant 0 : index
    %38 = vector.load %arg9[%c0_69, %c1_70, %c0_71] : memref<18x18x128xf32, #tpu.memory_space<vmem>>, vector<16x16x128xf32>
    %c0_72 = arith.constant 0 : index
    %c2_73 = arith.constant 2 : index
    %c0_74 = arith.constant 0 : index
    %39 = vector.load %arg9[%c0_72, %c2_73, %c0_74] : memref<18x18x128xf32, #tpu.memory_space<vmem>>, vector<16x16x128xf32>
    %c1_75 = arith.constant 1 : index
    %c0_76 = arith.constant 0 : index
    %c0_77 = arith.constant 0 : index
    %40 = vector.load %arg9[%c1_75, %c0_76, %c0_77] : memref<18x18x128xf32, #tpu.memory_space<vmem>>, vector<16x16x128xf32>
    %c1_78 = arith.constant 1 : index
    %c1_79 = arith.constant 1 : index
    %c0_80 = arith.constant 0 : index
    %41 = vector.load %arg9[%c1_78, %c1_79, %c0_80] : memref<18x18x128xf32, #tpu.memory_space<vmem>>, vector<16x16x128xf32>
    %c1_81 = arith.constant 1 : index
    %c2_82 = arith.constant 2 : index
    %c0_83 = arith.constant 0 : index
    %42 = vector.load %arg9[%c1_81, %c2_82, %c0_83] : memref<18x18x128xf32, #tpu.memory_space<vmem>>, vector<16x16x128xf32>
    %c2_84 = arith.constant 2 : index
    %c0_85 = arith.constant 0 : index
    %c0_86 = arith.constant 0 : index
    %43 = vector.load %arg9[%c2_84, %c0_85, %c0_86] : memref<18x18x128xf32, #tpu.memory_space<vmem>>, vector<16x16x128xf32>
    %c2_87 = arith.constant 2 : index
    %c1_88 = arith.constant 1 : index
    %c0_89 = arith.constant 0 : index
    %44 = vector.load %arg9[%c2_87, %c1_88, %c0_89] : memref<18x18x128xf32, #tpu.memory_space<vmem>>, vector<16x16x128xf32>
    %c2_90 = arith.constant 2 : index
    %c2_91 = arith.constant 2 : index
    %c0_92 = arith.constant 0 : index
    %45 = vector.load %arg9[%c2_90, %c2_91, %c0_92] : memref<18x18x128xf32, #tpu.memory_space<vmem>>, vector<16x16x128xf32>
    %46 = tpu.concatenate %37, %38, %39, %40, %41, %42, %43, %44, %45 in 2 : vector<16x16x128xf32>, vector<16x16x128xf32>, vector<16x16x128xf32>, vector<16x16x128xf32>, vector<16x16x128xf32>, vector<16x16x128xf32>, vector<16x16x128xf32>, vector<16x16x128xf32>, vector<16x16x128xf32> -> vector<16x16x1152xf32>
    %47 = arith.truncf %46 : vector<16x16x1152xf32> to vector<16x16x1152xbf16>
    %c0_93 = arith.constant 0 : index
    %c0_94 = arith.constant 0 : index
    %48 = vector.load %arg6[%c0_93, %c0_94] : memref<1152x128xbf16, #tpu.memory_space<vmem>>, vector<1152x128xbf16>
    %cst_95 = arith.constant dense<0.000000e+00> : vector<16x16x128xf32>
    %49 = tpu.matmul %47, %48, %cst_95 {dimension_numbers = #tpu.dot_dimension_numbers<[2], [0], [0, 1], [1], [0, 0, 0, 1, 1, 1], [], []>} : vector<16x16x1152xbf16>, vector<1152x128xbf16>, vector<16x16x128xf32> -> vector<16x16x128xf32>
    %50 = vector.broadcast %35 : vector<1x1x128xf32> to vector<16x16x128xf32>
    %51 = arith.addf %49, %50 : vector<16x16x128xf32>
    %c0_96 = arith.constant 0 : index
    %c0_97 = arith.constant 0 : index
    %c0_98 = arith.constant 0 : index
    %c0_99 = arith.constant 0 : index
    %52 = vector.load %arg8[%c0_96, %c0_97, %c0_98, %c0_99] : memref<1x16x16x128xf32, #tpu.memory_space<vmem>>, vector<1x16x16x128xf32>
    %53 = vector.shape_cast %52 : vector<1x16x16x128xf32> to vector<16x16x128xf32>
    %54 = arith.addf %51, %53 : vector<16x16x128xf32>
    %cst_100 = arith.constant 0.000000e+00 : f32
    %55 = vector.broadcast %cst_100 : f32 to vector<16x16x128xf32>
    %56 = arith.maximumf %54, %55 : vector<16x16x128xf32>
    %c0_101 = arith.constant 0 : index
    %c0_102 = arith.constant 0 : index
    %c0_103 = arith.constant 0 : index
    %c0_104 = arith.constant 0 : index
    %57 = vector.load %arg8[%c0_101, %c0_102, %c0_103, %c0_104] : memref<1x16x16x128xf32, #tpu.memory_space<vmem>>, vector<1x16x16x128xf32>
    %58 = vector.shape_cast %57 : vector<1x16x16x128xf32> to vector<16x16x128xf32>
    %59 = vector.shape_cast %56 : vector<16x16x128xf32> to vector<1x16x16x128xf32>
    tpu.vector_store %arg8[%c0_101, %c0_102, %c0_103, %c0_104], %59 {strides = array<i32>} : memref<1x16x16x128xf32, #tpu.memory_space<vmem>>, vector<1x16x16x128xf32>,
    return
  }
  func.func @transform_0(%arg0: i32) -> (i32, i32, i32, i32) {
    %c0_i32 = arith.constant 0 : i32
    %c0_i32_0 = arith.constant 0 : i32
    %c0_i32_1 = arith.constant 0 : i32
    %c0_i32_2 = arith.constant 0 : i32
    return %arg0, %c0_i32, %c0_i32_0, %c0_i32_1 : i32, i32, i32, i32
  }
  func.func @transform_1(%arg0: i32) -> (i32, i32) {
    %c0_i32 = arith.constant 0 : i32
    %c0_i32_0 = arith.constant 0 : i32
    %c0_i32_1 = arith.constant 0 : i32
    return %c0_i32, %c0_i32_0 : i32, i32
  }
  func.func @transform_2(%arg0: i32) -> (i32, i32, i32) {
    %c0_i32 = arith.constant 0 : i32
    %c0_i32_0 = arith.constant 0 : i32
    %c0_i32_1 = arith.constant 0 : i32
    %c0_i32_2 = arith.constant 0 : i32
    return %c0_i32, %c0_i32_0, %c0_i32_1 : i32, i32, i32
  }
  func.func @transform_3(%arg0: i32) -> (i32, i32) {
    %c0_i32 = arith.constant 0 : i32
    %c0_i32_0 = arith.constant 0 : i32
    %c0_i32_1 = arith.constant 0 : i32
    return %c0_i32, %c0_i32_0 : i32, i32
  }
  func.func @transform_4(%arg0: i32) -> (i32, i32, i32) {
    %c0_i32 = arith.constant 0 : i32
    %c0_i32_0 = arith.constant 0 : i32
    %c0_i32_1 = arith.constant 0 : i32
    %c0_i32_2 = arith.constant 0 : i32
    return %c0_i32, %c0_i32_0, %c0_i32_1 : i32, i32, i32
  }
  func.func @transform_5(%arg0: i32) -> (i32, i32) {
    %c0_i32 = arith.constant 0 : i32
    %c0_i32_0 = arith.constant 0 : i32
    %c0_i32_1 = arith.constant 0 : i32
    return %c0_i32, %c0_i32_0 : i32, i32
  }
  func.func @transform_6(%arg0: i32) -> (i32, i32, i32) {
    %c0_i32 = arith.constant 0 : i32
    %c0_i32_0 = arith.constant 0 : i32
    %c0_i32_1 = arith.constant 0 : i32
    %c0_i32_2 = arith.constant 0 : i32
    return %c0_i32, %c0_i32_0, %c0_i32_1 : i32, i32, i32
  }
  func.func @transform_7(%arg0: i32) -> (i32, i32, i32, i32) {
    %c0_i32 = arith.constant 0 : i32
    %c0_i32_0 = arith.constant 0 : i32
    %c0_i32_1 = arith.constant 0 : i32
    %c0_i32_2 = arith.constant 0 : i32
    return %arg0, %c0_i32, %c0_i32_0, %c0_i32_1 : i32, i32, i32, i32
  }
}

</mosaic_0001>

<llo_original>
// kernel: tpu_custom_call.1
$region0: #{tpu_custom_call.1}
  #allocation0 [shape = 'u32[]', space=smem, size = 0x4, offset = 0x4, fixed_abs, tag = 'smem constant byte address 0x4 - core index']
  #allocation1 [shape = 'u32[144,128]{1,0:T(1,128)}', space=vmem, size = 0x12000, scoped, tag = 'internal scratch']
  #allocation2 [shape = 'f32[18,18,128]{2,1,0:T(8,128)}', space=vmem, size = 0x36000, scoped, tag = 'scratch operand']
  %s0 = inlined_call_operand.hbm [shape: bf16[2,16,16,128], index: 0, kind: input, shape index: {}]
  %s1 = inlined_call_operand.hbm [shape: bf16[128,128], index: 1, kind: input, shape index: {}]
  %s2 = inlined_call_operand.vmem [shape: f32[1,1,128], index: 2, kind: input, shape index: {}]
  %s3 = inlined_call_operand.hbm [shape: bf16[1152,128], index: 3, kind: input, shape index: {}]
  %s4 = inlined_call_operand.vmem [shape: f32[1,1,128], index: 4, kind: input, shape index: {}]
  %s5 = inlined_call_operand.hbm [shape: bf16[1152,128], index: 5, kind: input, shape index: {}]
  %s6 = inlined_call_operand.vmem [shape: f32[1,1,128], index: 6, kind: input, shape index: {}]
  %s7 = inlined_call_operand.hbm [shape: f32[2,16,16,128], index: 7, kind: output, shape index: {}]
  %s8 = sld [smem:[#allocation0]]
  $region77: #{tpu_custom_call.1} parent=0
    _
  %s10 = ssub.s32 1, %s8
  %s11 = scalar_select 0, %s10, %s8
  $region1: #{tpu_custom_call.1} parent=0
    #allocation3 [shape = 'u8[131072]{0}', space=vmem, size = 0x20000, scoped, tag = 'input window, operand 0']
    #allocation4 [shape = 's32[2]{0}', space=sflag, size = 0x8, scoped, tag = 'scoped memory for tpu_custom_call.1']
    #allocation5 [shape = 's32[2]{0}', space=sflag, size = 0x8, scoped, tag = 'scoped memory for tpu_custom_call.1']
    #allocation6 [shape = 'u8[32768]{0}', space=vmem, size = 0x8000, scoped, tag = 'input window, operand 1, single buffered']
    #allocation7 [shape = 's32[1]{0}', space=sflag, size = 0x4, scoped, tag = 'scoped memory for tpu_custom_call.1']
    #allocation8 [shape = 'u8[294912]{0}', space=vmem, size = 0x48000, scoped, tag = 'input window, operand 3, single buffered']
    #allocation9 [shape = 'u8[294912]{0}', space=vmem, size = 0x48000, scoped, tag = 'input window, operand 5, single buffered']
    #allocation10 [shape = 's32[1]{0}', space=sflag, size = 0x4, scoped, tag = 'scoped memory for tpu_custom_call.1']
    #allocation11 [shape = 'u8[262144]{0}', space=vmem, size = 0x40000, scoped, tag = 'output window, operand 0']
    %12 = vsyncpa [#allocation4], 0
    %s13 = scalar_lea.sflag [#allocation4], 1
    %14 = vsyncpa %s13, 0
    %15 = vsyncpa [#allocation7], 0
    %16 = vsyncpa [#allocation10], 0
    %17 = vsyncpa [#allocation5], 0
    %s18 = scalar_lea.sflag [#allocation5], 1
    %19 = vsyncpa %s18, 0
    loop: start=0, step=1, limit=4
    $region2: #{tpu_custom_call.1} parent=1 // loop_pre_header
      _
    $region3: #{tpu_custom_call.1} parent=1 // loop_header
      %s21 = sphi 0, %s25
      %p22 = scmp.ge.s32.totalorder %s21, 4
      %s31 = sphi 0, %s33
      %s34 = sphi 0, %s31
      %s35 = sphi 0, %s34
      %s51 = sphi 0, %s35
      %s55 = sphi 0, %s55
      %s57 = sphi 0, %s55
      %s58 = sphi 0, %s57
      %s72 = sphi 0, %s58
      %s76 = sphi 0, %s76
      %s78 = sphi 0, %s76
      %s79 = sphi 0, %s78
      %s93 = sphi 0, %s79
      %s97 = sphi 0, %s97
      %s99 = sphi 0, %s97
      %s100 = sphi 0, %s99
      %s114 = sphi 0, %s100
      %s118 = sphi 0, %s118
      %s120 = sphi 0, %s118
      %s121 = sphi 0, %s120
      %s135 = sphi 0, %s121
      %s139 = sphi 0, %s139
      %s141 = sphi 0, %s139
      %s142 = sphi 0, %s141
      %s156 = sphi 0, %s142
      %s160 = sphi 0, %s160
      %s162 = sphi 0, %s160
      %s163 = sphi 0, %s162
      %s177 = sphi 0, %s163
      %s183 = sphi 0, %s185
      %s186 = sphi 0, %s183
      %s187 = sphi 0, %s186
      %s203 = sphi 0, %s187
    $region4: #{tpu_custom_call.1} parent=1 // loop_header_branch
      %24 = sbr.rel (%p22) target = $region8
    $region5: #{tpu_custom_call.1} parent=1 // loop_body
      %s26 = ssub.s32 %s21, 1
      %s27 = ssub.s32 %s21, 2
      %s28 = sadd.s32 %s21, 1
      %s29 = ssub.s32 %s21, %s28
      %p30 = scmp.eq.s32.totalorder %s29, 0
      %s32 = sadd.s32 %s31, 1
      %s33 = scalar_select %p30, %s31, %s32
      %p36 = pneg %p30
      %p37 = scmp.eq.s32.totalorder %s21, 1
      %p38 = por %p36, %p37
      %p39 = scmp.ne.s32.totalorder %s31, %s34
      %p40 = scmp.eq.s32.totalorder %s21, 0
      %p41 = por %p39, %p40
      %p42 = scmp.ne.s32.totalorder %s31, %s34
      %p43 = scmp.eq.s32.totalorder %s26, 1
      %p44 = por %p42, %p43
      %p45 = scmp.ne.s32.totalorder %s34, %s35
      %p46 = scmp.eq.s32.totalorder %s26, 0
      %p47 = por %p45, %p46
      %p48 = scmp.ne.s32.totalorder %s34, %s35
      %p49 = scmp.eq.s32.totalorder %s27, 1
      %p50 = por %p48, %p49
      %p52 = scmp.ne.s32.totalorder %s35, %s51
      %p53 = scmp.eq.s32.totalorder %s27, 0
      %p54 = por %p52, %p53
      %s56 = sadd.s32 %s55, 1
      %p59 = scmp.eq.s32.totalorder %s21, 1
      %p60 = scmp.ne.s32.totalorder %s55, %s57
      %p61 = scmp.eq.s32.totalorder %s21, 0
      %p62 = por %p60, %p61
      %p63 = scmp.ne.s32.totalorder %s55, %s57
      %p64 = scmp.eq.s32.totalorder %s26, 1
      %p65 = por %p63, %p64
      %p66 = scmp.ne.s32.totalorder %s57, %s58
      %p67 = scmp.eq.s32.totalorder %s26, 0
      %p68 = por %p66, %p67
      %p69 = scmp.ne.s32.totalorder %s57, %s58
      %p70 = scmp.eq.s32.totalorder %s27, 1
      %p71 = por %p69, %p70
      %p73 = scmp.ne.s32.totalorder %s58, %s72
      %p74 = scmp.eq.s32.totalorder %s27, 0
      %p75 = por %p73, %p74
      %s77 = sadd.s32 %s76, 1
      %p80 = scmp.eq.s32.totalorder %s21, 1
      %p81 = scmp.ne.s32.totalorder %s76, %s78
      %p82 = scmp.eq.s32.totalorder %s21, 0
      %p83 = por %p81, %p82
      %p84 = scmp.ne.s32.totalorder %s76, %s78
      %p85 = scmp.eq.s32.totalorder %s26, 1
      %p86 = por %p84, %p85
      %p87 = scmp.ne.s32.totalorder %s78, %s79
      %p88 = scmp.eq.s32.totalorder %s26, 0
      %p89 = por %p87, %p88
      %p90 = scmp.ne.s32.totalorder %s78, %s79
      %p91 = scmp.eq.s32.totalorder %s27, 1
      %p92 = por %p90, %p91
      %p94 = scmp.ne.s32.totalorder %s79, %s93
      %p95 = scmp.eq.s32.totalorder %s27, 0
      %p96 = por %p94, %p95
      %s98 = sadd.s32 %s97, 1
      %p101 = scmp.eq.s32.totalorder %s21, 1
      %p102 = scmp.ne.s32.totalorder %s97, %s99
      %p103 = scmp.eq.s32.totalorder %s21, 0
      %p104 = por %p102, %p103
      %p105 = scmp.ne.s32.totalorder %s97, %s99
      %p106 = scmp.eq.s32.totalorder %s26, 1
      %p107 = por %p105, %p106
      %p108 = scmp.ne.s32.totalorder %s99, %s100
      %p109 = scmp.eq.s32.totalorder %s26, 0
      %p110 = por %p108, %p109
      %p111 = scmp.ne.s32.totalorder %s99, %s100
      %p112 = scmp.eq.s32.totalorder %s27, 1
      %p113 = por %p111, %p112
      %p115 = scmp.ne.s32.totalorder %s100, %s114
      %p116 = scmp.eq.s32.totalorder %s27, 0
      %p117 = por %p115, %p116
      %s119 = sadd.s32 %s118, 1
      %p122 = scmp.eq.s32.totalorder %s21, 1
      %p123 = scmp.ne.s32.totalorder %s118, %s120
      %p124 = scmp.eq.s32.totalorder %s21, 0
      %p125 = por %p123, %p124
      %p126 = scmp.ne.s32.totalorder %s118, %s120
      %p127 = scmp.eq.s32.totalorder %s26, 1
      %p128 = por %p126, %p127
      %p129 = scmp.ne.s32.totalorder %s120, %s121
      %p130 = scmp.eq.s32.totalorder %s26, 0
      %p131 = por %p129, %p130
      %p132 = scmp.ne.s32.totalorder %s120, %s121
      %p133 = scmp.eq.s32.totalorder %s27, 1
      %p134 = por %p132, %p133
      %p136 = scmp.ne.s32.totalorder %s121, %s135
      %p137 = scmp.eq.s32.totalorder %s27, 0
      %p138 = por %p136, %p137
      %s140 = sadd.s32 %s139, 1
      %p143 = scmp.eq.s32.totalorder %s21, 1
      %p144 = scmp.ne.s32.totalorder %s139, %s141
      %p145 = scmp.eq.s32.totalorder %s21, 0
      %p146 = por %p144, %p145
      %p147 = scmp.ne.s32.totalorder %s139, %s141
      %p148 = scmp.eq.s32.totalorder %s26, 1
      %p149 = por %p147, %p148
      %p150 = scmp.ne.s32.totalorder %s141, %s142
      %p151 = scmp.eq.s32.totalorder %s26, 0
      %p152 = por %p150, %p151
      %p153 = scmp.ne.s32.totalorder %s141, %s142
      %p154 = scmp.eq.s32.totalorder %s27, 1
      %p155 = por %p153, %p154
      %p157 = scmp.ne.s32.totalorder %s142, %s156
      %p158 = scmp.eq.s32.totalorder %s27, 0
      %p159 = por %p157, %p158
      %s161 = sadd.s32 %s160, 1
      %p164 = scmp.eq.s32.totalorder %s21, 1
      %p165 = scmp.ne.s32.totalorder %s160, %s162
      %p166 = scmp.eq.s32.totalorder %s21, 0
      %p167 = por %p165, %p166
      %p168 = scmp.ne.s32.totalorder %s160, %s162
      %p169 = scmp.eq.s32.totalorder %s26, 1
      %p170 = por %p168, %p169
      %p171 = scmp.ne.s32.totalorder %s162, %s163
      %p172 = scmp.eq.s32.totalorder %s26, 0
      %p173 = por %p171, %p172
      %p174 = scmp.ne.s32.totalorder %s162, %s163
      %p175 = scmp.eq.s32.totalorder %s27, 1
      %p176 = por %p174, %p175
      %p178 = scmp.ne.s32.totalorder %s163, %s177
      %p179 = scmp.eq.s32.totalorder %s27, 0
      %p180 = por %p178, %p179
      %s181 = ssub.s32 %s21, %s28
      %p182 = scmp.eq.s32.totalorder %s181, 0
      %s184 = sadd.s32 %s183, 1
      %s185 = scalar_select %p182, %s183, %s184
      %p188 = pneg %p182
      %p189 = scmp.eq.s32.totalorder %s21, 1
      %p190 = por %p188, %p189
      %p191 = scmp.ne.s32.totalorder %s183, %s186
      %p192 = scmp.eq.s32.totalorder %s21, 0
      %p193 = por %p191, %p192
      %p194 = scmp.ne.s32.totalorder %s183, %s186
      %p195 = scmp.eq.s32.totalorder %s26, 1
      %p196 = por %p194, %p195
      %p197 = scmp.ne.s32.totalorder %s186, %s187
      %p198 = scmp.eq.s32.totalorder %s26, 0
      %p199 = por %p197, %p198
      %p200 = scmp.ne.s32.totalorder %s186, %s187
      %p201 = scmp.eq.s32.totalorder %s27, 1
      %p202 = por %p200, %p201
      %p204 = scmp.ne.s32.totalorder %s187, %s203
      %p205 = scmp.eq.s32.totalorder %s27, 0
      %p206 = por %p204, %p205
      %p207 = scmp.le.s32.totalorder 1, %s21
      %p208 = scmp.lt.s32.totalorder %s21, 3
      %p209 = pnand %p207, %p208
      %p210 = pneg %p209
      // Predicated region
      $region9: #{tpu_custom_call.1} parent=5 // pred_check
        _
      $region10: #{tpu_custom_call.1} parent=5 // pred_check_branch
        %212 = sbr.rel (%p209) target = $region12
      $region11: #{tpu_custom_call.1} parent=5 // pred_region
        %s213 = ssub.s32 %s21, 1
        // Predicated region
        $region13: #{tpu_custom_call.1} parent=11 // pred_check
          %p214 = pneg %p68
        $region14: #{tpu_custom_call.1} parent=11 // pred_check_branch
          %216 = sbr.rel (%p214) target = $region16
        $region15: #{tpu_custom_call.1} parent=11 // pred_region
          %s218 = ssub.s32 1024, 1024
          %219 = vsyncadd [#allocation7], %s218
          %s220 = sshll.u32 [#allocation6], 4
          %s221 = int_to_ptr.vmem [resolvable:$true] %s220
          %226 = dma.hbm_to_vmem [thread:$0]  %s1, 1024, %s221, [#allocation7], 64, 64, 4
        $region16: #{tpu_custom_call.1} parent=11 // pred_fallthru
          _
        // Predicated region
        $region17: #{tpu_custom_call.1} parent=11 // pred_check
          %p227 = pneg %p89
        $region18: #{tpu_custom_call.1} parent=11 // pred_check_branch
          %229 = sbr.rel (%p227) target = $region20
        $region19: #{tpu_custom_call.1} parent=11 // pred_region
          _
        $region20: #{tpu_custom_call.1} parent=11 // pred_fallthru
          _
        // Predicated region
        $region21: #{tpu_custom_call.1} parent=11 // pred_check
          %p230 = pneg %p110
        $region22: #{tpu_custom_call.1} parent=11 // pred_check_branch
          %232 = sbr.rel (%p230) target = $region24
        $region23: #{tpu_custom_call.1} parent=11 // pred_region
          %s234 = ssub.s32 9216, 9216
          %235 = vsyncadd [#allocation7], %s234
          %s236 = sshll.u32 [#allocation8], 4
          %s237 = int_to_ptr.vmem [resolvable:$true] %s236
          %242 = dma.hbm_to_vmem [thread:$0]  %s3, 9216, %s237, [#allocation7], 64, 64, 4
        $region24: #{tpu_custom_call.1} parent=11 // pred_fallthru
          _
        // Predicated region
        $region25: #{tpu_custom_call.1} parent=11 // pred_check
          %p243 = pneg %p131
        $region26: #{tpu_custom_call.1} parent=11 // pred_check_branch
          %245 = sbr.rel (%p243) target = $region28
        $region27: #{tpu_custom_call.1} parent=11 // pred_region
          _
        $region28: #{tpu_custom_call.1} parent=11 // pred_fallthru
          _
        // Predicated region
        $region29: #{tpu_custom_call.1} parent=11 // pred_check
          %p246 = pneg %p152
        $region30: #{tpu_custom_call.1} parent=11 // pred_check_branch
          %248 = sbr.rel (%p246) target = $region32
        $region31: #{tpu_custom_call.1} parent=11 // pred_region
          %s250 = ssub.s32 9216, 9216
          %251 = vsyncadd [#allocation10], %s250
          %s252 = sshll.u32 [#allocation9], 4
          %s253 = int_to_ptr.vmem [resolvable:$true] %s252
          %258 = dma.hbm_to_vmem [thread:$0]  %s5, 9216, %s253, [#allocation10], 64, 64, 4
        $region32: #{tpu_custom_call.1} parent=11 // pred_fallthru
          _
        // Predicated region
        $region33: #{tpu_custom_call.1} parent=11 // pred_check
          %p259 = pneg %p173
        $region34: #{tpu_custom_call.1} parent=11 // pred_check_branch
          %261 = sbr.rel (%p259) target = $region36
        $region35: #{tpu_custom_call.1} parent=11 // pred_region
          _
        $region36: #{tpu_custom_call.1} parent=11 // pred_fallthru
          _
      $region12: #{tpu_custom_call.1} parent=5 // pred_fallthru
        _
      %p262 = scmp.lt.s32.totalorder %s21, 2
      // Predicated region
      $region37: #{tpu_custom_call.1} parent=5 // pred_check
        %p263 = pneg %p262
      $region38: #{tpu_custom_call.1} parent=5 // pred_check_branch
        %265 = sbr.rel (%p263) target = $region40
      $region39: #{tpu_custom_call.1} parent=5 // pred_region
        // Predicated region
        $region41: #{tpu_custom_call.1} parent=39 // pred_check
          %p266 = pneg %p41
        $region42: #{tpu_custom_call.1} parent=39 // pred_check_branch
          %268 = sbr.rel (%p266) target = $region44
        $region43: #{tpu_custom_call.1} parent=39 // pred_region
          %s269 = sand.u32 %s31, 1
          %s270 = scalar_lea.sflag [#allocation4], %s269
          %s271 = sand.u32 %s31, 1
          %s272 = smul.addr %s271, 128
          %s273 = scalar_lea.vmem [#allocation3], %s272
          %s275 = ssub.s32 2048, 2048
          %276 = vsyncadd %s270, %s275
          %s277 = smul.addr %s21, 32
          %s278 = smul.addr %s277, 64
          %s279 = scalar_lea.hbm %s0, %s278
          %s280 = sshll.u32 %s273, 4
          %s281 = int_to_ptr.vmem [resolvable:$true] %s280
          %286 = dma.hbm_to_vmem [thread:$0]  %s279, 2048, %s281, %s270, 64, 64, 4
        $region44: #{tpu_custom_call.1} parent=39 // pred_fallthru
          _
      $region40: #{tpu_custom_call.1} parent=5 // pred_fallthru
        _
      %p287 = scmp.le.s32.totalorder 1, %s21
      %p288 = scmp.lt.s32.totalorder %s21, 3
      %p289 = pnand %p287, %p288
      %p290 = pneg %p289
      // Predicated region
      $region45: #{tpu_custom_call.1} parent=5 // pred_check
        _
      $region46: #{tpu_custom_call.1} parent=5 // pred_check_branch
        %292 = sbr.rel (%p289) target = $region48
      $region47: #{tpu_custom_call.1} parent=5 // pred_region
        %s293 = ssub.s32 %s21, 1
        %s294 = sand.u32 %s34, 1
        %s295 = scalar_lea.sflag [#allocation4], %s294
        %s296 = sand.u32 %s34, 1
        %s297 = smul.addr %s296, 128
        %s298 = scalar_lea.vmem [#allocation3], %s297
        // Predicated region
        $region49: #{tpu_custom_call.1} parent=47 // pred_check
          %p299 = pneg %p47
        $region50: #{tpu_custom_call.1} parent=47 // pred_check_branch
          %301 = sbr.rel (%p299) target = $region52
        $region51: #{tpu_custom_call.1} parent=47 // pred_region
          %302 = dma.done %s295, 2048
        $region52: #{tpu_custom_call.1} parent=47 // pred_fallthru
          _
        // Predicated region
        $region53: #{tpu_custom_call.1} parent=47 // pred_check
          %p303 = pneg %p68
        $region54: #{tpu_custom_call.1} parent=47 // pred_check_branch
          %305 = sbr.rel (%p303) target = $region56
        $region55: #{tpu_custom_call.1} parent=47 // pred_region
          %306 = dma.done [#allocation7], 1024
        $region56: #{tpu_custom_call.1} parent=47 // pred_fallthru
          _
        // Predicated region
        $region57: #{tpu_custom_call.1} parent=47 // pred_check
          %p307 = pneg %p110
        $region58: #{tpu_custom_call.1} parent=47 // pred_check_branch
          %309 = sbr.rel (%p307) target = $region60
        $region59: #{tpu_custom_call.1} parent=47 // pred_region
          %310 = dma.done [#allocation7], 9216
        $region60: #{tpu_custom_call.1} parent=47 // pred_fallthru
          _
        // Predicated region
        $region61: #{tpu_custom_call.1} parent=47 // pred_check
          %p311 = pneg %p152
        $region62: #{tpu_custom_call.1} parent=47 // pred_check_branch
          %313 = sbr.rel (%p311) target = $region64
        $region63: #{tpu_custom_call.1} parent=47 // pred_region
          %314 = dma.done [#allocation10], 9216
        $region64: #{tpu_custom_call.1} parent=47 // pred_fallthru
          _
        %s315 = sand.u32 %s34, 1
        %s316 = scalar_lea.sflag [#allocation4], %s315
        %s317 = sand.u32 %s34, 1
        %s318 = smul.addr %s317, 128
        %s319 = scalar_lea.vmem [#allocation3], %s318
        %p320 = pneg %p47
        %p321 = pneg %p44
        %p322 = pneg %p68
        %p323 = pneg %p65
        %p324 = pneg %p89
        %p325 = pneg %p86
        %p326 = pneg %p110
        %p327 = pneg %p107
        %p328 = pneg %p131
        %p329 = pneg %p128
        %p330 = pneg %p152
        %p331 = pneg %p149
        %p332 = pneg %p173
        %p333 = pneg %p170
        %p334 = pneg %p199
        %p335 = pneg %p196
        %s336 = sand.u32 %s186, 1
        %s337 = scalar_lea.sflag [#allocation5], %s336
        %s338 = sand.u32 %s186, 1
        %s339 = smul.addr %s338, 256
        %s340 = scalar_lea.vmem [#allocation11], %s339
        %342 = vst [vmem:[#allocation2] sm:$0xff] 0.0
        %343 = vst [vmem:[#allocation2 + $0x8] sm:$0xff] 0.0
        %344 = vst [vmem:[#allocation2 + $0x10] sm:$0x3] 0.0
        %s345 = scalar_lea.vmem [#allocation2], 408
        %346 = vst [vmem:[%s345] sm:$0xff] 0.0
        %347 = vst [vmem:[%s345 + $0x8] sm:$0xff] 0.0
        %348 = vst [vmem:[%s345 + $0x10] sm:$0x3] 0.0
        %s349 = scalar_lea.vmem [#allocation2], 24
        %350 = vst [vmem:[%s349] sm:$0x1] 0.0
        %351 = vst [vmem:[%s349 + $0x18] sm:$0x1] 0.0
        %352 = vst [vmem:[%s349 + $0x30] sm:$0x1] 0.0
        %353 = vst [vmem:[%s349 + $0x48] sm:$0x1] 0.0
        %354 = vst [vmem:[%s349 + $0x60] sm:$0x1] 0.0
        %355 = vst [vmem:[%s349 + $0x78] sm:$0x1] 0.0
        %356 = vst [vmem:[%s349 + $0x90] sm:$0x1] 0.0
        %357 = vst [vmem:[%s349 + $0xa8] sm:$0x1] 0.0
        %358 = vst [vmem:[%s349 + $0xc0] sm:$0x1] 0.0
        %359 = vst [vmem:[%s349 + $0xd8] sm:$0x1] 0.0
        %360 = vst [vmem:[%s349 + $0xf0] sm:$0x1] 0.0
        %361 = vst [vmem:[%s349 + $0x108] sm:$0x1] 0.0
        %362 = vst [vmem:[%s349 + $0x120] sm:$0x1] 0.0
        %363 = vst [vmem:[%s349 + $0x138] sm:$0x1] 0.0
        %364 = vst [vmem:[%s349 + $0x150] sm:$0x1] 0.0
        %365 = vst [vmem:[%s349 + $0x168] sm:$0x1] 0.0
        %366 = vst [vmem:[%s349 + $0x11] sm:$0x1] 0.0
        %367 = vst [vmem:[%s349 + $0x29] sm:$0x1] 0.0
        %368 = vst [vmem:[%s349 + $0x41] sm:$0x1] 0.0
        %369 = vst [vmem:[%s349 + $0x59] sm:$0x1] 0.0
        %370 = vst [vmem:[%s349 + $0x71] sm:$0x1] 0.0
        %371 = vst [vmem:[%s349 + $0x89] sm:$0x1] 0.0
        %372 = vst [vmem:[%s349 + $0xa1] sm:$0x1] 0.0
        %373 = vst [vmem:[%s349 + $0xb9] sm:$0x1] 0.0
        %374 = vst [vmem:[%s349 + $0xd1] sm:$0x1] 0.0
        %375 = vst [vmem:[%s349 + $0xe9] sm:$0x1] 0.0
        %376 = vst [vmem:[%s349 + $0x101] sm:$0x1] 0.0
        %377 = vst [vmem:[%s349 + $0x119] sm:$0x1] 0.0
        %378 = vst [vmem:[%s349 + $0x131] sm:$0x1] 0.0
        %379 = vst [vmem:[%s349 + $0x149] sm:$0x1] 0.0
        %380 = vst [vmem:[%s349 + $0x161] sm:$0x1] 0.0
        %381 = vst [vmem:[%s349 + $0x179] sm:$0x1] 0.0
        %v382 = vld [vmem:[%s298] sm:$0xf]
        %v383 = vld [vmem:[%s298 + $0x4] sm:$0xf]
        %v384 = vld [vmem:[%s298 + $0x8] sm:$0xf]
        %v385 = vld [vmem:[%s298 + $0xc] sm:$0xf]
        %v386 = vld [vmem:[%s298 + $0x10] sm:$0xf]
        %v387 = vld [vmem:[%s298 + $0x14] sm:$0xf]
        %v388 = vld [vmem:[%s298 + $0x18] sm:$0xf]
        %v389 = vld [vmem:[%s298 + $0x1c] sm:$0xf]
        %v390 = vld [vmem:[%s298 + $0x20] sm:$0xf]
        %v391 = vld [vmem:[%s298 + $0x24] sm:$0xf]
        %v392 = vld [vmem:[%s298 + $0x28] sm:$0xf]
        %v393 = vld [vmem:[%s298 + $0x2c] sm:$0xf]
        %v394 = vld [vmem:[%s298 + $0x30] sm:$0xf]
        %v395 = vld [vmem:[%s298 + $0x34] sm:$0xf]
        %v396 = vld [vmem:[%s298 + $0x38] sm:$0xf]
        %v397 = vld [vmem:[%s298 + $0x3c] sm:$0xf]
        %v398 = vld [vmem:[%s298 + $0x40] sm:$0xf]
        %v399 = vld [vmem:[%s298 + $0x44] sm:$0xf]
        %v400 = vld [vmem:[%s298 + $0x48] sm:$0xf]
        %v401 = vld [vmem:[%s298 + $0x4c] sm:$0xf]
        %v402 = vld [vmem:[%s298 + $0x50] sm:$0xf]
        %v403 = vld [vmem:[%s298 + $0x54] sm:$0xf]
        %v404 = vld [vmem:[%s298 + $0x58] sm:$0xf]
        %v405 = vld [vmem:[%s298 + $0x5c] sm:$0xf]
        %v406 = vld [vmem:[%s298 + $0x60] sm:$0xf]
        %v407 = vld [vmem:[%s298 + $0x64] sm:$0xf]
        %v408 = vld [vmem:[%s298 + $0x68] sm:$0xf]
        %v409 = vld [vmem:[%s298 + $0x6c] sm:$0xf]
        %v410 = vld [vmem:[%s298 + $0x70] sm:$0xf]
        %v411 = vld [vmem:[%s298 + $0x74] sm:$0xf]
        %v412 = vld [vmem:[%s298 + $0x78] sm:$0xf]
        %v413 = vld [vmem:[%s298 + $0x7c] sm:$0xf]
        %v414 = vld [vmem:[#allocation6] sm:$0xf]
        %v415 = vld [vmem:[#allocation6 + $0x4] sm:$0xf]
        %v416 = vld [vmem:[#allocation6 + $0x8] sm:$0xf]
        %v417 = vld [vmem:[#allocation6 + $0xc] sm:$0xf]
        %v418 = vld [vmem:[#allocation6 + $0x10] sm:$0xf]
        %v419 = vld [vmem:[#allocation6 + $0x14] sm:$0xf]
        %v420 = vld [vmem:[#allocation6 + $0x18] sm:$0xf]
        %v421 = vld [vmem:[#allocation6 + $0x1c] sm:$0xf]
        %v422 = vld [vmem:[#allocation6 + $0x20] sm:$0xf]
        %v423 = vld [vmem:[#allocation6 + $0x24] sm:$0xf]
        %v424 = vld [vmem:[#allocation6 + $0x28] sm:$0xf]
        %v425 = vld [vmem:[#allocation6 + $0x2c] sm:$0xf]
        %v426 = vld [vmem:[#allocation6 + $0x30] sm:$0xf]
        %v427 = vld [vmem:[#allocation6 + $0x34] sm:$0xf]
        %v428 = vld [vmem:[#allocation6 + $0x38] sm:$0xf]
        %v429 = vld [vmem:[#allocation6 + $0x3c] sm:$0xf]
        %v430 = vld [vmem:[%s2] sm:$0x1]
        %v432 = vlaneseq
        %v433 = vshrl.u32 %v432, 7
        %v434 = vsub.s32 0, %v433
        %v435 = vrot.slane %v430, %v434
        %v469 = vunpack.c.l.b16 %v382
        %v470 = vunpack.c.l.b16 %v383
        %v471 = vunpack.c.l.b16 %v384
        %v472 = vunpack.c.l.b16 %v385
        %v473 = vunpack.c.l.b16 %v386
        %v474 = vunpack.c.l.b16 %v387
        %v475 = vunpack.c.l.b16 %v388
        %v476 = vunpack.c.l.b16 %v389
        %v477 = vunpack.c.l.b16 %v390
        %v478 = vunpack.c.l.b16 %v391
        %v479 = vunpack.c.l.b16 %v392
        %v480 = vunpack.c.l.b16 %v393
        %v481 = vunpack.c.l.b16 %v394
        %v482 = vunpack.c.l.b16 %v395
        %v483 = vunpack.c.l.b16 %v396
        %v484 = vunpack.c.l.b16 %v397
        %v485 = vunpack.c.l.b16 %v398
        %v486 = vunpack.c.l.b16 %v399
        %v487 = vunpack.c.l.b16 %v400
        %v488 = vunpack.c.l.b16 %v401
        %v489 = vunpack.c.l.b16 %v402
        %v490 = vunpack.c.l.b16 %v403
        %v491 = vunpack.c.l.b16 %v404
        %v492 = vunpack.c.l.b16 %v405
        %v493 = vunpack.c.l.b16 %v406
        %v494 = vunpack.c.l.b16 %v407
        %v495 = vunpack.c.l.b16 %v408
        %v496 = vunpack.c.l.b16 %v409
        %v497 = vunpack.c.l.b16 %v410
        %v498 = vunpack.c.l.b16 %v411
        %v499 = vunpack.c.l.b16 %v412
        %v500 = vunpack.c.l.b16 %v413
        %v501 = vpack.c.b16 %v470, %v469
        %v502 = vpack.c.b16 %v472, %v471
        %v503 = vpack.c.b16 %v474, %v473
        %v504 = vpack.c.b16 %v476, %v475
        %v505 = vpack.c.b16 %v478, %v477
        %v506 = vpack.c.b16 %v480, %v479
        %v507 = vpack.c.b16 %v482, %v481
        %v508 = vpack.c.b16 %v484, %v483
        %v509 = vpack.c.b16 %v486, %v485
        %v510 = vpack.c.b16 %v488, %v487
        %v511 = vpack.c.b16 %v490, %v489
        %v512 = vpack.c.b16 %v492, %v491
        %v513 = vpack.c.b16 %v494, %v493
        %v514 = vpack.c.b16 %v496, %v495
        %v515 = vpack.c.b16 %v498, %v497
        %v516 = vpack.c.b16 %v500, %v499
        %v549 = vunpack.c.l.b16 %v414
        %v550 = vunpack.c.l.b16 %v415
        %v551 = vunpack.c.l.b16 %v416
        %v552 = vunpack.c.l.b16 %v417
        %v553 = vunpack.c.l.b16 %v418
        %v554 = vunpack.c.l.b16 %v419
        %v555 = vunpack.c.l.b16 %v420
        %v556 = vunpack.c.l.b16 %v421
        %v557 = vunpack.c.l.b16 %v422
        %v558 = vunpack.c.l.b16 %v423
        %v559 = vunpack.c.l.b16 %v424
        %v560 = vunpack.c.l.b16 %v425
        %v561 = vunpack.c.l.b16 %v426
        %v562 = vunpack.c.l.b16 %v427
        %v563 = vunpack.c.l.b16 %v428
        %v564 = vunpack.c.l.b16 %v429
        %v565 = vpack.c.b16 %v550, %v549
        %v566 = vpack.c.b16 %v552, %v551
        %v567 = vpack.c.b16 %v554, %v553
        %v568 = vpack.c.b16 %v556, %v555
        %v569 = vpack.c.b16 %v558, %v557
        %v570 = vpack.c.b16 %v560, %v559
        %v571 = vpack.c.b16 %v562, %v561
        %v572 = vpack.c.b16 %v564, %v563
        %581 = vmatprep.subr.bf16.mxu0 0
        %582 = vmatpush1.bf16.msra.mxu0 %v565
        %583 = vmatprep.subr.bf16.mxu0 0
        %584 = vmatpush1.bf16.msra.mxu0 %v566
        %585 = vmatprep.subr.bf16.mxu0 0
        %586 = vmatpush1.bf16.msra.mxu0 %v567
        %587 = vmatprep.subr.bf16.mxu0 0
        %588 = vmatpush1.bf16.msra.mxu0 %v568
        %589 = vmatprep.subr.bf16.mxu0 0
        %590 = vmatpush1.bf16.msra.mxu0 %v569
        %591 = vmatprep.subr.bf16.mxu0 0
        %592 = vmatpush1.bf16.msra.mxu0 %v570
        %593 = vmatprep.subr.bf16.mxu0 0
        %594 = vmatpush1.bf16.msra.mxu0 %v571
        %595 = vmatprep.subr.bf16.mxu0 0
        %596 = vmatpush1.bf16.msra.mxu0 %v572
        %597 = vmatprep.subr.bf16.mxu0 0
        %598 = vmatpush1.bf16.msra.mxu0 0
        %599 = vmatprep.subr.bf16.mxu0 0
        %600 = vmatpush1.bf16.msra.mxu0 0
        %601 = vmatprep.subr.bf16.mxu0 0
        %602 = vmatpush1.bf16.msra.mxu0 0
        %603 = vmatprep.subr.bf16.mxu0 0
        %604 = vmatpush1.bf16.msra.mxu0 0
        %605 = vmatprep.subr.bf16.mxu0 0
        %606 = vmatpush1.bf16.msra.mxu0 0
        %607 = vmatprep.subr.bf16.mxu0 0
        %608 = vmatpush1.bf16.msra.mxu0 0
        %609 = vmatprep.subr.bf16.mxu0 0
        %610 = vmatpush1.bf16.msra.mxu0 0
        %611 = vmatprep.subr.bf16.mxu0 0
        %612 = vmatpush1.bf16.msra.mxu0 0
        %613 = vmatprep.mubr.bf16.mxu0 0
        %614 = vmatmul.mubr.bf16.gmra.mrb[0].mxu0 %v501
        %v615 = vpop.f32.mrb[0].mxu0
        %v616 = vadd.f32 %v435, %v615
        %v617 = vpop.f32.mrb[0].mxu0
        %v618 = vpop.f32.mrb[0].mxu0
        %v619 = vadd.f32 %v435, %v618
        %v620 = vpop.f32.mrb[0].mxu0
        %621 = vmatprep.mubr.bf16.mxu0 0
        %622 = vmatmul.mubr.bf16.gmra.mrb[0].mxu0 %v502
        %v623 = vpop.f32.mrb[0].mxu0
        %v624 = vadd.f32 %v435, %v623
        %v625 = vpop.f32.mrb[0].mxu0
        %v626 = vpop.f32.mrb[0].mxu0
        %v627 = vadd.f32 %v435, %v626
        %v628 = vpop.f32.mrb[0].mxu0
        %629 = vmatprep.mubr.bf16.mxu0 0
        %630 = vmatmul.mubr.bf16.gmra.mrb[0].mxu0 %v503
        %v631 = vpop.f32.mrb[0].mxu0
        %v632 = vadd.f32 %v435, %v631
        %v633 = vpop.f32.mrb[0].mxu0
        %v634 = vpop.f32.mrb[0].mxu0
        %v635 = vadd.f32 %v435, %v634
        %v636 = vpop.f32.mrb[0].mxu0
        %637 = vmatprep.mubr.bf16.mxu0 0
        %638 = vmatmul.mubr.bf16.gmra.mrb[0].mxu0 %v504
        %v639 = vpop.f32.mrb[0].mxu0
        %v640 = vadd.f32 %v435, %v639
        %v641 = vpop.f32.mrb[0].mxu0
        %v642 = vpop.f32.mrb[0].mxu0
        %v643 = vadd.f32 %v435, %v642
        %v644 = vpop.f32.mrb[0].mxu0
        %645 = vmatprep.mubr.bf16.mxu0 0
        %646 = vmatmul.mubr.bf16.gmra.mrb[0].mxu0 %v505
        %v647 = vpop.f32.mrb[0].mxu0
        %v648 = vadd.f32 %v435, %v647
        %v649 = vpop.f32.mrb[0].mxu0
        %v650 = vpop.f32.mrb[0].mxu0
        %v651 = vadd.f32 %v435, %v650
        %v652 = vpop.f32.mrb[0].mxu0
        %653 = vmatprep.mubr.bf16.mxu0 0
        %654 = vmatmul.mubr.bf16.gmra.mrb[0].mxu0 %v506
        %v655 = vpop.f32.mrb[0].mxu0
        %v656 = vadd.f32 %v435, %v655
        %v657 = vpop.f32.mrb[0].mxu0
        %v658 = vpop.f32.mrb[0].mxu0
        %v659 = vadd.f32 %v435, %v658
        %v660 = vpop.f32.mrb[0].mxu0
        %661 = vmatprep.mubr.bf16.mxu0 0
        %662 = vmatmul.mubr.bf16.gmra.mrb[0].mxu0 %v507
        %v663 = vpop.f32.mrb[0].mxu0
        %v664 = vadd.f32 %v435, %v663
        %v665 = vpop.f32.mrb[0].mxu0
        %v666 = vpop.f32.mrb[0].mxu0
        %v667 = vadd.f32 %v435, %v666
        %v668 = vpop.f32.mrb[0].mxu0
        %669 = vmatprep.mubr.bf16.mxu0 0
        %670 = vmatmul.mubr.bf16.gmra.mrb[0].mxu0 %v508
        %v671 = vpop.f32.mrb[0].mxu0
        %v672 = vadd.f32 %v435, %v671
        %v673 = vpop.f32.mrb[0].mxu0
        %v674 = vpop.f32.mrb[0].mxu0
        %v675 = vadd.f32 %v435, %v674
        %v676 = vpop.f32.mrb[0].mxu0
        %677 = vmatprep.mubr.bf16.mxu0 0
        %678 = vmatmul.mubr.bf16.gmra.mrb[0].mxu0 %v509
        %v679 = vpop.f32.mrb[0].mxu0
        %v680 = vadd.f32 %v435, %v679
        %v681 = vpop.f32.mrb[0].mxu0
        %v682 = vpop.f32.mrb[0].mxu0
        %v683 = vadd.f32 %v435, %v682
        %v684 = vpop.f32.mrb[0].mxu0
        %685 = vmatprep.mubr.bf16.mxu0 0
        %686 = vmatmul.mubr.bf16.gmra.mrb[0].mxu0 %v510
        %v687 = vpop.f32.mrb[0].mxu0
        %v688 = vadd.f32 %v435, %v687
        %v689 = vpop.f32.mrb[0].mxu0
        %v690 = vpop.f32.mrb[0].mxu0
        %v691 = vadd.f32 %v435, %v690
        %v692 = vpop.f32.mrb[0].mxu0
        %693 = vmatprep.mubr.bf16.mxu0 0
        %694 = vmatmul.mubr.bf16.gmra.mrb[0].mxu0 %v511
        %v695 = vpop.f32.mrb[0].mxu0
        %v696 = vadd.f32 %v435, %v695
        %v697 = vpop.f32.mrb[0].mxu0
        %v698 = vpop.f32.mrb[0].mxu0
        %v699 = vadd.f32 %v435, %v698
        %v700 = vpop.f32.mrb[0].mxu0
        %701 = vmatprep.mubr.bf16.mxu0 0
        %702 = vmatmul.mubr.bf16.gmra.mrb[0].mxu0 %v512
        %v703 = vpop.f32.mrb[0].mxu0
        %v704 = vadd.f32 %v435, %v703
        %v705 = vpop.f32.mrb[0].mxu0
        %v706 = vpop.f32.mrb[0].mxu0
        %v707 = vadd.f32 %v435, %v706
        %v708 = vpop.f32.mrb[0].mxu0
        %709 = vmatprep.mubr.bf16.mxu0 0
        %710 = vmatmul.mubr.bf16.gmra.mrb[0].mxu0 %v513
        %v711 = vpop.f32.mrb[0].mxu0
        %v712 = vadd.f32 %v435, %v711
        %v713 = vpop.f32.mrb[0].mxu0
        %v714 = vpop.f32.mrb[0].mxu0
        %v715 = vadd.f32 %v435, %v714
        %v716 = vpop.f32.mrb[0].mxu0
        %717 = vmatprep.mubr.bf16.mxu0 0
        %718 = vmatmul.mubr.bf16.gmra.mrb[0].mxu0 %v514
        %v719 = vpop.f32.mrb[0].mxu0
        %v720 = vadd.f32 %v435, %v719
        %v721 = vpop.f32.mrb[0].mxu0
        %v722 = vpop.f32.mrb[0].mxu0
        %v723 = vadd.f32 %v435, %v722
        %v724 = vpop.f32.mrb[0].mxu0
        %725 = vmatprep.mubr.bf16.mxu0 0
        %726 = vmatmul.mubr.bf16.gmra.mrb[0].mxu0 %v515
        %v727 = vpop.f32.mrb[0].mxu0
        %v728 = vadd.f32 %v435, %v727
        %v729 = vpop.f32.mrb[0].mxu0
        %v730 = vpop.f32.mrb[0].mxu0
        %v731 = vadd.f32 %v435, %v730
        %v732 = vpop.f32.mrb[0].mxu0
        %733 = vmatprep.mubr.bf16.mxu0 0
        %734 = vmatmul.mubr.bf16.gmra.mrb[0].mxu0 %v516
        %v735 = vpop.f32.mrb[0].mxu0
        %v736 = vadd.f32 %v435, %v735
        %v737 = vpop.f32.mrb[0].mxu0
        %v738 = vpop.f32.mrb[0].mxu0
        %v739 = vadd.f32 %v435, %v738
        %v740 = vpop.f32.mrb[0].mxu0
        %741 = vdwg.mxu0
        %742 = vst [vmem:[%s340] sm:$0xff] %v616
        %743 = vst [vmem:[%s340 + $0x8] sm:$0xff] %v619
        %744 = vst [vmem:[%s340 + $0x10] sm:$0xff] %v624
        %745 = vst [vmem:[%s340 + $0x18] sm:$0xff] %v627
        %746 = vst [vmem:[%s340 + $0x20] sm:$0xff] %v632
        %747 = vst [vmem:[%s340 + $0x28] sm:$0xff] %v635
        %748 = vst [vmem:[%s340 + $0x30] sm:$0xff] %v640
        %749 = vst [vmem:[%s340 + $0x38] sm:$0xff] %v643
        %750 = vst [vmem:[%s340 + $0x40] sm:$0xff] %v648
        %751 = vst [vmem:[%s340 + $0x48] sm:$0xff] %v651
        %752 = vst [vmem:[%s340 + $0x50] sm:$0xff] %v656
        %753 = vst [vmem:[%s340 + $0x58] sm:$0xff] %v659
        %754 = vst [vmem:[%s340 + $0x60] sm:$0xff] %v664
        %755 = vst [vmem:[%s340 + $0x68] sm:$0xff] %v667
        %756 = vst [vmem:[%s340 + $0x70] sm:$0xff] %v672
        %757 = vst [vmem:[%s340 + $0x78] sm:$0xff] %v675
        %758 = vst [vmem:[%s340 + $0x80] sm:$0xff] %v680
        %759 = vst [vmem:[%s340 + $0x88] sm:$0xff] %v683
        %760 = vst [vmem:[%s340 + $0x90] sm:$0xff] %v688
        %761 = vst [vmem:[%s340 + $0x98] sm:$0xff] %v691
        %762 = vst [vmem:[%s340 + $0xa0] sm:$0xff] %v696
        %763 = vst [vmem:[%s340 + $0xa8] sm:$0xff] %v699
        %764 = vst [vmem:[%s340 + $0xb0] sm:$0xff] %v704
        %765 = vst [vmem:[%s340 + $0xb8] sm:$0xff] %v707
        %766 = vst [vmem:[%s340 + $0xc0] sm:$0xff] %v712
        %767 = vst [vmem:[%s340 + $0xc8] sm:$0xff] %v715
        %768 = vst [vmem:[%s340 + $0xd0] sm:$0xff] %v720
        %769 = vst [vmem:[%s340 + $0xd8] sm:$0xff] %v723
        %770 = vst [vmem:[%s340 + $0xe0] sm:$0xff] %v728
        %771 = vst [vmem:[%s340 + $0xe8] sm:$0xff] %v731
        %772 = vst [vmem:[%s340 + $0xf0] sm:$0xff] %v736
        %773 = vst [vmem:[%s340 + $0xf8] sm:$0xff] %v739
        %v774 = vld [vmem:[%s4] sm:$0x1]
        %775 = vst [vmem:[%s349 + $0x1] sm:$0xff] %v616
        %776 = vst [vmem:[%s349 + $0x9] sm:$0xff] %v619
        %777 = vst [vmem:[%s349 + $0x19] sm:$0xff] %v624
        %778 = vst [vmem:[%s349 + $0x21] sm:$0xff] %v627
        %779 = vst [vmem:[%s349 + $0x31] sm:$0xff] %v632
        %780 = vst [vmem:[%s349 + $0x39] sm:$0xff] %v635
        %781 = vst [vmem:[%s349 + $0x49] sm:$0xff] %v640
        %782 = vst [vmem:[%s349 + $0x51] sm:$0xff] %v643
        %783 = vst [vmem:[%s349 + $0x61] sm:$0xff] %v648
        %784 = vst [vmem:[%s349 + $0x69] sm:$0xff] %v651
        %785 = vst [vmem:[%s349 + $0x79] sm:$0xff] %v656
        %786 = vst [vmem:[%s349 + $0x81] sm:$0xff] %v659
        %787 = vst [vmem:[%s349 + $0x91] sm:$0xff] %v664
        %788 = vst [vmem:[%s349 + $0x99] sm:$0xff] %v667
        %789 = vst [vmem:[%s349 + $0xa9] sm:$0xff] %v672
        %790 = vst [vmem:[%s349 + $0xb1] sm:$0xff] %v675
        %791 = vst [vmem:[%s349 + $0xc1] sm:$0xff] %v680
        %792 = vst [vmem:[%s349 + $0xc9] sm:$0xff] %v683
        %793 = vst [vmem:[%s349 + $0xd9] sm:$0xff] %v688
        %794 = vst [vmem:[%s349 + $0xe1] sm:$0xff] %v691
        %795 = vst [vmem:[%s349 + $0xf1] sm:$0xff] %v696
        %796 = vst [vmem:[%s349 + $0xf9] sm:$0xff] %v699
        %797 = vst [vmem:[%s349 + $0x109] sm:$0xff] %v704
        %798 = vst [vmem:[%s349 + $0x111] sm:$0xff] %v707
        %799 = vst [vmem:[%s349 + $0x121] sm:$0xff] %v712
        %800 = vst [vmem:[%s349 + $0x129] sm:$0xff] %v715
        %801 = vst [vmem:[%s349 + $0x139] sm:$0xff] %v720
        %802 = vst [vmem:[%s349 + $0x141] sm:$0xff] %v723
        %803 = vst [vmem:[%s349 + $0x151] sm:$0xff] %v728
        %804 = vst [vmem:[%s349 + $0x159] sm:$0xff] %v731
        %805 = vst [vmem:[%s349 + $0x169] sm:$0xff] %v736
        %806 = vst [vmem:[%s349 + $0x171] sm:$0xff] %v739
        %v807 = vld [vmem:[#allocation2] sm:$0xff]
        %v808 = vld [vmem:[#allocation2 + $0x8] sm:$0xff]
        %v809 = vld [vmem:[#allocation2 + $0x18] sm:$0xff]
        %v810 = vld [vmem:[#allocation2 + $0x20] sm:$0xff]
        %v811 = vld [vmem:[#allocation2 + $0x30] sm:$0xff]
        %v812 = vld [vmem:[#allocation2 + $0x38] sm:$0xff]
        %v813 = vld [vmem:[#allocation2 + $0x48] sm:$0xff]
        %v814 = vld [vmem:[#allocation2 + $0x50] sm:$0xff]
        %v815 = vld [vmem:[#allocation2 + $0x60] sm:$0xff]
        %v816 = vld [vmem:[#allocation2 + $0x68] sm:$0xff]
        %v817 = vld [vmem:[#allocation2 + $0x78] sm:$0xff]
        %v818 = vld [vmem:[#allocation2 + $0x80] sm:$0xff]
        %v819 = vld [vmem:[#allocation2 + $0x90] sm:$0xff]
        %v820 = vld [vmem:[#allocation2 + $0x98] sm:$0xff]
        %v821 = vld [vmem:[#allocation2 + $0xa8] sm:$0xff]
        %v822 = vld [vmem:[#allocation2 + $0xb0] sm:$0xff]
        %v823 = vld [vmem:[#allocation2 + $0xc0] sm:$0xff]
        %v824 = vld [vmem:[#allocation2 + $0xc8] sm:$0xff]
        %v825 = vld [vmem:[#allocation2 + $0xd8] sm:$0xff]
        %v826 = vld [vmem:[#allocation2 + $0xe0] sm:$0xff]
        %v827 = vld [vmem:[#allocation2 + $0xf0] sm:$0xff]
        %v828 = vld [vmem:[#allocation2 + $0xf8] sm:$0xff]
        %v829 = vld [vmem:[#allocation2 + $0x108] sm:$0xff]
        %v830 = vld [vmem:[#allocation2 + $0x110] sm:$0xff]
        %v831 = vld [vmem:[#allocation2 + $0x120] sm:$0xff]
        %v832 = vld [vmem:[#allocation2 + $0x128] sm:$0xff]
        %v833 = vld [vmem:[#allocation2 + $0x138] sm:$0xff]
        %v834 = vld [vmem:[#allocation2 + $0x140] sm:$0xff]
        %v835 = vld [vmem:[#allocation2 + $0x150] sm:$0xff]
        %v836 = vld [vmem:[#allocation2 + $0x158] sm:$0xff]
        %v837 = vld [vmem:[#allocation2 + $0x168] sm:$0xff]
        %v838 = vld [vmem:[#allocation2 + $0x170] sm:$0xff]
        %v839 = vld [vmem:[#allocation2 + $0x1] sm:$0xff]
        %v840 = vld [vmem:[#allocation2 + $0x9] sm:$0xff]
        %v841 = vld [vmem:[#allocation2 + $0x19] sm:$0xff]
        %v842 = vld [vmem:[#allocation2 + $0x21] sm:$0xff]
        %v843 = vld [vmem:[#allocation2 + $0x31] sm:$0xff]
        %v844 = vld [vmem:[#allocation2 + $0x39] sm:$0xff]
        %v845 = vld [vmem:[#allocation2 + $0x49] sm:$0xff]
        %v846 = vld [vmem:[#allocation2 + $0x51] sm:$0xff]
        %v847 = vld [vmem:[#allocation2 + $0x61] sm:$0xff]
        %v848 = vld [vmem:[#allocation2 + $0x69] sm:$0xff]
        %v849 = vld [vmem:[#allocation2 + $0x79] sm:$0xff]
        %v850 = vld [vmem:[#allocation2 + $0x81] sm:$0xff]
        %v851 = vld [vmem:[#allocation2 + $0x91] sm:$0xff]
        %v852 = vld [vmem:[#allocation2 + $0x99] sm:$0xff]
        %v853 = vld [vmem:[#allocation2 + $0xa9] sm:$0xff]
        %v854 = vld [vmem:[#allocation2 + $0xb1] sm:$0xff]
        %v855 = vld [vmem:[#allocation2 + $0xc1] sm:$0xff]
        %v856 = vld [vmem:[#allocation2 + $0xc9] sm:$0xff]
        %v857 = vld [vmem:[#allocation2 + $0xd9] sm:$0xff]
        %v858 = vld [vmem:[#allocation2 + $0xe1] sm:$0xff]
        %v859 = vld [vmem:[#allocation2 + $0xf1] sm:$0xff]
        %v860 = vld [vmem:[#allocation2 + $0xf9] sm:$0xff]
        %v861 = vld [vmem:[#allocation2 + $0x109] sm:$0xff]
        %v862 = vld [vmem:[#allocation2 + $0x111] sm:$0xff]
        %v863 = vld [vmem:[#allocation2 + $0x121] sm:$0xff]
        %v864 = vld [vmem:[#allocation2 + $0x129] sm:$0xff]
        %v865 = vld [vmem:[#allocation2 + $0x139] sm:$0xff]
        %v866 = vld [vmem:[#allocation2 + $0x141] sm:$0xff]
        %v867 = vld [vmem:[#allocation2 + $0x151] sm:$0xff]
        %v868 = vld [vmem:[#allocation2 + $0x159] sm:$0xff]
        %v869 = vld [vmem:[#allocation2 + $0x169] sm:$0xff]
        %v870 = vld [vmem:[#allocation2 + $0x171] sm:$0xff]
        %v871 = vld [vmem:[#allocation2 + $0x2] sm:$0xff]
        %v872 = vld [vmem:[#allocation2 + $0xa] sm:$0xff]
        %v873 = vld [vmem:[#allocation2 + $0x1a] sm:$0xff]
        %v874 = vld [vmem:[#allocation2 + $0x22] sm:$0xff]
        %v875 = vld [vmem:[#allocation2 + $0x32] sm:$0xff]
        %v876 = vld [vmem:[#allocation2 + $0x3a] sm:$0xff]
        %v877 = vld [vmem:[#allocation2 + $0x4a] sm:$0xff]
        %v878 = vld [vmem:[#allocation2 + $0x52] sm:$0xff]
        %v879 = vld [vmem:[#allocation2 + $0x62] sm:$0xff]
        %v880 = vld [vmem:[#allocation2 + $0x6a] sm:$0xff]
        %v881 = vld [vmem:[#allocation2 + $0x7a] sm:$0xff]
        %v882 = vld [vmem:[#allocation2 + $0x82] sm:$0xff]
        %v883 = vld [vmem:[#allocation2 + $0x92] sm:$0xff]
        %v884 = vld [vmem:[#allocation2 + $0x9a] sm:$0xff]
        %v885 = vld [vmem:[#allocation2 + $0xaa] sm:$0xff]
        %v886 = vld [vmem:[#allocation2 + $0xb2] sm:$0xff]
        %v887 = vld [vmem:[#allocation2 + $0xc2] sm:$0xff]
        %v888 = vld [vmem:[#allocation2 + $0xca] sm:$0xff]
        %v889 = vld [vmem:[#allocation2 + $0xda] sm:$0xff]
        %v890 = vld [vmem:[#allocation2 + $0xe2] sm:$0xff]
        %v891 = vld [vmem:[#allocation2 + $0xf2] sm:$0xff]
        %v892 = vld [vmem:[#allocation2 + $0xfa] sm:$0xff]
        %v893 = vld [vmem:[#allocation2 + $0x10a] sm:$0xff]
        %v894 = vld [vmem:[#allocation2 + $0x112] sm:$0xff]
        %v895 = vld [vmem:[#allocation2 + $0x122] sm:$0xff]
        %v896 = vld [vmem:[#allocation2 + $0x12a] sm:$0xff]
        %v897 = vld [vmem:[#allocation2 + $0x13a] sm:$0xff]
        %v898 = vld [vmem:[#allocation2 + $0x142] sm:$0xff]
        %v899 = vld [vmem:[#allocation2 + $0x152] sm:$0xff]
        %v900 = vld [vmem:[#allocation2 + $0x15a] sm:$0xff]
        %v901 = vld [vmem:[#allocation2 + $0x16a] sm:$0xff]
        %v902 = vld [vmem:[#allocation2 + $0x172] sm:$0xff]
        %v903 = vld [vmem:[%s349] sm:$0xff]
        %v904 = vld [vmem:[%s349 + $0x8] sm:$0xff]
        %v905 = vld [vmem:[%s349 + $0x18] sm:$0xff]
        %v906 = vld [vmem:[%s349 + $0x20] sm:$0xff]
        %v907 = vld [vmem:[%s349 + $0x30] sm:$0xff]
        %v908 = vld [vmem:[%s349 + $0x38] sm:$0xff]
        %v909 = vld [vmem:[%s349 + $0x48] sm:$0xff]
        %v910 = vld [vmem:[%s349 + $0x50] sm:$0xff]
        %v911 = vld [vmem:[%s349 + $0x60] sm:$0xff]
        %v912 = vld [vmem:[%s349 + $0x68] sm:$0xff]
        %v913 = vld [vmem:[%s349 + $0x78] sm:$0xff]
        %v914 = vld [vmem:[%s349 + $0x80] sm:$0xff]
        %v915 = vld [vmem:[%s349 + $0x90] sm:$0xff]
        %v916 = vld [vmem:[%s349 + $0x98] sm:$0xff]
        %v917 = vld [vmem:[%s349 + $0xa8] sm:$0xff]
        %v918 = vld [vmem:[%s349 + $0xb0] sm:$0xff]
        %v919 = vld [vmem:[%s349 + $0xc0] sm:$0xff]
        %v920 = vld [vmem:[%s349 + $0xc8] sm:$0xff]
        %v921 = vld [vmem:[%s349 + $0xd8] sm:$0xff]
        %v922 = vld [vmem:[%s349 + $0xe0] sm:$0xff]
        %v923 = vld [vmem:[%s349 + $0xf0] sm:$0xff]
        %v924 = vld [vmem:[%s349 + $0xf8] sm:$0xff]
        %v925 = vld [vmem:[%s349 + $0x108] sm:$0xff]
        %v926 = vld [vmem:[%s349 + $0x110] sm:$0xff]
        %v927 = vld [vmem:[%s349 + $0x120] sm:$0xff]
        %v928 = vld [vmem:[%s349 + $0x128] sm:$0xff]
        %v929 = vld [vmem:[%s349 + $0x138] sm:$0xff]
        %v930 = vld [vmem:[%s349 + $0x140] sm:$0xff]
        %v931 = vld [vmem:[%s349 + $0x150] sm:$0xff]
        %v932 = vld [vmem:[%s349 + $0x158] sm:$0xff]
        %v933 = vld [vmem:[%s349 + $0x168] sm:$0xff]
        %v934 = vld [vmem:[%s349 + $0x170] sm:$0xff]
        %v935 = vld [vmem:[%s349 + $0x1] sm:$0xff]
        %v936 = vld [vmem:[%s349 + $0x9] sm:$0xff]
        %v937 = vld [vmem:[%s349 + $0x19] sm:$0xff]
        %v938 = vld [vmem:[%s349 + $0x21] sm:$0xff]
        %v939 = vld [vmem:[%s349 + $0x31] sm:$0xff]
        %v940 = vld [vmem:[%s349 + $0x39] sm:$0xff]
        %v941 = vld [vmem:[%s349 + $0x49] sm:$0xff]
        %v942 = vld [vmem:[%s349 + $0x51] sm:$0xff]
        %v943 = vld [vmem:[%s349 + $0x61] sm:$0xff]
        %v944 = vld [vmem:[%s349 + $0x69] sm:$0xff]
        %v945 = vld [vmem:[%s349 + $0x79] sm:$0xff]
        %v946 = vld [vmem:[%s349 + $0x81] sm:$0xff]
        %v947 = vld [vmem:[%s349 + $0x91] sm:$0xff]
        %v948 = vld [vmem:[%s349 + $0x99] sm:$0xff]
        %v949 = vld [vmem:[%s349 + $0xa9] sm:$0xff]
        %v950 = vld [vmem:[%s349 + $0xb1] sm:$0xff]
        %v951 = vld [vmem:[%s349 + $0xc1] sm:$0xff]
        %v952 = vld [vmem:[%s349 + $0xc9] sm:$0xff]
        %v953 = vld [vmem:[%s349 + $0xd9] sm:$0xff]
        %v954 = vld [vmem:[%s349 + $0xe1] sm:$0xff]
        %v955 = vld [vmem:[%s349 + $0xf1] sm:$0xff]
        %v956 = vld [vmem:[%s349 + $0xf9] sm:$0xff]
        %v957 = vld [vmem:[%s349 + $0x109] sm:$0xff]
        %v958 = vld [vmem:[%s349 + $0x111] sm:$0xff]
        %v959 = vld [vmem:[%s349 + $0x121] sm:$0xff]
        %v960 = vld [vmem:[%s349 + $0x129] sm:$0xff]
        %v961 = vld [vmem:[%s349 + $0x139] sm:$0xff]
        %v962 = vld [vmem:[%s349 + $0x141] sm:$0xff]
        %v963 = vld [vmem:[%s349 + $0x151] sm:$0xff]
        %v964 = vld [vmem:[%s349 + $0x159] sm:$0xff]
        %v965 = vld [vmem:[%s349 + $0x169] sm:$0xff]
        %v966 = vld [vmem:[%s349 + $0x171] sm:$0xff]
        %v967 = vld [vmem:[%s349 + $0x2] sm:$0xff]
        %v968 = vld [vmem:[%s349 + $0xa] sm:$0xff]
        %v969 = vld [vmem:[%s349 + $0x1a] sm:$0xff]
        %v970 = vld [vmem:[%s349 + $0x22] sm:$0xff]
        %v971 = vld [vmem:[%s349 + $0x32] sm:$0xff]
        %v972 = vld [vmem:[%s349 + $0x3a] sm:$0xff]
        %v973 = vld [vmem:[%s349 + $0x4a] sm:$0xff]
        %v974 = vld [vmem:[%s349 + $0x52] sm:$0xff]
        %v975 = vld [vmem:[%s349 + $0x62] sm:$0xff]
        %v976 = vld [vmem:[%s349 + $0x6a] sm:$0xff]
        %v977 = vld [vmem:[%s349 + $0x7a] sm:$0xff]
        %v978 = vld [vmem:[%s349 + $0x82] sm:$0xff]
        %v979 = vld [vmem:[%s349 + $0x92] sm:$0xff]
        %v980 = vld [vmem:[%s349 + $0x9a] sm:$0xff]
        %v981 = vld [vmem:[%s349 + $0xaa] sm:$0xff]
        %v982 = vld [vmem:[%s349 + $0xb2] sm:$0xff]
        %v983 = vld [vmem:[%s349 + $0xc2] sm:$0xff]
        %v984 = vld [vmem:[%s349 + $0xca] sm:$0xff]
        %v985 = vld [vmem:[%s349 + $0xda] sm:$0xff]
        %v986 = vld [vmem:[%s349 + $0xe2] sm:$0xff]
        %v987 = vld [vmem:[%s349 + $0xf2] sm:$0xff]
        %v988 = vld [vmem:[%s349 + $0xfa] sm:$0xff]
        %v989 = vld [vmem:[%s349 + $0x10a] sm:$0xff]
        %v990 = vld [vmem:[%s349 + $0x112] sm:$0xff]
        %v991 = vld [vmem:[%s349 + $0x122] sm:$0xff]
        %v992 = vld [vmem:[%s349 + $0x12a] sm:$0xff]
        %v993 = vld [vmem:[%s349 + $0x13a] sm:$0xff]
        %v994 = vld [vmem:[%s349 + $0x142] sm:$0xff]
        %v995 = vld [vmem:[%s349 + $0x152] sm:$0xff]
        %v996 = vld [vmem:[%s349 + $0x15a] sm:$0xff]
        %v997 = vld [vmem:[%s349 + $0x16a] sm:$0xff]
        %v998 = vld [vmem:[%s349 + $0x172] sm:$0xff]
        %s999 = scalar_lea.vmem [#allocation2], 48
        %v1000 = vld [vmem:[%s999] sm:$0xff]
        %v1001 = vld [vmem:[%s999 + $0x8] sm:$0xff]
        %v1002 = vld [vmem:[%s999 + $0x18] sm:$0xff]
        %v1003 = vld [vmem:[%s999 + $0x20] sm:$0xff]
        %v1004 = vld [vmem:[%s999 + $0x30] sm:$0xff]
        %v1005 = vld [vmem:[%s999 + $0x38] sm:$0xff]
        %v1006 = vld [vmem:[%s999 + $0x48] sm:$0xff]
        %v1007 = vld [vmem:[%s999 + $0x50] sm:$0xff]
        %v1008 = vld [vmem:[%s999 + $0x60] sm:$0xff]
        %v1009 = vld [vmem:[%s999 + $0x68] sm:$0xff]
        %v1010 = vld [vmem:[%s999 + $0x78] sm:$0xff]
        %v1011 = vld [vmem:[%s999 + $0x80] sm:$0xff]
        %v1012 = vld [vmem:[%s999 + $0x90] sm:$0xff]
        %v1013 = vld [vmem:[%s999 + $0x98] sm:$0xff]
        %v1014 = vld [vmem:[%s999 + $0xa8] sm:$0xff]
        %v1015 = vld [vmem:[%s999 + $0xb0] sm:$0xff]
        %v1016 = vld [vmem:[%s999 + $0xc0] sm:$0xff]
        %v1017 = vld [vmem:[%s999 + $0xc8] sm:$0xff]
        %v1018 = vld [vmem:[%s999 + $0xd8] sm:$0xff]
        %v1019 = vld [vmem:[%s999 + $0xe0] sm:$0xff]
        %v1020 = vld [vmem:[%s999 + $0xf0] sm:$0xff]
        %v1021 = vld [vmem:[%s999 + $0xf8] sm:$0xff]
        %v1022 = vld [vmem:[%s999 + $0x108] sm:$0xff]
        %v1023 = vld [vmem:[%s999 + $0x110] sm:$0xff]
        %v1024 = vld [vmem:[%s999 + $0x120] sm:$0xff]
        %v1025 = vld [vmem:[%s999 + $0x128] sm:$0xff]
        %v1026 = vld [vmem:[%s999 + $0x138] sm:$0xff]
        %v1027 = vld [vmem:[%s999 + $0x140] sm:$0xff]
        %v1028 = vld [vmem:[%s999 + $0x150] sm:$0xff]
        %v1029 = vld [vmem:[%s999 + $0x158] sm:$0xff]
        %v1030 = vld [vmem:[%s999 + $0x168] sm:$0xff]
        %v1031 = vld [vmem:[%s999 + $0x170] sm:$0xff]
        %v1032 = vld [vmem:[%s999 + $0x1] sm:$0xff]
        %v1033 = vld [vmem:[%s999 + $0x9] sm:$0xff]
        %v1034 = vld [vmem:[%s999 + $0x19] sm:$0xff]
        %v1035 = vld [vmem:[%s999 + $0x21] sm:$0xff]
        %v1036 = vld [vmem:[%s999 + $0x31] sm:$0xff]
        %v1037 = vld [vmem:[%s999 + $0x39] sm:$0xff]
        %v1038 = vld [vmem:[%s999 + $0x49] sm:$0xff]
        %v1039 = vld [vmem:[%s999 + $0x51] sm:$0xff]
        %v1040 = vld [vmem:[%s999 + $0x61] sm:$0xff]
        %v1041 = vld [vmem:[%s999 + $0x69] sm:$0xff]
        %v1042 = vld [vmem:[%s999 + $0x79] sm:$0xff]
        %v1043 = vld [vmem:[%s999 + $0x81] sm:$0xff]
        %v1044 = vld [vmem:[%s999 + $0x91] sm:$0xff]
        %v1045 = vld [vmem:[%s999 + $0x99] sm:$0xff]
        %v1046 = vld [vmem:[%s999 + $0xa9] sm:$0xff]
        %v1047 = vld [vmem:[%s999 + $0xb1] sm:$0xff]
        %v1048 = vld [vmem:[%s999 + $0xc1] sm:$0xff]
        %v1049 = vld [vmem:[%s999 + $0xc9] sm:$0xff]
        %v1050 = vld [vmem:[%s999 + $0xd9] sm:$0xff]
        %v1051 = vld [vmem:[%s999 + $0xe1] sm:$0xff]
        %v1052 = vld [vmem:[%s999 + $0xf1] sm:$0xff]
        %v1053 = vld [vmem:[%s999 + $0xf9] sm:$0xff]
        %v1054 = vld [vmem:[%s999 + $0x109] sm:$0xff]
        %v1055 = vld [vmem:[%s999 + $0x111] sm:$0xff]
        %v1056 = vld [vmem:[%s999 + $0x121] sm:$0xff]
        %v1057 = vld [vmem:[%s999 + $0x129] sm:$0xff]
        %v1058 = vld [vmem:[%s999 + $0x139] sm:$0xff]
        %v1059 = vld [vmem:[%s999 + $0x141] sm:$0xff]
        %v1060 = vld [vmem:[%s999 + $0x151] sm:$0xff]
        %v1061 = vld [vmem:[%s999 + $0x159] sm:$0xff]
        %v1062 = vld [vmem:[%s999 + $0x169] sm:$0xff]
        %v1063 = vld [vmem:[%s999 + $0x171] sm:$0xff]
        %v1064 = vld [vmem:[%s999 + $0x2] sm:$0xff]
        %v1065 = vld [vmem:[%s999 + $0xa] sm:$0xff]
        %v1066 = vld [vmem:[%s999 + $0x1a] sm:$0xff]
        %v1067 = vld [vmem:[%s999 + $0x22] sm:$0xff]
        %v1068 = vld [vmem:[%s999 + $0x32] sm:$0xff]
        %v1069 = vld [vmem:[%s999 + $0x3a] sm:$0xff]
        %v1070 = vld [vmem:[%s999 + $0x4a] sm:$0xff]
        %v1071 = vld [vmem:[%s999 + $0x52] sm:$0xff]
        %v1072 = vld [vmem:[%s999 + $0x62] sm:$0xff]
        %v1073 = vld [vmem:[%s999 + $0x6a] sm:$0xff]
        %v1074 = vld [vmem:[%s999 + $0x7a] sm:$0xff]
        %v1075 = vld [vmem:[%s999 + $0x82] sm:$0xff]
        %v1076 = vld [vmem:[%s999 + $0x92] sm:$0xff]
        %v1077 = vld [vmem:[%s999 + $0x9a] sm:$0xff]
        %v1078 = vld [vmem:[%s999 + $0xaa] sm:$0xff]
        %v1079 = vld [vmem:[%s999 + $0xb2] sm:$0xff]
        %v1080 = vld [vmem:[%s999 + $0xc2] sm:$0xff]
        %v1081 = vld [vmem:[%s999 + $0xca] sm:$0xff]
        %v1082 = vld [vmem:[%s999 + $0xda] sm:$0xff]
        %v1083 = vld [vmem:[%s999 + $0xe2] sm:$0xff]
        %v1084 = vld [vmem:[%s999 + $0xf2] sm:$0xff]
        %v1085 = vld [vmem:[%s999 + $0xfa] sm:$0xff]
        %v1086 = vld [vmem:[%s999 + $0x10a] sm:$0xff]
        %v1087 = vld [vmem:[%s999 + $0x112] sm:$0xff]
        %v1088 = vld [vmem:[%s999 + $0x122] sm:$0xff]
        %v1089 = vld [vmem:[%s999 + $0x12a] sm:$0xff]
        %v1090 = vld [vmem:[%s999 + $0x13a] sm:$0xff]
        %v1091 = vld [vmem:[%s999 + $0x142] sm:$0xff]
        %v1092 = vld [vmem:[%s999 + $0x152] sm:$0xff]
        %v1093 = vld [vmem:[%s999 + $0x15a] sm:$0xff]
        %v1094 = vld [vmem:[%s999 + $0x16a] sm:$0xff]
        %v1095 = vld [vmem:[%s999 + $0x172] sm:$0xff]
        %v1096 = vpack.c.bf16 %v808, %v807
        %v1097 = vpack.c.bf16 %v840, %v839
        %v1098 = vpack.c.bf16 %v872, %v871
        %v1099 = vpack.c.bf16 %v904, %v903
        %v1100 = vpack.c.bf16 %v936, %v935
        %v1101 = vpack.c.bf16 %v968, %v967
        %v1102 = vpack.c.bf16 %v1001, %v1000
        %v1103 = vpack.c.bf16 %v1033, %v1032
        %v1104 = vpack.c.bf16 %v1065, %v1064
        %v1105 = vpack.c.bf16 %v810, %v809
        %v1106 = vpack.c.bf16 %v842, %v841
        %v1107 = vpack.c.bf16 %v874, %v873
        %v1108 = vpack.c.bf16 %v906, %v905
        %v1109 = vpack.c.bf16 %v938, %v937
        %v1110 = vpack.c.bf16 %v970, %v969
        %v1111 = vpack.c.bf16 %v1003, %v1002
        %v1112 = vpack.c.bf16 %v1035, %v1034
        %v1113 = vpack.c.bf16 %v1067, %v1066
        %v1114 = vpack.c.bf16 %v812, %v811
        %v1115 = vpack.c.bf16 %v844, %v843
        %v1116 = vpack.c.bf16 %v876, %v875
        %v1117 = vpack.c.bf16 %v908, %v907
        %v1118 = vpack.c.bf16 %v940, %v939
        %v1119 = vpack.c.bf16 %v972, %v971
        %v1120 = vpack.c.bf16 %v1005, %v1004
        %v1121 = vpack.c.bf16 %v1037, %v1036
        %v1122 = vpack.c.bf16 %v1069, %v1068
        %v1123 = vpack.c.bf16 %v814, %v813
        %v1124 = vpack.c.bf16 %v846, %v845
        %v1125 = vpack.c.bf16 %v878, %v877
        %v1126 = vpack.c.bf16 %v910, %v909
        %v1127 = vpack.c.bf16 %v942, %v941
        %v1128 = vpack.c.bf16 %v974, %v973
        %v1129 = vpack.c.bf16 %v1007, %v1006
        %v1130 = vpack.c.bf16 %v1039, %v1038
        %v1131 = vpack.c.bf16 %v1071, %v1070
        %v1132 = vpack.c.bf16 %v816, %v815
        %v1133 = vpack.c.bf16 %v848, %v847
        %v1134 = vpack.c.bf16 %v880, %v879
        %v1135 = vpack.c.bf16 %v912, %v911
        %v1136 = vpack.c.bf16 %v944, %v943
        %v1137 = vpack.c.bf16 %v976, %v975
        %v1138 = vpack.c.bf16 %v1009, %v1008
        %v1139 = vpack.c.bf16 %v1041, %v1040
        %v1140 = vpack.c.bf16 %v1073, %v1072
        %v1141 = vpack.c.bf16 %v818, %v817
        %v1142 = vpack.c.bf16 %v850, %v849
        %v1143 = vpack.c.bf16 %v882, %v881
        %v1144 = vpack.c.bf16 %v914, %v913
        %v1145 = vpack.c.bf16 %v946, %v945
        %v1146 = vpack.c.bf16 %v978, %v977
        %v1147 = vpack.c.bf16 %v1011, %v1010
        %v1148 = vpack.c.bf16 %v1043, %v1042
        %v1149 = vpack.c.bf16 %v1075, %v1074
        %v1150 = vpack.c.bf16 %v820, %v819
        %v1151 = vpack.c.bf16 %v852, %v851
        %v1152 = vpack.c.bf16 %v884, %v883
        %v1153 = vpack.c.bf16 %v916, %v915
        %v1154 = vpack.c.bf16 %v948, %v947
        %v1155 = vpack.c.bf16 %v980, %v979
        %v1156 = vpack.c.bf16 %v1013, %v1012
        %v1157 = vpack.c.bf16 %v1045, %v1044
        %v1158 = vpack.c.bf16 %v1077, %v1076
        %v1159 = vpack.c.bf16 %v822, %v821
        %v1160 = vpack.c.bf16 %v854, %v853
        %v1161 = vpack.c.bf16 %v886, %v885
        %v1162 = vpack.c.bf16 %v918, %v917
        %v1163 = vpack.c.bf16 %v950, %v949
        %v1164 = vpack.c.bf16 %v982, %v981
        %v1165 = vpack.c.bf16 %v1015, %v1014
        %v1166 = vpack.c.bf16 %v1047, %v1046
        %v1167 = vpack.c.bf16 %v1079, %v1078
        %v1168 = vpack.c.bf16 %v824, %v823
        %v1169 = vpack.c.bf16 %v856, %v855
        %v1170 = vpack.c.bf16 %v888, %v887
        %v1171 = vpack.c.bf16 %v920, %v919
        %v1172 = vpack.c.bf16 %v952, %v951
        %v1173 = vpack.c.bf16 %v984, %v983
        %v1174 = vpack.c.bf16 %v1017, %v1016
        %v1175 = vpack.c.bf16 %v1049, %v1048
        %v1176 = vpack.c.bf16 %v1081, %v1080
        %v1177 = vpack.c.bf16 %v826, %v825
        %v1178 = vpack.c.bf16 %v858, %v857
        %v1179 = vpack.c.bf16 %v890, %v889
        %v1180 = vpack.c.bf16 %v922, %v921
        %v1181 = vpack.c.bf16 %v954, %v953
        %v1182 = vpack.c.bf16 %v986, %v985
        %v1183 = vpack.c.bf16 %v1019, %v1018
        %v1184 = vpack.c.bf16 %v1051, %v1050
        %v1185 = vpack.c.bf16 %v1083, %v1082
        %v1186 = vpack.c.bf16 %v828, %v827
        %v1187 = vpack.c.bf16 %v860, %v859
        %v1188 = vpack.c.bf16 %v892, %v891
        %v1189 = vpack.c.bf16 %v924, %v923
        %v1190 = vpack.c.bf16 %v956, %v955
        %v1191 = vpack.c.bf16 %v988, %v987
        %v1192 = vpack.c.bf16 %v1021, %v1020
        %v1193 = vpack.c.bf16 %v1053, %v1052
        %v1194 = vpack.c.bf16 %v1085, %v1084
        %v1195 = vpack.c.bf16 %v830, %v829
        %v1196 = vpack.c.bf16 %v862, %v861
        %v1197 = vpack.c.bf16 %v894, %v893
        %v1198 = vpack.c.bf16 %v926, %v925
        %v1199 = vpack.c.bf16 %v958, %v957
        %v1200 = vpack.c.bf16 %v990, %v989
        %v1201 = vpack.c.bf16 %v1023, %v1022
        %v1202 = vpack.c.bf16 %v1055, %v1054
        %v1203 = vpack.c.bf16 %v1087, %v1086
        %v1204 = vpack.c.bf16 %v832, %v831
        %v1205 = vpack.c.bf16 %v864, %v863
        %v1206 = vpack.c.bf16 %v896, %v895
        %v1207 = vpack.c.bf16 %v928, %v927
        %v1208 = vpack.c.bf16 %v960, %v959
        %v1209 = vpack.c.bf16 %v992, %v991
        %v1210 = vpack.c.bf16 %v1025, %v1024
        %v1211 = vpack.c.bf16 %v1057, %v1056
        %v1212 = vpack.c.bf16 %v1089, %v1088
        %v1213 = vpack.c.bf16 %v834, %v833
        %v1214 = vpack.c.bf16 %v866, %v865
        %v1215 = vpack.c.bf16 %v898, %v897
        %v1216 = vpack.c.bf16 %v930, %v929
        %v1217 = vpack.c.bf16 %v962, %v961
        %v1218 = vpack.c.bf16 %v994, %v993
        %v1219 = vpack.c.bf16 %v1027, %v1026
        %v1220 = vpack.c.bf16 %v1059, %v1058
        %v1221 = vpack.c.bf16 %v1091, %v1090
        %v1222 = vpack.c.bf16 %v836, %v835
        %v1223 = vpack.c.bf16 %v868, %v867
        %v1224 = vpack.c.bf16 %v900, %v899
        %v1225 = vpack.c.bf16 %v932, %v931
        %v1226 = vpack.c.bf16 %v964, %v963
        %v1227 = vpack.c.bf16 %v996, %v995
        %v1228 = vpack.c.bf16 %v1029, %v1028
        %v1229 = vpack.c.bf16 %v1061, %v1060
        %v1230 = vpack.c.bf16 %v1093, %v1092
        %v1231 = vpack.c.bf16 %v838, %v837
        %v1232 = vpack.c.bf16 %v870, %v869
        %v1233 = vpack.c.bf16 %v902, %v901
        %v1234 = vpack.c.bf16 %v934, %v933
        %v1235 = vpack.c.bf16 %v966, %v965
        %v1236 = vpack.c.bf16 %v998, %v997
        %v1237 = vpack.c.bf16 %v1031, %v1030
        %v1238 = vpack.c.bf16 %v1063, %v1062
        %v1239 = vpack.c.bf16 %v1095, %v1094
        %v1240 = vld [vmem:[#allocation8] sm:$0xf]
        %v1241 = vld [vmem:[#allocation8 + $0x4] sm:$0xf]
        %v1242 = vld [vmem:[#allocation8 + $0x8] sm:$0xf]
        %v1243 = vld [vmem:[#allocation8 + $0xc] sm:$0xf]
        %v1244 = vld [vmem:[#allocation8 + $0x10] sm:$0xf]
        %v1245 = vld [vmem:[#allocation8 + $0x14] sm:$0xf]
        %v1246 = vld [vmem:[#allocation8 + $0x18] sm:$0xf]
        %v1247 = vld [vmem:[#allocation8 + $0x1c] sm:$0xf]
        %v1248 = vld [vmem:[#allocation8 + $0x20] sm:$0xf]
        %v1249 = vld [vmem:[#allocation8 + $0x24] sm:$0xf]
        %v1250 = vld [vmem:[#allocation8 + $0x28] sm:$0xf]
        %v1251 = vld [vmem:[#allocation8 + $0x2c] sm:$0xf]
        %v1252 = vld [vmem:[#allocation8 + $0x30] sm:$0xf]
        %v1253 = vld [vmem:[#allocation8 + $0x34] sm:$0xf]
        %v1254 = vld [vmem:[#allocation8 + $0x38] sm:$0xf]
        %v1255 = vld [vmem:[#allocation8 + $0x3c] sm:$0xf]
        %v1256 = vld [vmem:[#allocation8 + $0x40] sm:$0xf]
        %v1257 = vld [vmem:[#allocation8 + $0x44] sm:$0xf]
        %v1258 = vld [vmem:[#allocation8 + $0x48] sm:$0xf]
        %v1259 = vld [vmem:[#allocation8 + $0x4c] sm:$0xf]
        %v1260 = vld [vmem:[#allocation8 + $0x50] sm:$0xf]
        %v1261 = vld [vmem:[#allocation8 + $0x54] sm:$0xf]
        %v1262 = vld [vmem:[#allocation8 + $0x58] sm:$0xf]
        %v1263 = vld [vmem:[#allocation8 + $0x5c] sm:$0xf]
        %v1264 = vld [vmem:[#allocation8 + $0x60] sm:$0xf]
        %v1265 = vld [vmem:[#allocation8 + $0x64] sm:$0xf]
        %v1266 = vld [vmem:[#allocation8 + $0x68] sm:$0xf]
        %v1267 = vld [vmem:[#allocation8 + $0x6c] sm:$0xf]
        %v1268 = vld [vmem:[#allocation8 + $0x70] sm:$0xf]
        %v1269 = vld [vmem:[#allocation8 + $0x74] sm:$0xf]
        %v1270 = vld [vmem:[#allocation8 + $0x78] sm:$0xf]
        %v1271 = vld [vmem:[#allocation8 + $0x7c] sm:$0xf]
        %v1272 = vld [vmem:[#allocation8 + $0x80] sm:$0xf]
        %v1273 = vld [vmem:[#allocation8 + $0x84] sm:$0xf]
        %v1274 = vld [vmem:[#allocation8 + $0x88] sm:$0xf]
        %v1275 = vld [vmem:[#allocation8 + $0x8c] sm:$0xf]
        %v1276 = vld [vmem:[#allocation8 + $0x90] sm:$0xf]
        %v1277 = vld [vmem:[#allocation8 + $0x94] sm:$0xf]
        %v1278 = vld [vmem:[#allocation8 + $0x98] sm:$0xf]
        %v1279 = vld [vmem:[#allocation8 + $0x9c] sm:$0xf]
        %v1280 = vld [vmem:[#allocation8 + $0xa0] sm:$0xf]
        %v1281 = vld [vmem:[#allocation8 + $0xa4] sm:$0xf]
        %v1282 = vld [vmem:[#allocation8 + $0xa8] sm:$0xf]
        %v1283 = vld [vmem:[#allocation8 + $0xac] sm:$0xf]
        %v1284 = vld [vmem:[#allocation8 + $0xb0] sm:$0xf]
        %v1285 = vld [vmem:[#allocation8 + $0xb4] sm:$0xf]
        %v1286 = vld [vmem:[#allocation8 + $0xb8] sm:$0xf]
        %v1287 = vld [vmem:[#allocation8 + $0xbc] sm:$0xf]
        %v1288 = vld [vmem:[#allocation8 + $0xc0] sm:$0xf]
        %v1289 = vld [vmem:[#allocation8 + $0xc4] sm:$0xf]
        %v1290 = vld [vmem:[#allocation8 + $0xc8] sm:$0xf]
        %v1291 = vld [vmem:[#allocation8 + $0xcc] sm:$0xf]
        %v1292 = vld [vmem:[#allocation8 + $0xd0] sm:$0xf]
        %v1293 = vld [vmem:[#allocation8 + $0xd4] sm:$0xf]
        %v1294 = vld [vmem:[#allocation8 + $0xd8] sm:$0xf]
        %v1295 = vld [vmem:[#allocation8 + $0xdc] sm:$0xf]
        %v1296 = vld [vmem:[#allocation8 + $0xe0] sm:$0xf]
        %v1297 = vld [vmem:[#allocation8 + $0xe4] sm:$0xf]
        %v1298 = vld [vmem:[#allocation8 + $0xe8] sm:$0xf]
        %v1299 = vld [vmem:[#allocation8 + $0xec] sm:$0xf]
        %v1300 = vld [vmem:[#allocation8 + $0xf0] sm:$0xf]
        %v1301 = vld [vmem:[#allocation8 + $0xf4] sm:$0xf]
        %v1302 = vld [vmem:[#allocation8 + $0xf8] sm:$0xf]
        %v1303 = vld [vmem:[#allocation8 + $0xfc] sm:$0xf]
        %v1304 = vld [vmem:[#allocation8 + $0x100] sm:$0xf]
        %v1305 = vld [vmem:[#allocation8 + $0x104] sm:$0xf]
        %v1306 = vld [vmem:[#allocation8 + $0x108] sm:$0xf]
        %v1307 = vld [vmem:[#allocation8 + $0x10c] sm:$0xf]
        %v1308 = vld [vmem:[#allocation8 + $0x110] sm:$0xf]
        %v1309 = vld [vmem:[#allocation8 + $0x114] sm:$0xf]
        %v1310 = vld [vmem:[#allocation8 + $0x118] sm:$0xf]
        %v1311 = vld [vmem:[#allocation8 + $0x11c] sm:$0xf]
        %v1312 = vld [vmem:[#allocation8 + $0x120] sm:$0xf]
        %v1313 = vld [vmem:[#allocation8 + $0x124] sm:$0xf]
        %v1314 = vld [vmem:[#allocation8 + $0x128] sm:$0xf]
        %v1315 = vld [vmem:[#allocation8 + $0x12c] sm:$0xf]
        %v1316 = vld [vmem:[#allocation8 + $0x130] sm:$0xf]
        %v1317 = vld [vmem:[#allocation8 + $0x134] sm:$0xf]
        %v1318 = vld [vmem:[#allocation8 + $0x138] sm:$0xf]
        %v1319 = vld [vmem:[#allocation8 + $0x13c] sm:$0xf]
        %v1320 = vld [vmem:[#allocation8 + $0x140] sm:$0xf]
        %v1321 = vld [vmem:[#allocation8 + $0x144] sm:$0xf]
        %v1322 = vld [vmem:[#allocation8 + $0x148] sm:$0xf]
        %v1323 = vld [vmem:[#allocation8 + $0x14c] sm:$0xf]
        %v1324 = vld [vmem:[#allocation8 + $0x150] sm:$0xf]
        %v1325 = vld [vmem:[#allocation8 + $0x154] sm:$0xf]
        %v1326 = vld [vmem:[#allocation8 + $0x158] sm:$0xf]
        %v1327 = vld [vmem:[#allocation8 + $0x15c] sm:$0xf]
        %v1328 = vld [vmem:[#allocation8 + $0x160] sm:$0xf]
        %v1329 = vld [vmem:[#allocation8 + $0x164] sm:$0xf]
        %v1330 = vld [vmem:[#allocation8 + $0x168] sm:$0xf]
        %v1331 = vld [vmem:[#allocation8 + $0x16c] sm:$0xf]
        %v1332 = vld [vmem:[#allocation8 + $0x170] sm:$0xf]
        %v1333 = vld [vmem:[#allocation8 + $0x174] sm:$0xf]
        %v1334 = vld [vmem:[#allocation8 + $0x178] sm:$0xf]
        %v1335 = vld [vmem:[#allocation8 + $0x17c] sm:$0xf]
        %v1336 = vld [vmem:[#allocation8 + $0x180] sm:$0xf]
        %v1337 = vld [vmem:[#allocation8 + $0x184] sm:$0xf]
        %v1338 = vld [vmem:[#allocation8 + $0x188] sm:$0xf]
        %v1339 = vld [vmem:[#allocation8 + $0x18c] sm:$0xf]
        %v1340 = vld [vmem:[#allocation8 + $0x190] sm:$0xf]
        %v1341 = vld [vmem:[#allocation8 + $0x194] sm:$0xf]
        %v1342 = vld [vmem:[#allocation8 + $0x198] sm:$0xf]
        %v1343 = vld [vmem:[#allocation8 + $0x19c] sm:$0xf]
        %v1344 = vld [vmem:[#allocation8 + $0x1a0] sm:$0xf]
        %v1345 = vld [vmem:[#allocation8 + $0x1a4] sm:$0xf]
        %v1346 = vld [vmem:[#allocation8 + $0x1a8] sm:$0xf]
        %v1347 = vld [vmem:[#allocation8 + $0x1ac] sm:$0xf]
        %v1348 = vld [vmem:[#allocation8 + $0x1b0] sm:$0xf]
        %v1349 = vld [vmem:[#allocation8 + $0x1b4] sm:$0xf]
        %v1350 = vld [vmem:[#allocation8 + $0x1b8] sm:$0xf]
        %v1351 = vld [vmem:[#allocation8 + $0x1bc] sm:$0xf]
        %v1352 = vld [vmem:[#allocation8 + $0x1c0] sm:$0xf]
        %v1353 = vld [vmem:[#allocation8 + $0x1c4] sm:$0xf]
        %v1354 = vld [vmem:[#allocation8 + $0x1c8] sm:$0xf]
        %v1355 = vld [vmem:[#allocation8 + $0x1cc] sm:$0xf]
        %v1356 = vld [vmem:[#allocation8 + $0x1d0] sm:$0xf]
        %v1357 = vld [vmem:[#allocation8 + $0x1d4] sm:$0xf]
        %v1358 = vld [vmem:[#allocation8 + $0x1d8] sm:$0xf]
        %v1359 = vld [vmem:[#allocation8 + $0x1dc] sm:$0xf]
        %v1360 = vld [vmem:[#allocation8 + $0x1e0] sm:$0xf]
        %v1361 = vld [vmem:[#allocation8 + $0x1e4] sm:$0xf]
        %v1362 = vld [vmem:[#allocation8 + $0x1e8] sm:$0xf]
        %v1363 = vld [vmem:[#allocation8 + $0x1ec] sm:$0xf]
        %v1364 = vld [vmem:[#allocation8 + $0x1f0] sm:$0xf]
        %v1365 = vld [vmem:[#allocation8 + $0x1f4] sm:$0xf]
        %v1366 = vld [vmem:[#allocation8 + $0x1f8] sm:$0xf]
        %v1367 = vld [vmem:[#allocation8 + $0x1fc] sm:$0xf]
        %v1368 = vld [vmem:[#allocation8 + $0x200] sm:$0xf]
        %v1369 = vld [vmem:[#allocation8 + $0x204] sm:$0xf]
        %v1370 = vld [vmem:[#allocation8 + $0x208] sm:$0xf]
        %v1371 = vld [vmem:[#allocation8 + $0x20c] sm:$0xf]
        %v1372 = vld [vmem:[#allocation8 + $0x210] sm:$0xf]
        %v1373 = vld [vmem:[#allocation8 + $0x214] sm:$0xf]
        %v1374 = vld [vmem:[#allocation8 + $0x218] sm:$0xf]
        %v1375 = vld [vmem:[#allocation8 + $0x21c] sm:$0xf]
        %v1376 = vld [vmem:[#allocation8 + $0x220] sm:$0xf]
        %v1377 = vld [vmem:[#allocation8 + $0x224] sm:$0xf]
        %v1378 = vld [vmem:[#allocation8 + $0x228] sm:$0xf]
        %v1379 = vld [vmem:[#allocation8 + $0x22c] sm:$0xf]
        %v1380 = vld [vmem:[#allocation8 + $0x230] sm:$0xf]
        %v1381 = vld [vmem:[#allocation8 + $0x234] sm:$0xf]
        %v1382 = vld [vmem:[#allocation8 + $0x238] sm:$0xf]
        %v1383 = vld [vmem:[#allocation8 + $0x23c] sm:$0xf]
        %v1385 = vlaneseq
        %v1386 = vshrl.u32 %v1385, 7
        %v1387 = vsub.s32 0, %v1386
        %v1388 = vrot.slane %v774, %v1387
        %v1534 = vunpack.c.l.b16 %v1240
        %v1535 = vunpack.c.l.b16 %v1241
        %v1536 = vunpack.c.l.b16 %v1242
        %v1537 = vunpack.c.l.b16 %v1243
        %v1538 = vunpack.c.l.b16 %v1244
        %v1539 = vunpack.c.l.b16 %v1245
        %v1540 = vunpack.c.l.b16 %v1246
        %v1541 = vunpack.c.l.b16 %v1247
        %v1542 = vunpack.c.l.b16 %v1248
        %v1543 = vunpack.c.l.b16 %v1249
        %v1544 = vunpack.c.l.b16 %v1250
        %v1545 = vunpack.c.l.b16 %v1251
        %v1546 = vunpack.c.l.b16 %v1252
        %v1547 = vunpack.c.l.b16 %v1253
        %v1548 = vunpack.c.l.b16 %v1254
        %v1549 = vunpack.c.l.b16 %v1255
        %v1550 = vunpack.c.l.b16 %v1256
        %v1551 = vunpack.c.l.b16 %v1257
        %v1552 = vunpack.c.l.b16 %v1258
        %v1553 = vunpack.c.l.b16 %v1259
        %v1554 = vunpack.c.l.b16 %v1260
        %v1555 = vunpack.c.l.b16 %v1261
        %v1556 = vunpack.c.l.b16 %v1262
        %v1557 = vunpack.c.l.b16 %v1263
        %v1558 = vunpack.c.l.b16 %v1264
        %v1559 = vunpack.c.l.b16 %v1265
        %v1560 = vunpack.c.l.b16 %v1266
        %v1561 = vunpack.c.l.b16 %v1267
        %v1562 = vunpack.c.l.b16 %v1268
        %v1563 = vunpack.c.l.b16 %v1269
        %v1564 = vunpack.c.l.b16 %v1270
        %v1565 = vunpack.c.l.b16 %v1271
        %v1566 = vunpack.c.l.b16 %v1272
        %v1567 = vunpack.c.l.b16 %v1273
        %v1568 = vunpack.c.l.b16 %v1274
        %v1569 = vunpack.c.l.b16 %v1275
        %v1570 = vunpack.c.l.b16 %v1276
        %v1571 = vunpack.c.l.b16 %v1277
        %v1572 = vunpack.c.l.b16 %v1278
        %v1573 = vunpack.c.l.b16 %v1279
        %v1574 = vunpack.c.l.b16 %v1280
        %v1575 = vunpack.c.l.b16 %v1281
        %v1576 = vunpack.c.l.b16 %v1282
        %v1577 = vunpack.c.l.b16 %v1283
        %v1578 = vunpack.c.l.b16 %v1284
        %v1579 = vunpack.c.l.b16 %v1285
        %v1580 = vunpack.c.l.b16 %v1286
        %v1581 = vunpack.c.l.b16 %v1287
        %v1582 = vunpack.c.l.b16 %v1288
        %v1583 = vunpack.c.l.b16 %v1289
        %v1584 = vunpack.c.l.b16 %v1290
        %v1585 = vunpack.c.l.b16 %v1291
        %v1586 = vunpack.c.l.b16 %v1292
        %v1587 = vunpack.c.l.b16 %v1293
        %v1588 = vunpack.c.l.b16 %v1294
        %v1589 = vunpack.c.l.b16 %v1295
        %v1590 = vunpack.c.l.b16 %v1296
        %v1591 = vunpack.c.l.b16 %v1297
        %v1592 = vunpack.c.l.b16 %v1298
        %v1593 = vunpack.c.l.b16 %v1299
        %v1594 = vunpack.c.l.b16 %v1300
        %v1595 = vunpack.c.l.b16 %v1301
        %v1596 = vunpack.c.l.b16 %v1302
        %v1597 = vunpack.c.l.b16 %v1303
        %v1598 = vunpack.c.l.b16 %v1304
        %v1599 = vunpack.c.l.b16 %v1305
        %v1600 = vunpack.c.l.b16 %v1306
        %v1601 = vunpack.c.l.b16 %v1307
        %v1602 = vunpack.c.l.b16 %v1308
        %v1603 = vunpack.c.l.b16 %v1309
        %v1604 = vunpack.c.l.b16 %v1310
        %v1605 = vunpack.c.l.b16 %v1311
        %v1606 = vunpack.c.l.b16 %v1312
        %v1607 = vunpack.c.l.b16 %v1313
        %v1608 = vunpack.c.l.b16 %v1314
        %v1609 = vunpack.c.l.b16 %v1315
        %v1610 = vunpack.c.l.b16 %v1316
        %v1611 = vunpack.c.l.b16 %v1317
        %v1612 = vunpack.c.l.b16 %v1318
        %v1613 = vunpack.c.l.b16 %v1319
        %v1614 = vunpack.c.l.b16 %v1320
        %v1615 = vunpack.c.l.b16 %v1321
        %v1616 = vunpack.c.l.b16 %v1322
        %v1617 = vunpack.c.l.b16 %v1323
        %v1618 = vunpack.c.l.b16 %v1324
        %v1619 = vunpack.c.l.b16 %v1325
        %v1620 = vunpack.c.l.b16 %v1326
        %v1621 = vunpack.c.l.b16 %v1327
        %v1622 = vunpack.c.l.b16 %v1328
        %v1623 = vunpack.c.l.b16 %v1329
        %v1624 = vunpack.c.l.b16 %v1330
        %v1625 = vunpack.c.l.b16 %v1331
        %v1626 = vunpack.c.l.b16 %v1332
        %v1627 = vunpack.c.l.b16 %v1333
        %v1628 = vunpack.c.l.b16 %v1334
        %v1629 = vunpack.c.l.b16 %v1335
        %v1630 = vunpack.c.l.b16 %v1336
        %v1631 = vunpack.c.l.b16 %v1337
        %v1632 = vunpack.c.l.b16 %v1338
        %v1633 = vunpack.c.l.b16 %v1339
        %v1634 = vunpack.c.l.b16 %v1340
        %v1635 = vunpack.c.l.b16 %v1341
        %v1636 = vunpack.c.l.b16 %v1342
        %v1637 = vunpack.c.l.b16 %v1343
        %v1638 = vunpack.c.l.b16 %v1344
        %v1639 = vunpack.c.l.b16 %v1345
        %v1640 = vunpack.c.l.b16 %v1346
        %v1641 = vunpack.c.l.b16 %v1347
        %v1642 = vunpack.c.l.b16 %v1348
        %v1643 = vunpack.c.l.b16 %v1349
        %v1644 = vunpack.c.l.b16 %v1350
        %v1645 = vunpack.c.l.b16 %v1351
        %v1646 = vunpack.c.l.b16 %v1352
        %v1647 = vunpack.c.l.b16 %v1353
        %v1648 = vunpack.c.l.b16 %v1354
        %v1649 = vunpack.c.l.b16 %v1355
        %v1650 = vunpack.c.l.b16 %v1356
        %v1651 = vunpack.c.l.b16 %v1357
        %v1652 = vunpack.c.l.b16 %v1358
        %v1653 = vunpack.c.l.b16 %v1359
        %v1654 = vunpack.c.l.b16 %v1360
        %v1655 = vunpack.c.l.b16 %v1361
        %v1656 = vunpack.c.l.b16 %v1362
        %v1657 = vunpack.c.l.b16 %v1363
        %v1658 = vunpack.c.l.b16 %v1364
        %v1659 = vunpack.c.l.b16 %v1365
        %v1660 = vunpack.c.l.b16 %v1366
        %v1661 = vunpack.c.l.b16 %v1367
        %v1662 = vunpack.c.l.b16 %v1368
        %v1663 = vunpack.c.l.b16 %v1369
        %v1664 = vunpack.c.l.b16 %v1370
        %v1665 = vunpack.c.l.b16 %v1371
        %v1666 = vunpack.c.l.b16 %v1372
        %v1667 = vunpack.c.l.b16 %v1373
        %v1668 = vunpack.c.l.b16 %v1374
        %v1669 = vunpack.c.l.b16 %v1375
        %v1670 = vunpack.c.l.b16 %v1376
        %v1671 = vunpack.c.l.b16 %v1377
        %v1672 = vunpack.c.l.b16 %v1378
        %v1673 = vunpack.c.l.b16 %v1379
        %v1674 = vunpack.c.l.b16 %v1380
        %v1675 = vunpack.c.l.b16 %v1381
        %v1676 = vunpack.c.l.b16 %v1382
        %v1677 = vunpack.c.l.b16 %v1383
        %v1678 = vpack.c.b16 %v1535, %v1534
        %v1679 = vpack.c.b16 %v1537, %v1536
        %v1680 = vpack.c.b16 %v1539, %v1538
        %v1681 = vpack.c.b16 %v1541, %v1540
        %v1682 = vpack.c.b16 %v1543, %v1542
        %v1683 = vpack.c.b16 %v1545, %v1544
        %v1684 = vpack.c.b16 %v1547, %v1546
        %v1685 = vpack.c.b16 %v1549, %v1548
        %v1686 = vpack.c.b16 %v1551, %v1550
        %v1687 = vpack.c.b16 %v1553, %v1552
        %v1688 = vpack.c.b16 %v1555, %v1554
        %v1689 = vpack.c.b16 %v1557, %v1556
        %v1690 = vpack.c.b16 %v1559, %v1558
        %v1691 = vpack.c.b16 %v1561, %v1560
        %v1692 = vpack.c.b16 %v1563, %v1562
        %v1693 = vpack.c.b16 %v1565, %v1564
        %v1694 = vpack.c.b16 %v1567, %v1566
        %v1695 = vpack.c.b16 %v1569, %v1568
        %v1696 = vpack.c.b16 %v1571, %v1570
        %v1697 = vpack.c.b16 %v1573, %v1572
        %v1698 = vpack.c.b16 %v1575, %v1574
        %v1699 = vpack.c.b16 %v1577, %v1576
        %v1700 = vpack.c.b16 %v1579, %v1578
        %v1701 = vpack.c.b16 %v1581, %v1580
        %v1702 = vpack.c.b16 %v1583, %v1582
        %v1703 = vpack.c.b16 %v1585, %v1584
        %v1704 = vpack.c.b16 %v1587, %v1586
        %v1705 = vpack.c.b16 %v1589, %v1588
        %v1706 = vpack.c.b16 %v1591, %v1590
        %v1707 = vpack.c.b16 %v1593, %v1592
        %v1708 = vpack.c.b16 %v1595, %v1594
        %v1709 = vpack.c.b16 %v1597, %v1596
        %v1710 = vpack.c.b16 %v1599, %v1598
        %v1711 = vpack.c.b16 %v1601, %v1600
        %v1712 = vpack.c.b16 %v1603, %v1602
        %v1713 = vpack.c.b16 %v1605, %v1604
        %v1714 = vpack.c.b16 %v1607, %v1606
        %v1715 = vpack.c.b16 %v1609, %v1608
        %v1716 = vpack.c.b16 %v1611, %v1610
        %v1717 = vpack.c.b16 %v1613, %v1612
        %v1718 = vpack.c.b16 %v1615, %v1614
        %v1719 = vpack.c.b16 %v1617, %v1616
        %v1720 = vpack.c.b16 %v1619, %v1618
        %v1721 = vpack.c.b16 %v1621, %v1620
        %v1722 = vpack.c.b16 %v1623, %v1622
        %v1723 = vpack.c.b16 %v1625, %v1624
        %v1724 = vpack.c.b16 %v1627, %v1626
        %v1725 = vpack.c.b16 %v1629, %v1628
        %v1726 = vpack.c.b16 %v1631, %v1630
        %v1727 = vpack.c.b16 %v1633, %v1632
        %v1728 = vpack.c.b16 %v1635, %v1634
        %v1729 = vpack.c.b16 %v1637, %v1636
        %v1730 = vpack.c.b16 %v1639, %v1638
        %v1731 = vpack.c.b16 %v1641, %v1640
        %v1732 = vpack.c.b16 %v1643, %v1642
        %v1733 = vpack.c.b16 %v1645, %v1644
        %v1734 = vpack.c.b16 %v1647, %v1646
        %v1735 = vpack.c.b16 %v1649, %v1648
        %v1736 = vpack.c.b16 %v1651, %v1650
        %v1737 = vpack.c.b16 %v1653, %v1652
        %v1738 = vpack.c.b16 %v1655, %v1654
        %v1739 = vpack.c.b16 %v1657, %v1656
        %v1740 = vpack.c.b16 %v1659, %v1658
        %v1741 = vpack.c.b16 %v1661, %v1660
        %v1742 = vpack.c.b16 %v1663, %v1662
        %v1743 = vpack.c.b16 %v1665, %v1664
        %v1744 = vpack.c.b16 %v1667, %v1666
        %v1745 = vpack.c.b16 %v1669, %v1668
        %v1746 = vpack.c.b16 %v1671, %v1670
        %v1747 = vpack.c.b16 %v1673, %v1672
        %v1748 = vpack.c.b16 %v1675, %v1674
        %v1749 = vpack.c.b16 %v1677, %v1676
        %1822 = vmatprep.subr.bf16.mxu0 0
        %1823 = vmatpush1.bf16.msra.mxu0 %v1678
        %1824 = vmatprep.subr.bf16.mxu0 0
        %1825 = vmatpush1.bf16.msra.mxu0 %v1679
        %1826 = vmatprep.subr.bf16.mxu0 0
        %1827 = vmatpush1.bf16.msra.mxu0 %v1680
        %1828 = vmatprep.subr.bf16.mxu0 0
        %1829 = vmatpush1.bf16.msra.mxu0 %v1681
        %1830 = vmatprep.subr.bf16.mxu0 0
        %1831 = vmatpush1.bf16.msra.mxu0 %v1682
        %1832 = vmatprep.subr.bf16.mxu0 0
        %1833 = vmatpush1.bf16.msra.mxu0 %v1683
        %1834 = vmatprep.subr.bf16.mxu0 0
        %1835 = vmatpush1.bf16.msra.mxu0 %v1684
        %1836 = vmatprep.subr.bf16.mxu0 0
        %1837 = vmatpush1.bf16.msra.mxu0 %v1685
        %1838 = vmatprep.subr.bf16.mxu0 0
        %1839 = vmatpush1.bf16.msra.mxu0 %v1686
        %1840 = vmatprep.subr.bf16.mxu0 0
        %1841 = vmatpush1.bf16.msra.mxu0 %v1687
        %1842 = vmatprep.subr.bf16.mxu0 0
        %1843 = vmatpush1.bf16.msra.mxu0 %v1688
        %1844 = vmatprep.subr.bf16.mxu0 0
        %1845 = vmatpush1.bf16.msra.mxu0 %v1689
        %1846 = vmatprep.subr.bf16.mxu0 0
        %1847 = vmatpush1.bf16.msra.mxu0 %v1690
        %1848 = vmatprep.subr.bf16.mxu0 0
        %1849 = vmatpush1.bf16.msra.mxu0 %v1691
        %1850 = vmatprep.subr.bf16.mxu0 0
        %1851 = vmatpush1.bf16.msra.mxu0 %v1692
        %1852 = vmatprep.subr.bf16.mxu0 0
        %1853 = vmatpush1.bf16.msra.mxu0 %v1693
        %1854 = vmatprep.mubr.bf16.mxu0 %v1097
        %1855 = vmatmul.mubr.bf16.gmra.mrb[0].mxu0 %v1096
        %v1856 = vpop.f32.mrb[0].mxu0
        %v1857 = vadd.f32 %v1388, %v1856
        %v1858 = vpop.f32.mrb[0].mxu0
        %v1859 = vpop.f32.mrb[0].mxu0
        %v1860 = vadd.f32 %v1388, %v1859
        %v1861 = vpop.f32.mrb[0].mxu0
        %1862 = vmatprep.mubr.bf16.mxu0 %v1106
        %1863 = vmatmul.mubr.bf16.gmra.mrb[0].mxu0 %v1105
        %v1864 = vpop.f32.mrb[0].mxu0
        %v1865 = vadd.f32 %v1388, %v1864
        %v1866 = vpop.f32.mrb[0].mxu0
        %v1867 = vpop.f32.mrb[0].mxu0
        %v1868 = vadd.f32 %v1388, %v1867
        %v1869 = vpop.f32.mrb[0].mxu0
        %1870 = vmatprep.mubr.bf16.mxu0 %v1115
        %1871 = vmatmul.mubr.bf16.gmra.mrb[0].mxu0 %v1114
        %v1872 = vpop.f32.mrb[0].mxu0
        %v1873 = vadd.f32 %v1388, %v1872
        %v1874 = vpop.f32.mrb[0].mxu0
        %v1875 = vpop.f32.mrb[0].mxu0
        %v1876 = vadd.f32 %v1388, %v1875
        %v1877 = vpop.f32.mrb[0].mxu0
        %1878 = vmatprep.mubr.bf16.mxu0 %v1124
        %1879 = vmatmul.mubr.bf16.gmra.mrb[0].mxu0 %v1123
        %v1880 = vpop.f32.mrb[0].mxu0
        %v1881 = vadd.f32 %v1388, %v1880
        %v1882 = vpop.f32.mrb[0].mxu0
        %v1883 = vpop.f32.mrb[0].mxu0
        %v1884 = vadd.f32 %v1388, %v1883
        %v1885 = vpop.f32.mrb[0].mxu0
        %1886 = vmatprep.mubr.bf16.mxu0 %v1133
        %1887 = vmatmul.mubr.bf16.gmra.mrb[0].mxu0 %v1132
        %v1888 = vpop.f32.mrb[0].mxu0
        %v1889 = vadd.f32 %v1388, %v1888
        %v1890 = vpop.f32.mrb[0].mxu0
        %v1891 = vpop.f32.mrb[0].mxu0
        %v1892 = vadd.f32 %v1388, %v1891
        %v1893 = vpop.f32.mrb[0].mxu0
        %1894 = vmatprep.mubr.bf16.mxu0 %v1142
        %1895 = vmatmul.mubr.bf16.gmra.mrb[0].mxu0 %v1141
        %v1896 = vpop.f32.mrb[0].mxu0
        %v1897 = vadd.f32 %v1388, %v1896
        %v1898 = vpop.f32.mrb[0].mxu0
        %v1899 = vpop.f32.mrb[0].mxu0
        %v1900 = vadd.f32 %v1388, %v1899
        %v1901 = vpop.f32.mrb[0].mxu0
        %1902 = vmatprep.mubr.bf16.mxu0 %v1151
        %1903 = vmatmul.mubr.bf16.gmra.mrb[0].mxu0 %v1150
        %v1904 = vpop.f32.mrb[0].mxu0
        %v1905 = vadd.f32 %v1388, %v1904
        %v1906 = vpop.f32.mrb[0].mxu0
        %v1907 = vpop.f32.mrb[0].mxu0
        %v1908 = vadd.f32 %v1388, %v1907
        %v1909 = vpop.f32.mrb[0].mxu0
        %1910 = vmatprep.mubr.bf16.mxu0 %v1160
        %1911 = vmatmul.mubr.bf16.gmra.mrb[0].mxu0 %v1159
        %v1912 = vpop.f32.mrb[0].mxu0
        %v1913 = vadd.f32 %v1388, %v1912
        %v1914 = vpop.f32.mrb[0].mxu0
        %v1915 = vpop.f32.mrb[0].mxu0
        %v1916 = vadd.f32 %v1388, %v1915
        %v1917 = vpop.f32.mrb[0].mxu0
        %1918 = vmatprep.mubr.bf16.mxu0 %v1169
        %1919 = vmatmul.mubr.bf16.gmra.mrb[0].mxu0 %v1168
        %v1920 = vpop.f32.mrb[0].mxu0
        %v1921 = vadd.f32 %v1388, %v1920
        %v1922 = vpop.f32.mrb[0].mxu0
        %v1923 = vpop.f32.mrb[0].mxu0
        %v1924 = vadd.f32 %v1388, %v1923
        %v1925 = vpop.f32.mrb[0].mxu0
        %1926 = vmatprep.mubr.bf16.mxu0 %v1178
        %1927 = vmatmul.mubr.bf16.gmra.mrb[0].mxu0 %v1177
        %v1928 = vpop.f32.mrb[0].mxu0
        %v1929 = vadd.f32 %v1388, %v1928
        %v1930 = vpop.f32.mrb[0].mxu0
        %v1931 = vpop.f32.mrb[0].mxu0
        %v1932 = vadd.f32 %v1388, %v1931
        %v1933 = vpop.f32.mrb[0].mxu0
        %1934 = vmatprep.mubr.bf16.mxu0 %v1187
        %1935 = vmatmul.mubr.bf16.gmra.mrb[0].mxu0 %v1186
        %v1936 = vpop.f32.mrb[0].mxu0
        %v1937 = vadd.f32 %v1388, %v1936
        %v1938 = vpop.f32.mrb[0].mxu0
        %v1939 = vpop.f32.mrb[0].mxu0
        %v1940 = vadd.f32 %v1388, %v1939
        %v1941 = vpop.f32.mrb[0].mxu0
        %1942 = vmatprep.mubr.bf16.mxu0 %v1196
        %1943 = vmatmul.mubr.bf16.gmra.mrb[0].mxu0 %v1195
        %v1944 = vpop.f32.mrb[0].mxu0
        %v1945 = vadd.f32 %v1388, %v1944
        %v1946 = vpop.f32.mrb[0].mxu0
        %v1947 = vpop.f32.mrb[0].mxu0
        %v1948 = vadd.f32 %v1388, %v1947
        %v1949 = vpop.f32.mrb[0].mxu0
        %1950 = vmatprep.mubr.bf16.mxu0 %v1205
        %1951 = vmatmul.mubr.bf16.gmra.mrb[0].mxu0 %v1204
        %v1952 = vpop.f32.mrb[0].mxu0
        %v1953 = vadd.f32 %v1388, %v1952
        %v1954 = vpop.f32.mrb[0].mxu0
        %v1955 = vpop.f32.mrb[0].mxu0
        %v1956 = vadd.f32 %v1388, %v1955
        %v1957 = vpop.f32.mrb[0].mxu0
        %1958 = vmatprep.mubr.bf16.mxu0 %v1214
        %1959 = vmatmul.mubr.bf16.gmra.mrb[0].mxu0 %v1213
        %v1960 = vpop.f32.mrb[0].mxu0
        %v1961 = vadd.f32 %v1388, %v1960
        %v1962 = vpop.f32.mrb[0].mxu0
        %v1963 = vpop.f32.mrb[0].mxu0
        %v1964 = vadd.f32 %v1388, %v1963
        %v1965 = vpop.f32.mrb[0].mxu0
        %1966 = vmatprep.mubr.bf16.mxu0 %v1223
        %1967 = vmatmul.mubr.bf16.gmra.mrb[0].mxu0 %v1222
        %v1968 = vpop.f32.mrb[0].mxu0
        %v1969 = vadd.f32 %v1388, %v1968
        %v1970 = vpop.f32.mrb[0].mxu0
        %v1971 = vpop.f32.mrb[0].mxu0
        %v1972 = vadd.f32 %v1388, %v1971
        %v1973 = vpop.f32.mrb[0].mxu0
        %1974 = vmatprep.mubr.bf16.mxu0 %v1232
        %1975 = vmatmul.mubr.bf16.gmra.mrb[0].mxu0 %v1231
        %v1976 = vpop.f32.mrb[0].mxu0
        %v1977 = vadd.f32 %v1388, %v1976
        %v1978 = vpop.f32.mrb[0].mxu0
        %v1979 = vpop.f32.mrb[0].mxu0
        %v1980 = vadd.f32 %v1388, %v1979
        %v1981 = vpop.f32.mrb[0].mxu0
        %1982 = vdwg.mxu0
        %1983 = vmatprep.subr.bf16.mxu0 0
        %1984 = vmatpush1.bf16.msra.mxu0 %v1694
        %1985 = vmatprep.subr.bf16.mxu0 0
        %1986 = vmatpush1.bf16.msra.mxu0 %v1695
        %1987 = vmatprep.subr.bf16.mxu0 0
        %1988 = vmatpush1.bf16.msra.mxu0 %v1696
        %1989 = vmatprep.subr.bf16.mxu0 0
        %1990 = vmatpush1.bf16.msra.mxu0 %v1697
        %1991 = vmatprep.subr.bf16.mxu0 0
        %1992 = vmatpush1.bf16.msra.mxu0 %v1698
        %1993 = vmatprep.subr.bf16.mxu0 0
        %1994 = vmatpush1.bf16.msra.mxu0 %v1699
        %1995 = vmatprep.subr.bf16.mxu0 0
        %1996 = vmatpush1.bf16.msra.mxu0 %v1700
        %1997 = vmatprep.subr.bf16.mxu0 0
        %1998 = vmatpush1.bf16.msra.mxu0 %v1701
        %1999 = vmatprep.subr.bf16.mxu0 0
        %2000 = vmatpush1.bf16.msra.mxu0 %v1702
        %2001 = vmatprep.subr.bf16.mxu0 0
        %2002 = vmatpush1.bf16.msra.mxu0 %v1703
        %2003 = vmatprep.subr.bf16.mxu0 0
        %2004 = vmatpush1.bf16.msra.mxu0 %v1704
        %2005 = vmatprep.subr.bf16.mxu0 0
        %2006 = vmatpush1.bf16.msra.mxu0 %v1705
        %2007 = vmatprep.subr.bf16.mxu0 0
        %2008 = vmatpush1.bf16.msra.mxu0 %v1706
        %2009 = vmatprep.subr.bf16.mxu0 0
        %2010 = vmatpush1.bf16.msra.mxu0 %v1707
        %2011 = vmatprep.subr.bf16.mxu0 0
        %2012 = vmatpush1.bf16.msra.mxu0 %v1708
        %2013 = vmatprep.subr.bf16.mxu0 0
        %2014 = vmatpush1.bf16.msra.mxu0 %v1709
        %2015 = vmatprep.mubr.bf16.mxu0 %v1099
        %2016 = vmatmul.mubr.bf16.gmra.mrb[0].mxu0 %v1098
        %v2017 = vpop.f32.mrb[0].mxu0
        %v2018 = vadd.f32 %v1857, %v2017
        %v2019 = vpop.f32.mrb[0].mxu0
        %v2020 = vpop.f32.mrb[0].mxu0
        %v2021 = vadd.f32 %v1860, %v2020
        %v2022 = vpop.f32.mrb[0].mxu0
        %2023 = vmatprep.mubr.bf16.mxu0 %v1108
        %2024 = vmatmul.mubr.bf16.gmra.mrb[0].mxu0 %v1107
        %v2025 = vpop.f32.mrb[0].mxu0
        %v2026 = vadd.f32 %v1865, %v2025
        %v2027 = vpop.f32.mrb[0].mxu0
        %v2028 = vpop.f32.mrb[0].mxu0
        %v2029 = vadd.f32 %v1868, %v2028
        %v2030 = vpop.f32.mrb[0].mxu0
        %2031 = vmatprep.mubr.bf16.mxu0 %v1117
        %2032 = vmatmul.mubr.bf16.gmra.mrb[0].mxu0 %v1116
        %v2033 = vpop.f32.mrb[0].mxu0
        %v2034 = vadd.f32 %v1873, %v2033
        %v2035 = vpop.f32.mrb[0].mxu0
        %v2036 = vpop.f32.mrb[0].mxu0
        %v2037 = vadd.f32 %v1876, %v2036
        %v2038 = vpop.f32.mrb[0].mxu0
        %2039 = vmatprep.mubr.bf16.mxu0 %v1126
        %2040 = vmatmul.mubr.bf16.gmra.mrb[0].mxu0 %v1125
        %v2041 = vpop.f32.mrb[0].mxu0
        %v2042 = vadd.f32 %v1881, %v2041
        %v2043 = vpop.f32.mrb[0].mxu0
        %v2044 = vpop.f32.mrb[0].mxu0
        %v2045 = vadd.f32 %v1884, %v2044
        %v2046 = vpop.f32.mrb[0].mxu0
        %2047 = vmatprep.mubr.bf16.mxu0 %v1135
        %2048 = vmatmul.mubr.bf16.gmra.mrb[0].mxu0 %v1134
        %v2049 = vpop.f32.mrb[0].mxu0
        %v2050 = vadd.f32 %v1889, %v2049
        %v2051 = vpop.f32.mrb[0].mxu0
        %v2052 = vpop.f32.mrb[0].mxu0
        %v2053 = vadd.f32 %v1892, %v2052
        %v2054 = vpop.f32.mrb[0].mxu0
        %2055 = vmatprep.mubr.bf16.mxu0 %v1144
        %2056 = vmatmul.mubr.bf16.gmra.mrb[0].mxu0 %v1143
        %v2057 = vpop.f32.mrb[0].mxu0
        %v2058 = vadd.f32 %v1897, %v2057
        %v2059 = vpop.f32.mrb[0].mxu0
        %v2060 = vpop.f32.mrb[0].mxu0
        %v2061 = vadd.f32 %v1900, %v2060
        %v2062 = vpop.f32.mrb[0].mxu0
        %2063 = vmatprep.mubr.bf16.mxu0 %v1153
        %2064 = vmatmul.mubr.bf16.gmra.mrb[0].mxu0 %v1152
        %v2065 = vpop.f32.mrb[0].mxu0
        %v2066 = vadd.f32 %v1905, %v2065
        %v2067 = vpop.f32.mrb[0].mxu0
        %v2068 = vpop.f32.mrb[0].mxu0
        %v2069 = vadd.f32 %v1908, %v2068
        %v2070 = vpop.f32.mrb[0].mxu0
        %2071 = vmatprep.mubr.bf16.mxu0 %v1162
        %2072 = vmatmul.mubr.bf16.gmra.mrb[0].mxu0 %v1161
        %v2073 = vpop.f32.mrb[0].mxu0
        %v2074 = vadd.f32 %v1913, %v2073
        %v2075 = vpop.f32.mrb[0].mxu0
        %v2076 = vpop.f32.mrb[0].mxu0
        %v2077 = vadd.f32 %v1916, %v2076
        %v2078 = vpop.f32.mrb[0].mxu0
        %2079 = vmatprep.mubr.bf16.mxu0 %v1171
        %2080 = vmatmul.mubr.bf16.gmra.mrb[0].mxu0 %v1170
        %v2081 = vpop.f32.mrb[0].mxu0
        %v2082 = vadd.f32 %v1921, %v2081
        %v2083 = vpop.f32.mrb[0].mxu0
        %v2084 = vpop.f32.mrb[0].mxu0
        %v2085 = vadd.f32 %v1924, %v2084
        %v2086 = vpop.f32.mrb[0].mxu0
        %2087 = vmatprep.mubr.bf16.mxu0 %v1180
        %2088 = vmatmul.mubr.bf16.gmra.mrb[0].mxu0 %v1179
        %v2089 = vpop.f32.mrb[0].mxu0
        %v2090 = vadd.f32 %v1929, %v2089
        %v2091 = vpop.f32.mrb[0].mxu0
        %v2092 = vpop.f32.mrb[0].mxu0
        %v2093 = vadd.f32 %v1932, %v2092
        %v2094 = vpop.f32.mrb[0].mxu0
        %2095 = vmatprep.mubr.bf16.mxu0 %v1189
        %2096 = vmatmul.mubr.bf16.gmra.mrb[0].mxu0 %v1188
        %v2097 = vpop.f32.mrb[0].mxu0
        %v2098 = vadd.f32 %v1937, %v2097
        %v2099 = vpop.f32.mrb[0].mxu0
        %v2100 = vpop.f32.mrb[0].mxu0
        %v2101 = vadd.f32 %v1940, %v2100
        %v2102 = vpop.f32.mrb[0].mxu0
        %2103 = vmatprep.mubr.bf16.mxu0 %v1198
        %2104 = vmatmul.mubr.bf16.gmra.mrb[0].mxu0 %v1197
        %v2105 = vpop.f32.mrb[0].mxu0
        %v2106 = vadd.f32 %v1945, %v2105
        %v2107 = vpop.f32.mrb[0].mxu0
        %v2108 = vpop.f32.mrb[0].mxu0
        %v2109 = vadd.f32 %v1948, %v2108
        %v2110 = vpop.f32.mrb[0].mxu0
        %2111 = vmatprep.mubr.bf16.mxu0 %v1207
        %2112 = vmatmul.mubr.bf16.gmra.mrb[0].mxu0 %v1206
        %v2113 = vpop.f32.mrb[0].mxu0
        %v2114 = vadd.f32 %v1953, %v2113
        %v2115 = vpop.f32.mrb[0].mxu0
        %v2116 = vpop.f32.mrb[0].mxu0
        %v2117 = vadd.f32 %v1956, %v2116
        %v2118 = vpop.f32.mrb[0].mxu0
        %2119 = vmatprep.mubr.bf16.mxu0 %v1216
        %2120 = vmatmul.mubr.bf16.gmra.mrb[0].mxu0 %v1215
        %v2121 = vpop.f32.mrb[0].mxu0
        %v2122 = vadd.f32 %v1961, %v2121
        %v2123 = vpop.f32.mrb[0].mxu0
        %v2124 = vpop.f32.mrb[0].mxu0
        %v2125 = vadd.f32 %v1964, %v2124
        %v2126 = vpop.f32.mrb[0].mxu0
        %2127 = vmatprep.mubr.bf16.mxu0 %v1225
        %2128 = vmatmul.mubr.bf16.gmra.mrb[0].mxu0 %v1224
        %v2129 = vpop.f32.mrb[0].mxu0
        %v2130 = vadd.f32 %v1969, %v2129
        %v2131 = vpop.f32.mrb[0].mxu0
        %v2132 = vpop.f32.mrb[0].mxu0
        %v2133 = vadd.f32 %v1972, %v2132
        %v2134 = vpop.f32.mrb[0].mxu0
        %2135 = vmatprep.mubr.bf16.mxu0 %v1234
        %2136 = vmatmul.mubr.bf16.gmra.mrb[0].mxu0 %v1233
        %v2137 = vpop.f32.mrb[0].mxu0
        %v2138 = vadd.f32 %v1977, %v2137
        %v2139 = vpop.f32.mrb[0].mxu0
        %v2140 = vpop.f32.mrb[0].mxu0
        %v2141 = vadd.f32 %v1980, %v2140
        %v2142 = vpop.f32.mrb[0].mxu0
        %2143 = vdwg.mxu0
        %2144 = vmatprep.subr.bf16.mxu0 0
        %2145 = vmatpush1.bf16.msra.mxu0 %v1710
        %2146 = vmatprep.subr.bf16.mxu0 0
        %2147 = vmatpush1.bf16.msra.mxu0 %v1711
        %2148 = vmatprep.subr.bf16.mxu0 0
        %2149 = vmatpush1.bf16.msra.mxu0 %v1712
        %2150 = vmatprep.subr.bf16.mxu0 0
        %2151 = vmatpush1.bf16.msra.mxu0 %v1713
        %2152 = vmatprep.subr.bf16.mxu0 0
        %2153 = vmatpush1.bf16.msra.mxu0 %v1714
        %2154 = vmatprep.subr.bf16.mxu0 0
        %2155 = vmatpush1.bf16.msra.mxu0 %v1715
        %2156 = vmatprep.subr.bf16.mxu0 0
        %2157 = vmatpush1.bf16.msra.mxu0 %v1716
        %2158 = vmatprep.subr.bf16.mxu0 0
        %2159 = vmatpush1.bf16.msra.mxu0 %v1717
        %2160 = vmatprep.subr.bf16.mxu0 0
        %2161 = vmatpush1.bf16.msra.mxu0 %v1718
        %2162 = vmatprep.subr.bf16.mxu0 0
        %2163 = vmatpush1.bf16.msra.mxu0 %v1719
        %2164 = vmatprep.subr.bf16.mxu0 0
        %2165 = vmatpush1.bf16.msra.mxu0 %v1720
        %2166 = vmatprep.subr.bf16.mxu0 0
        %2167 = vmatpush1.bf16.msra.mxu0 %v1721
        %2168 = vmatprep.subr.bf16.mxu0 0
        %2169 = vmatpush1.bf16.msra.mxu0 %v1722
        %2170 = vmatprep.subr.bf16.mxu0 0
        %2171 = vmatpush1.bf16.msra.mxu0 %v1723
        %2172 = vmatprep.subr.bf16.mxu0 0
        %2173 = vmatpush1.bf16.msra.mxu0 %v1724
        %2174 = vmatprep.subr.bf16.mxu0 0
        %2175 = vmatpush1.bf16.msra.mxu0 %v1725
        %2176 = vmatprep.mubr.bf16.mxu0 %v1101
        %2177 = vmatmul.mubr.bf16.gmra.mrb[0].mxu0 %v1100
        %v2178 = vpop.f32.mrb[0].mxu0
        %v2179 = vadd.f32 %v2018, %v2178
        %v2180 = vpop.f32.mrb[0].mxu0
        %v2181 = vpop.f32.mrb[0].mxu0
        %v2182 = vadd.f32 %v2021, %v2181
        %v2183 = vpop.f32.mrb[0].mxu0
        %2184 = vmatprep.mubr.bf16.mxu0 %v1110
        %2185 = vmatmul.mubr.bf16.gmra.mrb[0].mxu0 %v1109
        %v2186 = vpop.f32.mrb[0].mxu0
        %v2187 = vadd.f32 %v2026, %v2186
        %v2188 = vpop.f32.mrb[0].mxu0
        %v2189 = vpop.f32.mrb[0].mxu0
        %v2190 = vadd.f32 %v2029, %v2189
        %v2191 = vpop.f32.mrb[0].mxu0
        %2192 = vmatprep.mubr.bf16.mxu0 %v1119
        %2193 = vmatmul.mubr.bf16.gmra.mrb[0].mxu0 %v1118
        %v2194 = vpop.f32.mrb[0].mxu0
        %v2195 = vadd.f32 %v2034, %v2194
        %v2196 = vpop.f32.mrb[0].mxu0
        %v2197 = vpop.f32.mrb[0].mxu0
        %v2198 = vadd.f32 %v2037, %v2197
        %v2199 = vpop.f32.mrb[0].mxu0
        %2200 = vmatprep.mubr.bf16.mxu0 %v1128
        %2201 = vmatmul.mubr.bf16.gmra.mrb[0].mxu0 %v1127
        %v2202 = vpop.f32.mrb[0].mxu0
        %v2203 = vadd.f32 %v2042, %v2202
        %v2204 = vpop.f32.mrb[0].mxu0
        %v2205 = vpop.f32.mrb[0].mxu0
        %v2206 = vadd.f32 %v2045, %v2205
        %v2207 = vpop.f32.mrb[0].mxu0
        %2208 = vmatprep.mubr.bf16.mxu0 %v1137
        %2209 = vmatmul.mubr.bf16.gmra.mrb[0].mxu0 %v1136
        %v2210 = vpop.f32.mrb[0].mxu0
        %v2211 = vadd.f32 %v2050, %v2210
        %v2212 = vpop.f32.mrb[0].mxu0
        %v2213 = vpop.f32.mrb[0].mxu0
        %v2214 = vadd.f32 %v2053, %v2213
        %v2215 = vpop.f32.mrb[0].mxu0
        %2216 = vmatprep.mubr.bf16.mxu0 %v1146
        %2217 = vmatmul.mubr.bf16.gmra.mrb[0].mxu0 %v1145
        %v2218 = vpop.f32.mrb[0].mxu0
        %v2219 = vadd.f32 %v2058, %v2218
        %v2220 = vpop.f32.mrb[0].mxu0
        %v2221 = vpop.f32.mrb[0].mxu0
        %v2222 = vadd.f32 %v2061, %v2221
        %v2223 = vpop.f32.mrb[0].mxu0
        %2224 = vmatprep.mubr.bf16.mxu0 %v1155
        %2225 = vmatmul.mubr.bf16.gmra.mrb[0].mxu0 %v1154
        %v2226 = vpop.f32.mrb[0].mxu0
        %v2227 = vadd.f32 %v2066, %v2226
        %v2228 = vpop.f32.mrb[0].mxu0
        %v2229 = vpop.f32.mrb[0].mxu0
        %v2230 = vadd.f32 %v2069, %v2229
        %v2231 = vpop.f32.mrb[0].mxu0
        %2232 = vmatprep.mubr.bf16.mxu0 %v1164
        %2233 = vmatmul.mubr.bf16.gmra.mrb[0].mxu0 %v1163
        %v2234 = vpop.f32.mrb[0].mxu0
        %v2235 = vadd.f32 %v2074, %v2234
        %v2236 = vpop.f32.mrb[0].mxu0
        %v2237 = vpop.f32.mrb[0].mxu0
        %v2238 = vadd.f32 %v2077, %v2237
        %v2239 = vpop.f32.mrb[0].mxu0
        %2240 = vmatprep.mubr.bf16.mxu0 %v1173
        %2241 = vmatmul.mubr.bf16.gmra.mrb[0].mxu0 %v1172
        %v2242 = vpop.f32.mrb[0].mxu0
        %v2243 = vadd.f32 %v2082, %v2242
        %v2244 = vpop.f32.mrb[0].mxu0
        %v2245 = vpop.f32.mrb[0].mxu0
        %v2246 = vadd.f32 %v2085, %v2245
        %v2247 = vpop.f32.mrb[0].mxu0
        %2248 = vmatprep.mubr.bf16.mxu0 %v1182
        %2249 = vmatmul.mubr.bf16.gmra.mrb[0].mxu0 %v1181
        %v2250 = vpop.f32.mrb[0].mxu0
        %v2251 = vadd.f32 %v2090, %v2250
        %v2252 = vpop.f32.mrb[0].mxu0
        %v2253 = vpop.f32.mrb[0].mxu0
        %v2254 = vadd.f32 %v2093, %v2253
        %v2255 = vpop.f32.mrb[0].mxu0
        %2256 = vmatprep.mubr.bf16.mxu0 %v1191
        %2257 = vmatmul.mubr.bf16.gmra.mrb[0].mxu0 %v1190
        %v2258 = vpop.f32.mrb[0].mxu0
        %v2259 = vadd.f32 %v2098, %v2258
        %v2260 = vpop.f32.mrb[0].mxu0
        %v2261 = vpop.f32.mrb[0].mxu0
        %v2262 = vadd.f32 %v2101, %v2261
        %v2263 = vpop.f32.mrb[0].mxu0
        %2264 = vmatprep.mubr.bf16.mxu0 %v1200
        %2265 = vmatmul.mubr.bf16.gmra.mrb[0].mxu0 %v1199
        %v2266 = vpop.f32.mrb[0].mxu0
        %v2267 = vadd.f32 %v2106, %v2266
        %v2268 = vpop.f32.mrb[0].mxu0
        %v2269 = vpop.f32.mrb[0].mxu0
        %v2270 = vadd.f32 %v2109, %v2269
        %v2271 = vpop.f32.mrb[0].mxu0
        %2272 = vmatprep.mubr.bf16.mxu0 %v1209
        %2273 = vmatmul.mubr.bf16.gmra.mrb[0].mxu0 %v1208
        %v2274 = vpop.f32.mrb[0].mxu0
        %v2275 = vadd.f32 %v2114, %v2274
        %v2276 = vpop.f32.mrb[0].mxu0
        %v2277 = vpop.f32.mrb[0].mxu0
        %v2278 = vadd.f32 %v2117, %v2277
        %v2279 = vpop.f32.mrb[0].mxu0
        %2280 = vmatprep.mubr.bf16.mxu0 %v1218
        %2281 = vmatmul.mubr.bf16.gmra.mrb[0].mxu0 %v1217
        %v2282 = vpop.f32.mrb[0].mxu0
        %v2283 = vadd.f32 %v2122, %v2282
        %v2284 = vpop.f32.mrb[0].mxu0
        %v2285 = vpop.f32.mrb[0].mxu0
        %v2286 = vadd.f32 %v2125, %v2285
        %v2287 = vpop.f32.mrb[0].mxu0
        %2288 = vmatprep.mubr.bf16.mxu0 %v1227
        %2289 = vmatmul.mubr.bf16.gmra.mrb[0].mxu0 %v1226
        %v2290 = vpop.f32.mrb[0].mxu0
        %v2291 = vadd.f32 %v2130, %v2290
        %v2292 = vpop.f32.mrb[0].mxu0
        %v2293 = vpop.f32.mrb[0].mxu0
        %v2294 = vadd.f32 %v2133, %v2293
        %v2295 = vpop.f32.mrb[0].mxu0
        %2296 = vmatprep.mubr.bf16.mxu0 %v1236
        %2297 = vmatmul.mubr.bf16.gmra.mrb[0].mxu0 %v1235
        %v2298 = vpop.f32.mrb[0].mxu0
        %v2299 = vadd.f32 %v2138, %v2298
        %v2300 = vpop.f32.mrb[0].mxu0
        %v2301 = vpop.f32.mrb[0].mxu0
        %v2302 = vadd.f32 %v2141, %v2301
        %v2303 = vpop.f32.mrb[0].mxu0
        %2304 = vdwg.mxu0
        %2305 = vmatprep.subr.bf16.mxu0 0
        %2306 = vmatpush1.bf16.msra.mxu0 %v1726
        %2307 = vmatprep.subr.bf16.mxu0 0
        %2308 = vmatpush1.bf16.msra.mxu0 %v1727
        %2309 = vmatprep.subr.bf16.mxu0 0
        %2310 = vmatpush1.bf16.msra.mxu0 %v1728
        %2311 = vmatprep.subr.bf16.mxu0 0
        %2312 = vmatpush1.bf16.msra.mxu0 %v1729
        %2313 = vmatprep.subr.bf16.mxu0 0
        %2314 = vmatpush1.bf16.msra.mxu0 %v1730
        %2315 = vmatprep.subr.bf16.mxu0 0
        %2316 = vmatpush1.bf16.msra.mxu0 %v1731
        %2317 = vmatprep.subr.bf16.mxu0 0
        %2318 = vmatpush1.bf16.msra.mxu0 %v1732
        %2319 = vmatprep.subr.bf16.mxu0 0
        %2320 = vmatpush1.bf16.msra.mxu0 %v1733
        %2321 = vmatprep.subr.bf16.mxu0 0
        %2322 = vmatpush1.bf16.msra.mxu0 %v1734
        %2323 = vmatprep.subr.bf16.mxu0 0
        %2324 = vmatpush1.bf16.msra.mxu0 %v1735
        %2325 = vmatprep.subr.bf16.mxu0 0
        %2326 = vmatpush1.bf16.msra.mxu0 %v1736
        %2327 = vmatprep.subr.bf16.mxu0 0
        %2328 = vmatpush1.bf16.msra.mxu0 %v1737
        %2329 = vmatprep.subr.bf16.mxu0 0
        %2330 = vmatpush1.bf16.msra.mxu0 %v1738
        %2331 = vmatprep.subr.bf16.mxu0 0
        %2332 = vmatpush1.bf16.msra.mxu0 %v1739
        %2333 = vmatprep.subr.bf16.mxu0 0
        %2334 = vmatpush1.bf16.msra.mxu0 %v1740
        %2335 = vmatprep.subr.bf16.mxu0 0
        %2336 = vmatpush1.bf16.msra.mxu0 %v1741
        %2337 = vmatprep.mubr.bf16.mxu0 %v1103
        %2338 = vmatmul.mubr.bf16.gmra.mrb[0].mxu0 %v1102
        %v2339 = vpop.f32.mrb[0].mxu0
        %v2340 = vadd.f32 %v2179, %v2339
        %v2341 = vpop.f32.mrb[0].mxu0
        %v2342 = vpop.f32.mrb[0].mxu0
        %v2343 = vadd.f32 %v2182, %v2342
        %v2344 = vpop.f32.mrb[0].mxu0
        %2345 = vmatprep.mubr.bf16.mxu0 %v1112
        %2346 = vmatmul.mubr.bf16.gmra.mrb[0].mxu0 %v1111
        %v2347 = vpop.f32.mrb[0].mxu0
        %v2348 = vadd.f32 %v2187, %v2347
        %v2349 = vpop.f32.mrb[0].mxu0
        %v2350 = vpop.f32.mrb[0].mxu0
        %v2351 = vadd.f32 %v2190, %v2350
        %v2352 = vpop.f32.mrb[0].mxu0
        %2353 = vmatprep.mubr.bf16.mxu0 %v1121
        %2354 = vmatmul.mubr.bf16.gmra.mrb[0].mxu0 %v1120
        %v2355 = vpop.f32.mrb[0].mxu0
        %v2356 = vadd.f32 %v2195, %v2355
        %v2357 = vpop.f32.mrb[0].mxu0
        %v2358 = vpop.f32.mrb[0].mxu0
        %v2359 = vadd.f32 %v2198, %v2358
        %v2360 = vpop.f32.mrb[0].mxu0
        %2361 = vmatprep.mubr.bf16.mxu0 %v1130
        %2362 = vmatmul.mubr.bf16.gmra.mrb[0].mxu0 %v1129
        %v2363 = vpop.f32.mrb[0].mxu0
        %v2364 = vadd.f32 %v2203, %v2363
        %v2365 = vpop.f32.mrb[0].mxu0
        %v2366 = vpop.f32.mrb[0].mxu0
        %v2367 = vadd.f32 %v2206, %v2366
        %v2368 = vpop.f32.mrb[0].mxu0
        %2369 = vmatprep.mubr.bf16.mxu0 %v1139
        %2370 = vmatmul.mubr.bf16.gmra.mrb[0].mxu0 %v1138
        %v2371 = vpop.f32.mrb[0].mxu0
        %v2372 = vadd.f32 %v2211, %v2371
        %v2373 = vpop.f32.mrb[0].mxu0
        %v2374 = vpop.f32.mrb[0].mxu0
        %v2375 = vadd.f32 %v2214, %v2374
        %v2376 = vpop.f32.mrb[0].mxu0
        %2377 = vmatprep.mubr.bf16.mxu0 %v1148
        %2378 = vmatmul.mubr.bf16.gmra.mrb[0].mxu0 %v1147
        %v2379 = vpop.f32.mrb[0].mxu0
        %v2380 = vadd.f32 %v2219, %v2379
        %v2381 = vpop.f32.mrb[0].mxu0
        %v2382 = vpop.f32.mrb[0].mxu0
        %v2383 = vadd.f32 %v2222, %v2382
        %v2384 = vpop.f32.mrb[0].mxu0
        %2385 = vmatprep.mubr.bf16.mxu0 %v1157
        %2386 = vmatmul.mubr.bf16.gmra.mrb[0].mxu0 %v1156
        %v2387 = vpop.f32.mrb[0].mxu0
        %v2388 = vadd.f32 %v2227, %v2387
        %v2389 = vpop.f32.mrb[0].mxu0
        %v2390 = vpop.f32.mrb[0].mxu0
        %v2391 = vadd.f32 %v2230, %v2390
        %v2392 = vpop.f32.mrb[0].mxu0
        %2393 = vmatprep.mubr.bf16.mxu0 %v1166
        %2394 = vmatmul.mubr.bf16.gmra.mrb[0].mxu0 %v1165
        %v2395 = vpop.f32.mrb[0].mxu0
        %v2396 = vadd.f32 %v2235, %v2395
        %v2397 = vpop.f32.mrb[0].mxu0
        %v2398 = vpop.f32.mrb[0].mxu0
        %v2399 = vadd.f32 %v2238, %v2398
        %v2400 = vpop.f32.mrb[0].mxu0
        %2401 = vmatprep.mubr.bf16.mxu0 %v1175
        %2402 = vmatmul.mubr.bf16.gmra.mrb[0].mxu0 %v1174
        %v2403 = vpop.f32.mrb[0].mxu0
        %v2404 = vadd.f32 %v2243, %v2403
        %v2405 = vpop.f32.mrb[0].mxu0
        %v2406 = vpop.f32.mrb[0].mxu0
        %v2407 = vadd.f32 %v2246, %v2406
        %v2408 = vpop.f32.mrb[0].mxu0
        %2409 = vmatprep.mubr.bf16.mxu0 %v1184
        %2410 = vmatmul.mubr.bf16.gmra.mrb[0].mxu0 %v1183
        %v2411 = vpop.f32.mrb[0].mxu0
        %v2412 = vadd.f32 %v2251, %v2411
        %v2413 = vpop.f32.mrb[0].mxu0
        %v2414 = vpop.f32.mrb[0].mxu0
        %v2415 = vadd.f32 %v2254, %v2414
        %v2416 = vpop.f32.mrb[0].mxu0
        %2417 = vmatprep.mubr.bf16.mxu0 %v1193
        %2418 = vmatmul.mubr.bf16.gmra.mrb[0].mxu0 %v1192
        %v2419 = vpop.f32.mrb[0].mxu0
        %v2420 = vadd.f32 %v2259, %v2419
        %v2421 = vpop.f32.mrb[0].mxu0
        %v2422 = vpop.f32.mrb[0].mxu0
        %v2423 = vadd.f32 %v2262, %v2422
        %v2424 = vpop.f32.mrb[0].mxu0
        %2425 = vmatprep.mubr.bf16.mxu0 %v1202
        %2426 = vmatmul.mubr.bf16.gmra.mrb[0].mxu0 %v1201
        %v2427 = vpop.f32.mrb[0].mxu0
        %v2428 = vadd.f32 %v2267, %v2427
        %v2429 = vpop.f32.mrb[0].mxu0
        %v2430 = vpop.f32.mrb[0].mxu0
        %v2431 = vadd.f32 %v2270, %v2430
        %v2432 = vpop.f32.mrb[0].mxu0
        %2433 = vmatprep.mubr.bf16.mxu0 %v1211
        %2434 = vmatmul.mubr.bf16.gmra.mrb[0].mxu0 %v1210
        %v2435 = vpop.f32.mrb[0].mxu0
        %v2436 = vadd.f32 %v2275, %v2435
        %v2437 = vpop.f32.mrb[0].mxu0
        %v2438 = vpop.f32.mrb[0].mxu0
        %v2439 = vadd.f32 %v2278, %v2438
        %v2440 = vpop.f32.mrb[0].mxu0
        %2441 = vmatprep.mubr.bf16.mxu0 %v1220
        %2442 = vmatmul.mubr.bf16.gmra.mrb[0].mxu0 %v1219
        %v2443 = vpop.f32.mrb[0].mxu0
        %v2444 = vadd.f32 %v2283, %v2443
        %v2445 = vpop.f32.mrb[0].mxu0
        %v2446 = vpop.f32.mrb[0].mxu0
        %v2447 = vadd.f32 %v2286, %v2446
        %v2448 = vpop.f32.mrb[0].mxu0
        %2449 = vmatprep.mubr.bf16.mxu0 %v1229
        %2450 = vmatmul.mubr.bf16.gmra.mrb[0].mxu0 %v1228
        %v2451 = vpop.f32.mrb[0].mxu0
        %v2452 = vadd.f32 %v2291, %v2451
        %v2453 = vpop.f32.mrb[0].mxu0
        %v2454 = vpop.f32.mrb[0].mxu0
        %v2455 = vadd.f32 %v2294, %v2454
        %v2456 = vpop.f32.mrb[0].mxu0
        %2457 = vmatprep.mubr.bf16.mxu0 %v1238
        %2458 = vmatmul.mubr.bf16.gmra.mrb[0].mxu0 %v1237
        %v2459 = vpop.f32.mrb[0].mxu0
        %v2460 = vadd.f32 %v2299, %v2459
        %v2461 = vpop.f32.mrb[0].mxu0
        %v2462 = vpop.f32.mrb[0].mxu0
        %v2463 = vadd.f32 %v2302, %v2462
        %v2464 = vpop.f32.mrb[0].mxu0
        %2465 = vdwg.mxu0
        %2466 = vmatprep.subr.bf16.mxu0 0
        %2467 = vmatpush1.bf16.msra.mxu0 %v1742
        %2468 = vmatprep.subr.bf16.mxu0 0
        %2469 = vmatpush1.bf16.msra.mxu0 %v1743
        %2470 = vmatprep.subr.bf16.mxu0 0
        %2471 = vmatpush1.bf16.msra.mxu0 %v1744
        %2472 = vmatprep.subr.bf16.mxu0 0
        %2473 = vmatpush1.bf16.msra.mxu0 %v1745
        %2474 = vmatprep.subr.bf16.mxu0 0
        %2475 = vmatpush1.bf16.msra.mxu0 %v1746
        %2476 = vmatprep.subr.bf16.mxu0 0
        %2477 = vmatpush1.bf16.msra.mxu0 %v1747
        %2478 = vmatprep.subr.bf16.mxu0 0
        %2479 = vmatpush1.bf16.msra.mxu0 %v1748
        %2480 = vmatprep.subr.bf16.mxu0 0
        %2481 = vmatpush1.bf16.msra.mxu0 %v1749
        %2482 = vmatprep.subr.bf16.mxu0 0
        %2483 = vmatpush1.bf16.msra.mxu0 0
        %2484 = vmatprep.subr.bf16.mxu0 0
        %2485 = vmatpush1.bf16.msra.mxu0 0
        %2486 = vmatprep.subr.bf16.mxu0 0
        %2487 = vmatpush1.bf16.msra.mxu0 0
        %2488 = vmatprep.subr.bf16.mxu0 0
        %2489 = vmatpush1.bf16.msra.mxu0 0
        %2490 = vmatprep.subr.bf16.mxu0 0
        %2491 = vmatpush1.bf16.msra.mxu0 0
        %2492 = vmatprep.subr.bf16.mxu0 0
        %2493 = vmatpush1.bf16.msra.mxu0 0
        %2494 = vmatprep.subr.bf16.mxu0 0
        %2495 = vmatpush1.bf16.msra.mxu0 0
        %2496 = vmatprep.subr.bf16.mxu0 0
        %2497 = vmatpush1.bf16.msra.mxu0 0
        %2498 = vmatprep.mubr.bf16.mxu0 0
        %2499 = vmatmul.mubr.bf16.gmra.mrb[0].mxu0 %v1104
        %v2500 = vpop.f32.mrb[0].mxu0
        %v2501 = vadd.f32 %v2340, %v2500
        %v2502 = vpop.f32.mrb[0].mxu0
        %v2503 = vpop.f32.mrb[0].mxu0
        %v2504 = vadd.f32 %v2343, %v2503
        %v2505 = vpop.f32.mrb[0].mxu0
        %2506 = vmatprep.mubr.bf16.mxu0 0
        %2507 = vmatmul.mubr.bf16.gmra.mrb[0].mxu0 %v1113
        %v2508 = vpop.f32.mrb[0].mxu0
        %v2509 = vadd.f32 %v2348, %v2508
        %v2510 = vpop.f32.mrb[0].mxu0
        %v2511 = vpop.f32.mrb[0].mxu0
        %v2512 = vadd.f32 %v2351, %v2511
        %v2513 = vpop.f32.mrb[0].mxu0
        %2514 = vmatprep.mubr.bf16.mxu0 0
        %2515 = vmatmul.mubr.bf16.gmra.mrb[0].mxu0 %v1122
        %v2516 = vpop.f32.mrb[0].mxu0
        %v2517 = vadd.f32 %v2356, %v2516
        %v2518 = vpop.f32.mrb[0].mxu0
        %v2519 = vpop.f32.mrb[0].mxu0
        %v2520 = vadd.f32 %v2359, %v2519
        %v2521 = vpop.f32.mrb[0].mxu0
        %2522 = vmatprep.mubr.bf16.mxu0 0
        %2523 = vmatmul.mubr.bf16.gmra.mrb[0].mxu0 %v1131
        %v2524 = vpop.f32.mrb[0].mxu0
        %v2525 = vadd.f32 %v2364, %v2524
        %v2526 = vpop.f32.mrb[0].mxu0
        %v2527 = vpop.f32.mrb[0].mxu0
        %v2528 = vadd.f32 %v2367, %v2527
        %v2529 = vpop.f32.mrb[0].mxu0
        %2530 = vmatprep.mubr.bf16.mxu0 0
        %2531 = vmatmul.mubr.bf16.gmra.mrb[0].mxu0 %v1140
        %v2532 = vpop.f32.mrb[0].mxu0
        %v2533 = vadd.f32 %v2372, %v2532
        %v2534 = vpop.f32.mrb[0].mxu0
        %v2535 = vpop.f32.mrb[0].mxu0
        %v2536 = vadd.f32 %v2375, %v2535
        %v2537 = vpop.f32.mrb[0].mxu0
        %2538 = vmatprep.mubr.bf16.mxu0 0
        %2539 = vmatmul.mubr.bf16.gmra.mrb[0].mxu0 %v1149
        %v2540 = vpop.f32.mrb[0].mxu0
        %v2541 = vadd.f32 %v2380, %v2540
        %v2542 = vpop.f32.mrb[0].mxu0
        %v2543 = vpop.f32.mrb[0].mxu0
        %v2544 = vadd.f32 %v2383, %v2543
        %v2545 = vpop.f32.mrb[0].mxu0
        %2546 = vmatprep.mubr.bf16.mxu0 0
        %2547 = vmatmul.mubr.bf16.gmra.mrb[0].mxu0 %v1158
        %v2548 = vpop.f32.mrb[0].mxu0
        %v2549 = vadd.f32 %v2388, %v2548
        %v2550 = vpop.f32.mrb[0].mxu0
        %v2551 = vpop.f32.mrb[0].mxu0
        %v2552 = vadd.f32 %v2391, %v2551
        %v2553 = vpop.f32.mrb[0].mxu0
        %2554 = vmatprep.mubr.bf16.mxu0 0
        %2555 = vmatmul.mubr.bf16.gmra.mrb[0].mxu0 %v1167
        %v2556 = vpop.f32.mrb[0].mxu0
        %v2557 = vadd.f32 %v2396, %v2556
        %v2558 = vpop.f32.mrb[0].mxu0
        %v2559 = vpop.f32.mrb[0].mxu0
        %v2560 = vadd.f32 %v2399, %v2559
        %v2561 = vpop.f32.mrb[0].mxu0
        %2562 = vmatprep.mubr.bf16.mxu0 0
        %2563 = vmatmul.mubr.bf16.gmra.mrb[0].mxu0 %v1176
        %v2564 = vpop.f32.mrb[0].mxu0
        %v2565 = vadd.f32 %v2404, %v2564
        %v2566 = vpop.f32.mrb[0].mxu0
        %v2567 = vpop.f32.mrb[0].mxu0
        %v2568 = vadd.f32 %v2407, %v2567
        %v2569 = vpop.f32.mrb[0].mxu0
        %2570 = vmatprep.mubr.bf16.mxu0 0
        %2571 = vmatmul.mubr.bf16.gmra.mrb[0].mxu0 %v1185
        %v2572 = vpop.f32.mrb[0].mxu0
        %v2573 = vadd.f32 %v2412, %v2572
        %v2574 = vpop.f32.mrb[0].mxu0
        %v2575 = vpop.f32.mrb[0].mxu0
        %v2576 = vadd.f32 %v2415, %v2575
        %v2577 = vpop.f32.mrb[0].mxu0
        %2578 = vmatprep.mubr.bf16.mxu0 0
        %2579 = vmatmul.mubr.bf16.gmra.mrb[0].mxu0 %v1194
        %v2580 = vpop.f32.mrb[0].mxu0
        %v2581 = vadd.f32 %v2420, %v2580
        %v2582 = vpop.f32.mrb[0].mxu0
        %v2583 = vpop.f32.mrb[0].mxu0
        %v2584 = vadd.f32 %v2423, %v2583
        %v2585 = vpop.f32.mrb[0].mxu0
        %2586 = vmatprep.mubr.bf16.mxu0 0
        %2587 = vmatmul.mubr.bf16.gmra.mrb[0].mxu0 %v1203
        %v2588 = vpop.f32.mrb[0].mxu0
        %v2589 = vadd.f32 %v2428, %v2588
        %v2590 = vpop.f32.mrb[0].mxu0
        %v2591 = vpop.f32.mrb[0].mxu0
        %v2592 = vadd.f32 %v2431, %v2591
        %v2593 = vpop.f32.mrb[0].mxu0
        %2594 = vmatprep.mubr.bf16.mxu0 0
        %2595 = vmatmul.mubr.bf16.gmra.mrb[0].mxu0 %v1212
        %v2596 = vpop.f32.mrb[0].mxu0
        %v2597 = vadd.f32 %v2436, %v2596
        %v2598 = vpop.f32.mrb[0].mxu0
        %v2599 = vpop.f32.mrb[0].mxu0
        %v2600 = vadd.f32 %v2439, %v2599
        %v2601 = vpop.f32.mrb[0].mxu0
        %2602 = vmatprep.mubr.bf16.mxu0 0
        %2603 = vmatmul.mubr.bf16.gmra.mrb[0].mxu0 %v1221
        %v2604 = vpop.f32.mrb[0].mxu0
        %v2605 = vadd.f32 %v2444, %v2604
        %v2606 = vpop.f32.mrb[0].mxu0
        %v2607 = vpop.f32.mrb[0].mxu0
        %v2608 = vadd.f32 %v2447, %v2607
        %v2609 = vpop.f32.mrb[0].mxu0
        %2610 = vmatprep.mubr.bf16.mxu0 0
        %2611 = vmatmul.mubr.bf16.gmra.mrb[0].mxu0 %v1230
        %v2612 = vpop.f32.mrb[0].mxu0
        %v2613 = vadd.f32 %v2452, %v2612
        %v2614 = vpop.f32.mrb[0].mxu0
        %v2615 = vpop.f32.mrb[0].mxu0
        %v2616 = vadd.f32 %v2455, %v2615
        %v2617 = vpop.f32.mrb[0].mxu0
        %2618 = vmatprep.mubr.bf16.mxu0 0
        %2619 = vmatmul.mubr.bf16.gmra.mrb[0].mxu0 %v1239
        %v2620 = vpop.f32.mrb[0].mxu0
        %v2621 = vadd.f32 %v2460, %v2620
        %v2622 = vpop.f32.mrb[0].mxu0
        %v2623 = vpop.f32.mrb[0].mxu0
        %v2624 = vadd.f32 %v2463, %v2623
        %v2625 = vpop.f32.mrb[0].mxu0
        %2626 = vdwg.mxu0
        %v2627 = vmax.f32 %v2501, 0.0
        %v2628 = vmax.f32 %v2504, 0.0
        %v2629 = vmax.f32 %v2509, 0.0
        %v2630 = vmax.f32 %v2512, 0.0
        %v2631 = vmax.f32 %v2517, 0.0
        %v2632 = vmax.f32 %v2520, 0.0
        %v2633 = vmax.f32 %v2525, 0.0
        %v2634 = vmax.f32 %v2528, 0.0
        %v2635 = vmax.f32 %v2533, 0.0
        %v2636 = vmax.f32 %v2536, 0.0
        %v2637 = vmax.f32 %v2541, 0.0
        %v2638 = vmax.f32 %v2544, 0.0
        %v2639 = vmax.f32 %v2549, 0.0
        %v2640 = vmax.f32 %v2552, 0.0
        %v2641 = vmax.f32 %v2557, 0.0
        %v2642 = vmax.f32 %v2560, 0.0
        %v2643 = vmax.f32 %v2565, 0.0
        %v2644 = vmax.f32 %v2568, 0.0
        %v2645 = vmax.f32 %v2573, 0.0
        %v2646 = vmax.f32 %v2576, 0.0
        %v2647 = vmax.f32 %v2581, 0.0
        %v2648 = vmax.f32 %v2584, 0.0
        %v2649 = vmax.f32 %v2589, 0.0
        %v2650 = vmax.f32 %v2592, 0.0
        %v2651 = vmax.f32 %v2597, 0.0
        %v2652 = vmax.f32 %v2600, 0.0
        %v2653 = vmax.f32 %v2605, 0.0
        %v2654 = vmax.f32 %v2608, 0.0
        %v2655 = vmax.f32 %v2613, 0.0
        %v2656 = vmax.f32 %v2616, 0.0
        %v2657 = vmax.f32 %v2621, 0.0
        %v2658 = vmax.f32 %v2624, 0.0
        %v2659 = vld [vmem:[%s6] sm:$0x1]
        %2660 = vst [vmem:[%s349 + $0x1] sm:$0xff] %v2627
        %2661 = vst [vmem:[%s349 + $0x9] sm:$0xff] %v2628
        %2662 = vst [vmem:[%s349 + $0x19] sm:$0xff] %v2629
        %2663 = vst [vmem:[%s349 + $0x21] sm:$0xff] %v2630
        %2664 = vst [vmem:[%s349 + $0x31] sm:$0xff] %v2631
        %2665 = vst [vmem:[%s349 + $0x39] sm:$0xff] %v2632
        %2666 = vst [vmem:[%s349 + $0x49] sm:$0xff] %v2633
        %2667 = vst [vmem:[%s349 + $0x51] sm:$0xff] %v2634
        %2668 = vst [vmem:[%s349 + $0x61] sm:$0xff] %v2635
        %2669 = vst [vmem:[%s349 + $0x69] sm:$0xff] %v2636
        %2670 = vst [vmem:[%s349 + $0x79] sm:$0xff] %v2637
        %2671 = vst [vmem:[%s349 + $0x81] sm:$0xff] %v2638
        %2672 = vst [vmem:[%s349 + $0x91] sm:$0xff] %v2639
        %2673 = vst [vmem:[%s349 + $0x99] sm:$0xff] %v2640
        %2674 = vst [vmem:[%s349 + $0xa9] sm:$0xff] %v2641
        %2675 = vst [vmem:[%s349 + $0xb1] sm:$0xff] %v2642
        %2676 = vst [vmem:[%s349 + $0xc1] sm:$0xff] %v2643
        %2677 = vst [vmem:[%s349 + $0xc9] sm:$0xff] %v2644
        %2678 = vst [vmem:[%s349 + $0xd9] sm:$0xff] %v2645
        %2679 = vst [vmem:[%s349 + $0xe1] sm:$0xff] %v2646
        %2680 = vst [vmem:[%s349 + $0xf1] sm:$0xff] %v2647
        %2681 = vst [vmem:[%s349 + $0xf9] sm:$0xff] %v2648
        %2682 = vst [vmem:[%s349 + $0x109] sm:$0xff] %v2649
        %2683 = vst [vmem:[%s349 + $0x111] sm:$0xff] %v2650
        %2684 = vst [vmem:[%s349 + $0x121] sm:$0xff] %v2651
        %2685 = vst [vmem:[%s349 + $0x129] sm:$0xff] %v2652
        %2686 = vst [vmem:[%s349 + $0x139] sm:$0xff] %v2653
        %2687 = vst [vmem:[%s349 + $0x141] sm:$0xff] %v2654
        %2688 = vst [vmem:[%s349 + $0x151] sm:$0xff] %v2655
        %2689 = vst [vmem:[%s349 + $0x159] sm:$0xff] %v2656
        %2690 = vst [vmem:[%s349 + $0x169] sm:$0xff] %v2657
        %2691 = vst [vmem:[%s349 + $0x171] sm:$0xff] %v2658
        %v2692 = vld [vmem:[#allocation2] sm:$0xff]
        %v2693 = vld [vmem:[#allocation2 + $0x8] sm:$0xff]
        %v2694 = vld [vmem:[#allocation2 + $0x18] sm:$0xff]
        %v2695 = vld [vmem:[#allocation2 + $0x20] sm:$0xff]
        %v2696 = vld [vmem:[#allocation2 + $0x30] sm:$0xff]
        %v2697 = vld [vmem:[#allocation2 + $0x38] sm:$0xff]
        %v2698 = vld [vmem:[#allocation2 + $0x48] sm:$0xff]
        %v2699 = vld [vmem:[#allocation2 + $0x50] sm:$0xff]
        %v2700 = vld [vmem:[#allocation2 + $0x60] sm:$0xff]
        %v2701 = vld [vmem:[#allocation2 + $0x68] sm:$0xff]
        %v2702 = vld [vmem:[#allocation2 + $0x78] sm:$0xff]
        %v2703 = vld [vmem:[#allocation2 + $0x80] sm:$0xff]
        %v2704 = vld [vmem:[#allocation2 + $0x90] sm:$0xff]
        %v2705 = vld [vmem:[#allocation2 + $0x98] sm:$0xff]
        %v2706 = vld [vmem:[#allocation2 + $0xa8] sm:$0xff]
        %v2707 = vld [vmem:[#allocation2 + $0xb0] sm:$0xff]
        %v2708 = vld [vmem:[#allocation2 + $0xc0] sm:$0xff]
        %v2709 = vld [vmem:[#allocation2 + $0xc8] sm:$0xff]
        %v2710 = vld [vmem:[#allocation2 + $0xd8] sm:$0xff]
        %v2711 = vld [vmem:[#allocation2 + $0xe0] sm:$0xff]
        %v2712 = vld [vmem:[#allocation2 + $0xf0] sm:$0xff]
        %v2713 = vld [vmem:[#allocation2 + $0xf8] sm:$0xff]
        %v2714 = vld [vmem:[#allocation2 + $0x108] sm:$0xff]
        %v2715 = vld [vmem:[#allocation2 + $0x110] sm:$0xff]
        %v2716 = vld [vmem:[#allocation2 + $0x120] sm:$0xff]
        %v2717 = vld [vmem:[#allocation2 + $0x128] sm:$0xff]
        %v2718 = vld [vmem:[#allocation2 + $0x138] sm:$0xff]
        %v2719 = vld [vmem:[#allocation2 + $0x140] sm:$0xff]
        %v2720 = vld [vmem:[#allocation2 + $0x150] sm:$0xff]
        %v2721 = vld [vmem:[#allocation2 + $0x158] sm:$0xff]
        %v2722 = vld [vmem:[#allocation2 + $0x168] sm:$0xff]
        %v2723 = vld [vmem:[#allocation2 + $0x170] sm:$0xff]
        %v2724 = vld [vmem:[#allocation2 + $0x1] sm:$0xff]
        %v2725 = vld [vmem:[#allocation2 + $0x9] sm:$0xff]
        %v2726 = vld [vmem:[#allocation2 + $0x19] sm:$0xff]
        %v2727 = vld [vmem:[#allocation2 + $0x21] sm:$0xff]
        %v2728 = vld [vmem:[#allocation2 + $0x31] sm:$0xff]
        %v2729 = vld [vmem:[#allocation2 + $0x39] sm:$0xff]
        %v2730 = vld [vmem:[#allocation2 + $0x49] sm:$0xff]
        %v2731 = vld [vmem:[#allocation2 + $0x51] sm:$0xff]
        %v2732 = vld [vmem:[#allocation2 + $0x61] sm:$0xff]
        %v2733 = vld [vmem:[#allocation2 + $0x69] sm:$0xff]
        %v2734 = vld [vmem:[#allocation2 + $0x79] sm:$0xff]
        %v2735 = vld [vmem:[#allocation2 + $0x81] sm:$0xff]
        %v2736 = vld [vmem:[#allocation2 + $0x91] sm:$0xff]
        %v2737 = vld [vmem:[#allocation2 + $0x99] sm:$0xff]
        %v2738 = vld [vmem:[#allocation2 + $0xa9] sm:$0xff]
        %v2739 = vld [vmem:[#allocation2 + $0xb1] sm:$0xff]
        %v2740 = vld [vmem:[#allocation2 + $0xc1] sm:$0xff]
        %v2741 = vld [vmem:[#allocation2 + $0xc9] sm:$0xff]
        %v2742 = vld [vmem:[#allocation2 + $0xd9] sm:$0xff]
        %v2743 = vld [vmem:[#allocation2 + $0xe1] sm:$0xff]
        %v2744 = vld [vmem:[#allocation2 + $0xf1] sm:$0xff]
        %v2745 = vld [vmem:[#allocation2 + $0xf9] sm:$0xff]
        %v2746 = vld [vmem:[#allocation2 + $0x109] sm:$0xff]
        %v2747 = vld [vmem:[#allocation2 + $0x111] sm:$0xff]
        %v2748 = vld [vmem:[#allocation2 + $0x121] sm:$0xff]
        %v2749 = vld [vmem:[#allocation2 + $0x129] sm:$0xff]
        %v2750 = vld [vmem:[#allocation2 + $0x139] sm:$0xff]
        %v2751 = vld [vmem:[#allocation2 + $0x141] sm:$0xff]
        %v2752 = vld [vmem:[#allocation2 + $0x151] sm:$0xff]
        %v2753 = vld [vmem:[#allocation2 + $0x159] sm:$0xff]
        %v2754 = vld [vmem:[#allocation2 + $0x169] sm:$0xff]
        %v2755 = vld [vmem:[#allocation2 + $0x171] sm:$0xff]
        %v2756 = vld [vmem:[#allocation2 + $0x2] sm:$0xff]
        %v2757 = vld [vmem:[#allocation2 + $0xa] sm:$0xff]
        %v2758 = vld [vmem:[#allocation2 + $0x1a] sm:$0xff]
        %v2759 = vld [vmem:[#allocation2 + $0x22] sm:$0xff]
        %v2760 = vld [vmem:[#allocation2 + $0x32] sm:$0xff]
        %v2761 = vld [vmem:[#allocation2 + $0x3a] sm:$0xff]
        %v2762 = vld [vmem:[#allocation2 + $0x4a] sm:$0xff]
        %v2763 = vld [vmem:[#allocation2 + $0x52] sm:$0xff]
        %v2764 = vld [vmem:[#allocation2 + $0x62] sm:$0xff]
        %v2765 = vld [vmem:[#allocation2 + $0x6a] sm:$0xff]
        %v2766 = vld [vmem:[#allocation2 + $0x7a] sm:$0xff]
        %v2767 = vld [vmem:[#allocation2 + $0x82] sm:$0xff]
        %v2768 = vld [vmem:[#allocation2 + $0x92] sm:$0xff]
        %v2769 = vld [vmem:[#allocation2 + $0x9a] sm:$0xff]
        %v2770 = vld [vmem:[#allocation2 + $0xaa] sm:$0xff]
        %v2771 = vld [vmem:[#allocation2 + $0xb2] sm:$0xff]
        %v2772 = vld [vmem:[#allocation2 + $0xc2] sm:$0xff]
        %v2773 = vld [vmem:[#allocation2 + $0xca] sm:$0xff]
        %v2774 = vld [vmem:[#allocation2 + $0xda] sm:$0xff]
        %v2775 = vld [vmem:[#allocation2 + $0xe2] sm:$0xff]
        %v2776 = vld [vmem:[#allocation2 + $0xf2] sm:$0xff]
        %v2777 = vld [vmem:[#allocation2 + $0xfa] sm:$0xff]
        %v2778 = vld [vmem:[#allocation2 + $0x10a] sm:$0xff]
        %v2779 = vld [vmem:[#allocation2 + $0x112] sm:$0xff]
        %v2780 = vld [vmem:[#allocation2 + $0x122] sm:$0xff]
        %v2781 = vld [vmem:[#allocation2 + $0x12a] sm:$0xff]
        %v2782 = vld [vmem:[#allocation2 + $0x13a] sm:$0xff]
        %v2783 = vld [vmem:[#allocation2 + $0x142] sm:$0xff]
        %v2784 = vld [vmem:[#allocation2 + $0x152] sm:$0xff]
        %v2785 = vld [vmem:[#allocation2 + $0x15a] sm:$0xff]
        %v2786 = vld [vmem:[#allocation2 + $0x16a] sm:$0xff]
        %v2787 = vld [vmem:[#allocation2 + $0x172] sm:$0xff]
        %v2788 = vld [vmem:[%s349] sm:$0xff]
        %v2789 = vld [vmem:[%s349 + $0x8] sm:$0xff]
        %v2790 = vld [vmem:[%s349 + $0x18] sm:$0xff]
        %v2791 = vld [vmem:[%s349 + $0x20] sm:$0xff]
        %v2792 = vld [vmem:[%s349 + $0x30] sm:$0xff]
        %v2793 = vld [vmem:[%s349 + $0x38] sm:$0xff]
        %v2794 = vld [vmem:[%s349 + $0x48] sm:$0xff]
        %v2795 = vld [vmem:[%s349 + $0x50] sm:$0xff]
        %v2796 = vld [vmem:[%s349 + $0x60] sm:$0xff]
        %v2797 = vld [vmem:[%s349 + $0x68] sm:$0xff]
        %v2798 = vld [vmem:[%s349 + $0x78] sm:$0xff]
        %v2799 = vld [vmem:[%s349 + $0x80] sm:$0xff]
        %v2800 = vld [vmem:[%s349 + $0x90] sm:$0xff]
        %v2801 = vld [vmem:[%s349 + $0x98] sm:$0xff]
        %v2802 = vld [vmem:[%s349 + $0xa8] sm:$0xff]
        %v2803 = vld [vmem:[%s349 + $0xb0] sm:$0xff]
        %v2804 = vld [vmem:[%s349 + $0xc0] sm:$0xff]
        %v2805 = vld [vmem:[%s349 + $0xc8] sm:$0xff]
        %v2806 = vld [vmem:[%s349 + $0xd8] sm:$0xff]
        %v2807 = vld [vmem:[%s349 + $0xe0] sm:$0xff]
        %v2808 = vld [vmem:[%s349 + $0xf0] sm:$0xff]
        %v2809 = vld [vmem:[%s349 + $0xf8] sm:$0xff]
        %v2810 = vld [vmem:[%s349 + $0x108] sm:$0xff]
        %v2811 = vld [vmem:[%s349 + $0x110] sm:$0xff]
        %v2812 = vld [vmem:[%s349 + $0x120] sm:$0xff]
        %v2813 = vld [vmem:[%s349 + $0x128] sm:$0xff]
        %v2814 = vld [vmem:[%s349 + $0x138] sm:$0xff]
        %v2815 = vld [vmem:[%s349 + $0x140] sm:$0xff]
        %v2816 = vld [vmem:[%s349 + $0x150] sm:$0xff]
        %v2817 = vld [vmem:[%s349 + $0x158] sm:$0xff]
        %v2818 = vld [vmem:[%s349 + $0x168] sm:$0xff]
        %v2819 = vld [vmem:[%s349 + $0x170] sm:$0xff]
        %v2820 = vld [vmem:[%s349 + $0x1] sm:$0xff]
        %v2821 = vld [vmem:[%s349 + $0x9] sm:$0xff]
        %v2822 = vld [vmem:[%s349 + $0x19] sm:$0xff]
        %v2823 = vld [vmem:[%s349 + $0x21] sm:$0xff]
        %v2824 = vld [vmem:[%s349 + $0x31] sm:$0xff]
        %v2825 = vld [vmem:[%s349 + $0x39] sm:$0xff]
        %v2826 = vld [vmem:[%s349 + $0x49] sm:$0xff]
        %v2827 = vld [vmem:[%s349 + $0x51] sm:$0xff]
        %v2828 = vld [vmem:[%s349 + $0x61] sm:$0xff]
        %v2829 = vld [vmem:[%s349 + $0x69] sm:$0xff]
        %v2830 = vld [vmem:[%s349 + $0x79] sm:$0xff]
        %v2831 = vld [vmem:[%s349 + $0x81] sm:$0xff]
        %v2832 = vld [vmem:[%s349 + $0x91] sm:$0xff]
        %v2833 = vld [vmem:[%s349 + $0x99] sm:$0xff]
        %v2834 = vld [vmem:[%s349 + $0xa9] sm:$0xff]
        %v2835 = vld [vmem:[%s349 + $0xb1] sm:$0xff]
        %v2836 = vld [vmem:[%s349 + $0xc1] sm:$0xff]
        %v2837 = vld [vmem:[%s349 + $0xc9] sm:$0xff]
        %v2838 = vld [vmem:[%s349 + $0xd9] sm:$0xff]
        %v2839 = vld [vmem:[%s349 + $0xe1] sm:$0xff]
        %v2840 = vld [vmem:[%s349 + $0xf1] sm:$0xff]
        %v2841 = vld [vmem:[%s349 + $0xf9] sm:$0xff]
        %v2842 = vld [vmem:[%s349 + $0x109] sm:$0xff]
        %v2843 = vld [vmem:[%s349 + $0x111] sm:$0xff]
        %v2844 = vld [vmem:[%s349 + $0x121] sm:$0xff]
        %v2845 = vld [vmem:[%s349 + $0x129] sm:$0xff]
        %v2846 = vld [vmem:[%s349 + $0x139] sm:$0xff]
        %v2847 = vld [vmem:[%s349 + $0x141] sm:$0xff]
        %v2848 = vld [vmem:[%s349 + $0x151] sm:$0xff]
        %v2849 = vld [vmem:[%s349 + $0x159] sm:$0xff]
        %v2850 = vld [vmem:[%s349 + $0x169] sm:$0xff]
        %v2851 = vld [vmem:[%s349 + $0x171] sm:$0xff]
        %v2852 = vld [vmem:[%s349 + $0x2] sm:$0xff]
        %v2853 = vld [vmem:[%s349 + $0xa] sm:$0xff]
        %v2854 = vld [vmem:[%s349 + $0x1a] sm:$0xff]
        %v2855 = vld [vmem:[%s349 + $0x22] sm:$0xff]
        %v2856 = vld [vmem:[%s349 + $0x32] sm:$0xff]
        %v2857 = vld [vmem:[%s349 + $0x3a] sm:$0xff]
        %v2858 = vld [vmem:[%s349 + $0x4a] sm:$0xff]
        %v2859 = vld [vmem:[%s349 + $0x52] sm:$0xff]
        %v2860 = vld [vmem:[%s349 + $0x62] sm:$0xff]
        %v2861 = vld [vmem:[%s349 + $0x6a] sm:$0xff]
        %v2862 = vld [vmem:[%s349 + $0x7a] sm:$0xff]
        %v2863 = vld [vmem:[%s349 + $0x82] sm:$0xff]
        %v2864 = vld [vmem:[%s349 + $0x92] sm:$0xff]
        %v2865 = vld [vmem:[%s349 + $0x9a] sm:$0xff]
        %v2866 = vld [vmem:[%s349 + $0xaa] sm:$0xff]
        %v2867 = vld [vmem:[%s349 + $0xb2] sm:$0xff]
        %v2868 = vld [vmem:[%s349 + $0xc2] sm:$0xff]
        %v2869 = vld [vmem:[%s349 + $0xca] sm:$0xff]
        %v2870 = vld [vmem:[%s349 + $0xda] sm:$0xff]
        %v2871 = vld [vmem:[%s349 + $0xe2] sm:$0xff]
        %v2872 = vld [vmem:[%s349 + $0xf2] sm:$0xff]
        %v2873 = vld [vmem:[%s349 + $0xfa] sm:$0xff]
        %v2874 = vld [vmem:[%s349 + $0x10a] sm:$0xff]
        %v2875 = vld [vmem:[%s349 + $0x112] sm:$0xff]
        %v2876 = vld [vmem:[%s349 + $0x122] sm:$0xff]
        %v2877 = vld [vmem:[%s349 + $0x12a] sm:$0xff]
        %v2878 = vld [vmem:[%s349 + $0x13a] sm:$0xff]
        %v2879 = vld [vmem:[%s349 + $0x142] sm:$0xff]
        %v2880 = vld [vmem:[%s349 + $0x152] sm:$0xff]
        %v2881 = vld [vmem:[%s349 + $0x15a] sm:$0xff]
        %v2882 = vld [vmem:[%s349 + $0x16a] sm:$0xff]
        %v2883 = vld [vmem:[%s349 + $0x172] sm:$0xff]
        %v2884 = vld [vmem:[%s999] sm:$0xff]
        %v2885 = vld [vmem:[%s999 + $0x8] sm:$0xff]
        %v2886 = vld [vmem:[%s999 + $0x18] sm:$0xff]
        %v2887 = vld [vmem:[%s999 + $0x20] sm:$0xff]
        %v2888 = vld [vmem:[%s999 + $0x30] sm:$0xff]
        %v2889 = vld [vmem:[%s999 + $0x38] sm:$0xff]
        %v2890 = vld [vmem:[%s999 + $0x48] sm:$0xff]
        %v2891 = vld [vmem:[%s999 + $0x50] sm:$0xff]
        %v2892 = vld [vmem:[%s999 + $0x60] sm:$0xff]
        %v2893 = vld [vmem:[%s999 + $0x68] sm:$0xff]
        %v2894 = vld [vmem:[%s999 + $0x78] sm:$0xff]
        %v2895 = vld [vmem:[%s999 + $0x80] sm:$0xff]
        %v2896 = vld [vmem:[%s999 + $0x90] sm:$0xff]
        %v2897 = vld [vmem:[%s999 + $0x98] sm:$0xff]
        %v2898 = vld [vmem:[%s999 + $0xa8] sm:$0xff]
        %v2899 = vld [vmem:[%s999 + $0xb0] sm:$0xff]
        %v2900 = vld [vmem:[%s999 + $0xc0] sm:$0xff]
        %v2901 = vld [vmem:[%s999 + $0xc8] sm:$0xff]
        %v2902 = vld [vmem:[%s999 + $0xd8] sm:$0xff]
        %v2903 = vld [vmem:[%s999 + $0xe0] sm:$0xff]
        %v2904 = vld [vmem:[%s999 + $0xf0] sm:$0xff]
        %v2905 = vld [vmem:[%s999 + $0xf8] sm:$0xff]
        %v2906 = vld [vmem:[%s999 + $0x108] sm:$0xff]
        %v2907 = vld [vmem:[%s999 + $0x110] sm:$0xff]
        %v2908 = vld [vmem:[%s999 + $0x120] sm:$0xff]
        %v2909 = vld [vmem:[%s999 + $0x128] sm:$0xff]
        %v2910 = vld [vmem:[%s999 + $0x138] sm:$0xff]
        %v2911 = vld [vmem:[%s999 + $0x140] sm:$0xff]
        %v2912 = vld [vmem:[%s999 + $0x150] sm:$0xff]
        %v2913 = vld [vmem:[%s999 + $0x158] sm:$0xff]
        %v2914 = vld [vmem:[%s999 + $0x168] sm:$0xff]
        %v2915 = vld [vmem:[%s999 + $0x170] sm:$0xff]
        %v2916 = vld [vmem:[%s999 + $0x1] sm:$0xff]
        %v2917 = vld [vmem:[%s999 + $0x9] sm:$0xff]
        %v2918 = vld [vmem:[%s999 + $0x19] sm:$0xff]
        %v2919 = vld [vmem:[%s999 + $0x21] sm:$0xff]
        %v2920 = vld [vmem:[%s999 + $0x31] sm:$0xff]
        %v2921 = vld [vmem:[%s999 + $0x39] sm:$0xff]
        %v2922 = vld [vmem:[%s999 + $0x49] sm:$0xff]
        %v2923 = vld [vmem:[%s999 + $0x51] sm:$0xff]
        %v2924 = vld [vmem:[%s999 + $0x61] sm:$0xff]
        %v2925 = vld [vmem:[%s999 + $0x69] sm:$0xff]
        %v2926 = vld [vmem:[%s999 + $0x79] sm:$0xff]
        %v2927 = vld [vmem:[%s999 + $0x81] sm:$0xff]
        %v2928 = vld [vmem:[%s999 + $0x91] sm:$0xff]
        %v2929 = vld [vmem:[%s999 + $0x99] sm:$0xff]
        %v2930 = vld [vmem:[%s999 + $0xa9] sm:$0xff]
        %v2931 = vld [vmem:[%s999 + $0xb1] sm:$0xff]
        %v2932 = vld [vmem:[%s999 + $0xc1] sm:$0xff]
        %v2933 = vld [vmem:[%s999 + $0xc9] sm:$0xff]
        %v2934 = vld [vmem:[%s999 + $0xd9] sm:$0xff]
        %v2935 = vld [vmem:[%s999 + $0xe1] sm:$0xff]
        %v2936 = vld [vmem:[%s999 + $0xf1] sm:$0xff]
        %v2937 = vld [vmem:[%s999 + $0xf9] sm:$0xff]
        %v2938 = vld [vmem:[%s999 + $0x109] sm:$0xff]
        %v2939 = vld [vmem:[%s999 + $0x111] sm:$0xff]
        %v2940 = vld [vmem:[%s999 + $0x121] sm:$0xff]
        %v2941 = vld [vmem:[%s999 + $0x129] sm:$0xff]
        %v2942 = vld [vmem:[%s999 + $0x139] sm:$0xff]
        %v2943 = vld [vmem:[%s999 + $0x141] sm:$0xff]
        %v2944 = vld [vmem:[%s999 + $0x151] sm:$0xff]
        %v2945 = vld [vmem:[%s999 + $0x159] sm:$0xff]
        %v2946 = vld [vmem:[%s999 + $0x169] sm:$0xff]
        %v2947 = vld [vmem:[%s999 + $0x171] sm:$0xff]
        %v2948 = vld [vmem:[%s999 + $0x2] sm:$0xff]
        %v2949 = vld [vmem:[%s999 + $0xa] sm:$0xff]
        %v2950 = vld [vmem:[%s999 + $0x1a] sm:$0xff]
        %v2951 = vld [vmem:[%s999 + $0x22] sm:$0xff]
        %v2952 = vld [vmem:[%s999 + $0x32] sm:$0xff]
        %v2953 = vld [vmem:[%s999 + $0x3a] sm:$0xff]
        %v2954 = vld [vmem:[%s999 + $0x4a] sm:$0xff]
        %v2955 = vld [vmem:[%s999 + $0x52] sm:$0xff]
        %v2956 = vld [vmem:[%s999 + $0x62] sm:$0xff]
        %v2957 = vld [vmem:[%s999 + $0x6a] sm:$0xff]
        %v2958 = vld [vmem:[%s999 + $0x7a] sm:$0xff]
        %v2959 = vld [vmem:[%s999 + $0x82] sm:$0xff]
        %v2960 = vld [vmem:[%s999 + $0x92] sm:$0xff]
        %v2961 = vld [vmem:[%s999 + $0x9a] sm:$0xff]
        %v2962 = vld [vmem:[%s999 + $0xaa] sm:$0xff]
        %v2963 = vld [vmem:[%s999 + $0xb2] sm:$0xff]
        %v2964 = vld [vmem:[%s999 + $0xc2] sm:$0xff]
        %v2965 = vld [vmem:[%s999 + $0xca] sm:$0xff]
        %v2966 = vld [vmem:[%s999 + $0xda] sm:$0xff]
        %v2967 = vld [vmem:[%s999 + $0xe2] sm:$0xff]
        %v2968 = vld [vmem:[%s999 + $0xf2] sm:$0xff]
        %v2969 = vld [vmem:[%s999 + $0xfa] sm:$0xff]
        %v2970 = vld [vmem:[%s999 + $0x10a] sm:$0xff]
        %v2971 = vld [vmem:[%s999 + $0x112] sm:$0xff]
        %v2972 = vld [vmem:[%s999 + $0x122] sm:$0xff]
        %v2973 = vld [vmem:[%s999 + $0x12a] sm:$0xff]
        %v2974 = vld [vmem:[%s999 + $0x13a] sm:$0xff]
        %v2975 = vld [vmem:[%s999 + $0x142] sm:$0xff]
        %v2976 = vld [vmem:[%s999 + $0x152] sm:$0xff]
        %v2977 = vld [vmem:[%s999 + $0x15a] sm:$0xff]
        %v2978 = vld [vmem:[%s999 + $0x16a] sm:$0xff]
        %v2979 = vld [vmem:[%s999 + $0x172] sm:$0xff]
        %v2980 = vpack.c.bf16 %v2693, %v2692
        %v2981 = vpack.c.bf16 %v2725, %v2724
        %v2982 = vpack.c.bf16 %v2757, %v2756
        %v2983 = vpack.c.bf16 %v2789, %v2788
        %v2984 = vpack.c.bf16 %v2821, %v2820
        %v2985 = vpack.c.bf16 %v2853, %v2852
        %v2986 = vpack.c.bf16 %v2885, %v2884
        %v2987 = vpack.c.bf16 %v2917, %v2916
        %v2988 = vpack.c.bf16 %v2949, %v2948
        %v2989 = vpack.c.bf16 %v2695, %v2694
        %v2990 = vpack.c.bf16 %v2727, %v2726
        %v2991 = vpack.c.bf16 %v2759, %v2758
        %v2992 = vpack.c.bf16 %v2791, %v2790
        %v2993 = vpack.c.bf16 %v2823, %v2822
        %v2994 = vpack.c.bf16 %v2855, %v2854
        %v2995 = vpack.c.bf16 %v2887, %v2886
        %v2996 = vpack.c.bf16 %v2919, %v2918
        %v2997 = vpack.c.bf16 %v2951, %v2950
        %v2998 = vpack.c.bf16 %v2697, %v2696
        %v2999 = vpack.c.bf16 %v2729, %v2728
        %v3000 = vpack.c.bf16 %v2761, %v2760
        %v3001 = vpack.c.bf16 %v2793, %v2792
        %v3002 = vpack.c.bf16 %v2825, %v2824
        %v3003 = vpack.c.bf16 %v2857, %v2856
        %v3004 = vpack.c.bf16 %v2889, %v2888
        %v3005 = vpack.c.bf16 %v2921, %v2920
        %v3006 = vpack.c.bf16 %v2953, %v2952
        %v3007 = vpack.c.bf16 %v2699, %v2698
        %v3008 = vpack.c.bf16 %v2731, %v2730
        %v3009 = vpack.c.bf16 %v2763, %v2762
        %v3010 = vpack.c.bf16 %v2795, %v2794
        %v3011 = vpack.c.bf16 %v2827, %v2826
        %v3012 = vpack.c.bf16 %v2859, %v2858
        %v3013 = vpack.c.bf16 %v2891, %v2890
        %v3014 = vpack.c.bf16 %v2923, %v2922
        %v3015 = vpack.c.bf16 %v2955, %v2954
        %v3016 = vpack.c.bf16 %v2701, %v2700
        %v3017 = vpack.c.bf16 %v2733, %v2732
        %v3018 = vpack.c.bf16 %v2765, %v2764
        %v3019 = vpack.c.bf16 %v2797, %v2796
        %v3020 = vpack.c.bf16 %v2829, %v2828
        %v3021 = vpack.c.bf16 %v2861, %v2860
        %v3022 = vpack.c.bf16 %v2893, %v2892
        %v3023 = vpack.c.bf16 %v2925, %v2924
        %v3024 = vpack.c.bf16 %v2957, %v2956
        %v3025 = vpack.c.bf16 %v2703, %v2702
        %v3026 = vpack.c.bf16 %v2735, %v2734
        %v3027 = vpack.c.bf16 %v2767, %v2766
        %v3028 = vpack.c.bf16 %v2799, %v2798
        %v3029 = vpack.c.bf16 %v2831, %v2830
        %v3030 = vpack.c.bf16 %v2863, %v2862
        %v3031 = vpack.c.bf16 %v2895, %v2894
        %v3032 = vpack.c.bf16 %v2927, %v2926
        %v3033 = vpack.c.bf16 %v2959, %v2958
        %v3034 = vpack.c.bf16 %v2705, %v2704
        %v3035 = vpack.c.bf16 %v2737, %v2736
        %v3036 = vpack.c.bf16 %v2769, %v2768
        %v3037 = vpack.c.bf16 %v2801, %v2800
        %v3038 = vpack.c.bf16 %v2833, %v2832
        %v3039 = vpack.c.bf16 %v2865, %v2864
        %v3040 = vpack.c.bf16 %v2897, %v2896
        %v3041 = vpack.c.bf16 %v2929, %v2928
        %v3042 = vpack.c.bf16 %v2961, %v2960
        %v3043 = vpack.c.bf16 %v2707, %v2706
        %v3044 = vpack.c.bf16 %v2739, %v2738
        %v3045 = vpack.c.bf16 %v2771, %v2770
        %v3046 = vpack.c.bf16 %v2803, %v2802
        %v3047 = vpack.c.bf16 %v2835, %v2834
        %v3048 = vpack.c.bf16 %v2867, %v2866
        %v3049 = vpack.c.bf16 %v2899, %v2898
        %v3050 = vpack.c.bf16 %v2931, %v2930
        %v3051 = vpack.c.bf16 %v2963, %v2962
        %v3052 = vpack.c.bf16 %v2709, %v2708
        %v3053 = vpack.c.bf16 %v2741, %v2740
        %v3054 = vpack.c.bf16 %v2773, %v2772
        %v3055 = vpack.c.bf16 %v2805, %v2804
        %v3056 = vpack.c.bf16 %v2837, %v2836
        %v3057 = vpack.c.bf16 %v2869, %v2868
        %v3058 = vpack.c.bf16 %v2901, %v2900
        %v3059 = vpack.c.bf16 %v2933, %v2932
        %v3060 = vpack.c.bf16 %v2965, %v2964
        %v3061 = vpack.c.bf16 %v2711, %v2710
        %v3062 = vpack.c.bf16 %v2743, %v2742
        %v3063 = vpack.c.bf16 %v2775, %v2774
        %v3064 = vpack.c.bf16 %v2807, %v2806
        %v3065 = vpack.c.bf16 %v2839, %v2838
        %v3066 = vpack.c.bf16 %v2871, %v2870
        %v3067 = vpack.c.bf16 %v2903, %v2902
        %v3068 = vpack.c.bf16 %v2935, %v2934
        %v3069 = vpack.c.bf16 %v2967, %v2966
        %v3070 = vpack.c.bf16 %v2713, %v2712
        %v3071 = vpack.c.bf16 %v2745, %v2744
        %v3072 = vpack.c.bf16 %v2777, %v2776
        %v3073 = vpack.c.bf16 %v2809, %v2808
        %v3074 = vpack.c.bf16 %v2841, %v2840
        %v3075 = vpack.c.bf16 %v2873, %v2872
        %v3076 = vpack.c.bf16 %v2905, %v2904
        %v3077 = vpack.c.bf16 %v2937, %v2936
        %v3078 = vpack.c.bf16 %v2969, %v2968
        %v3079 = vpack.c.bf16 %v2715, %v2714
        %v3080 = vpack.c.bf16 %v2747, %v2746
        %v3081 = vpack.c.bf16 %v2779, %v2778
        %v3082 = vpack.c.bf16 %v2811, %v2810
        %v3083 = vpack.c.bf16 %v2843, %v2842
        %v3084 = vpack.c.bf16 %v2875, %v2874
        %v3085 = vpack.c.bf16 %v2907, %v2906
        %v3086 = vpack.c.bf16 %v2939, %v2938
        %v3087 = vpack.c.bf16 %v2971, %v2970
        %v3088 = vpack.c.bf16 %v2717, %v2716
        %v3089 = vpack.c.bf16 %v2749, %v2748
        %v3090 = vpack.c.bf16 %v2781, %v2780
        %v3091 = vpack.c.bf16 %v2813, %v2812
        %v3092 = vpack.c.bf16 %v2845, %v2844
        %v3093 = vpack.c.bf16 %v2877, %v2876
        %v3094 = vpack.c.bf16 %v2909, %v2908
        %v3095 = vpack.c.bf16 %v2941, %v2940
        %v3096 = vpack.c.bf16 %v2973, %v2972
        %v3097 = vpack.c.bf16 %v2719, %v2718
        %v3098 = vpack.c.bf16 %v2751, %v2750
        %v3099 = vpack.c.bf16 %v2783, %v2782
        %v3100 = vpack.c.bf16 %v2815, %v2814
        %v3101 = vpack.c.bf16 %v2847, %v2846
        %v3102 = vpack.c.bf16 %v2879, %v2878
        %v3103 = vpack.c.bf16 %v2911, %v2910
        %v3104 = vpack.c.bf16 %v2943, %v2942
        %v3105 = vpack.c.bf16 %v2975, %v2974
        %v3106 = vpack.c.bf16 %v2721, %v2720
        %v3107 = vpack.c.bf16 %v2753, %v2752
        %v3108 = vpack.c.bf16 %v2785, %v2784
        %v3109 = vpack.c.bf16 %v2817, %v2816
        %v3110 = vpack.c.bf16 %v2849, %v2848
        %v3111 = vpack.c.bf16 %v2881, %v2880
        %v3112 = vpack.c.bf16 %v2913, %v2912
        %v3113 = vpack.c.bf16 %v2945, %v2944
        %v3114 = vpack.c.bf16 %v2977, %v2976
        %v3115 = vpack.c.bf16 %v2723, %v2722
        %v3116 = vpack.c.bf16 %v2755, %v2754
        %v3117 = vpack.c.bf16 %v2787, %v2786
        %v3118 = vpack.c.bf16 %v2819, %v2818
        %v3119 = vpack.c.bf16 %v2851, %v2850
        %v3120 = vpack.c.bf16 %v2883, %v2882
        %v3121 = vpack.c.bf16 %v2915, %v2914
        %v3122 = vpack.c.bf16 %v2947, %v2946
        %v3123 = vpack.c.bf16 %v2979, %v2978
        %v3124 = vld [vmem:[#allocation9] sm:$0xf]
        %v3125 = vld [vmem:[#allocation9 + $0x4] sm:$0xf]
        %v3126 = vld [vmem:[#allocation9 + $0x8] sm:$0xf]
        %v3127 = vld [vmem:[#allocation9 + $0xc] sm:$0xf]
        %v3128 = vld [vmem:[#allocation9 + $0x10] sm:$0xf]
        %v3129 = vld [vmem:[#allocation9 + $0x14] sm:$0xf]
        %v3130 = vld [vmem:[#allocation9 + $0x18] sm:$0xf]
        %v3131 = vld [vmem:[#allocation9 + $0x1c] sm:$0xf]
        %v3132 = vld [vmem:[#allocation9 + $0x20] sm:$0xf]
        %v3133 = vld [vmem:[#allocation9 + $0x24] sm:$0xf]
        %v3134 = vld [vmem:[#allocation9 + $0x28] sm:$0xf]
        %v3135 = vld [vmem:[#allocation9 + $0x2c] sm:$0xf]
        %v3136 = vld [vmem:[#allocation9 + $0x30] sm:$0xf]
        %v3137 = vld [vmem:[#allocation9 + $0x34] sm:$0xf]
        %v3138 = vld [vmem:[#allocation9 + $0x38] sm:$0xf]
        %v3139 = vld [vmem:[#allocation9 + $0x3c] sm:$0xf]
        %v3140 = vld [vmem:[#allocation9 + $0x40] sm:$0xf]
        %v3141 = vld [vmem:[#allocation9 + $0x44] sm:$0xf]
        %v3142 = vld [vmem:[#allocation9 + $0x48] sm:$0xf]
        %v3143 = vld [vmem:[#allocation9 + $0x4c] sm:$0xf]
        %v3144 = vld [vmem:[#allocation9 + $0x50] sm:$0xf]
        %v3145 = vld [vmem:[#allocation9 + $0x54] sm:$0xf]
        %v3146 = vld [vmem:[#allocation9 + $0x58] sm:$0xf]
        %v3147 = vld [vmem:[#allocation9 + $0x5c] sm:$0xf]
        %v3148 = vld [vmem:[#allocation9 + $0x60] sm:$0xf]
        %v3149 = vld [vmem:[#allocation9 + $0x64] sm:$0xf]
        %v3150 = vld [vmem:[#allocation9 + $0x68] sm:$0xf]
        %v3151 = vld [vmem:[#allocation9 + $0x6c] sm:$0xf]
        %v3152 = vld [vmem:[#allocation9 + $0x70] sm:$0xf]
        %v3153 = vld [vmem:[#allocation9 + $0x74] sm:$0xf]
        %v3154 = vld [vmem:[#allocation9 + $0x78] sm:$0xf]
        %v3155 = vld [vmem:[#allocation9 + $0x7c] sm:$0xf]
        %v3156 = vld [vmem:[#allocation9 + $0x80] sm:$0xf]
        %v3157 = vld [vmem:[#allocation9 + $0x84] sm:$0xf]
        %v3158 = vld [vmem:[#allocation9 + $0x88] sm:$0xf]
        %v3159 = vld [vmem:[#allocation9 + $0x8c] sm:$0xf]
        %v3160 = vld [vmem:[#allocation9 + $0x90] sm:$0xf]
        %v3161 = vld [vmem:[#allocation9 + $0x94] sm:$0xf]
        %v3162 = vld [vmem:[#allocation9 + $0x98] sm:$0xf]
        %v3163 = vld [vmem:[#allocation9 + $0x9c] sm:$0xf]
        %v3164 = vld [vmem:[#allocation9 + $0xa0] sm:$0xf]
        %v3165 = vld [vmem:[#allocation9 + $0xa4] sm:$0xf]
        %v3166 = vld [vmem:[#allocation9 + $0xa8] sm:$0xf]
        %v3167 = vld [vmem:[#allocation9 + $0xac] sm:$0xf]
        %v3168 = vld [vmem:[#allocation9 + $0xb0] sm:$0xf]
        %v3169 = vld [vmem:[#allocation9 + $0xb4] sm:$0xf]
        %v3170 = vld [vmem:[#allocation9 + $0xb8] sm:$0xf]
        %v3171 = vld [vmem:[#allocation9 + $0xbc] sm:$0xf]
        %v3172 = vld [vmem:[#allocation9 + $0xc0] sm:$0xf]
        %v3173 = vld [vmem:[#allocation9 + $0xc4] sm:$0xf]
        %v3174 = vld [vmem:[#allocation9 + $0xc8] sm:$0xf]
        %v3175 = vld [vmem:[#allocation9 + $0xcc] sm:$0xf]
        %v3176 = vld [vmem:[#allocation9 + $0xd0] sm:$0xf]
        %v3177 = vld [vmem:[#allocation9 + $0xd4] sm:$0xf]
        %v3178 = vld [vmem:[#allocation9 + $0xd8] sm:$0xf]
        %v3179 = vld [vmem:[#allocation9 + $0xdc] sm:$0xf]
        %v3180 = vld [vmem:[#allocation9 + $0xe0] sm:$0xf]
        %v3181 = vld [vmem:[#allocation9 + $0xe4] sm:$0xf]
        %v3182 = vld [vmem:[#allocation9 + $0xe8] sm:$0xf]
        %v3183 = vld [vmem:[#allocation9 + $0xec] sm:$0xf]
        %v3184 = vld [vmem:[#allocation9 + $0xf0] sm:$0xf]
        %v3185 = vld [vmem:[#allocation9 + $0xf4] sm:$0xf]
        %v3186 = vld [vmem:[#allocation9 + $0xf8] sm:$0xf]
        %v3187 = vld [vmem:[#allocation9 + $0xfc] sm:$0xf]
        %v3188 = vld [vmem:[#allocation9 + $0x100] sm:$0xf]
        %v3189 = vld [vmem:[#allocation9 + $0x104] sm:$0xf]
        %v3190 = vld [vmem:[#allocation9 + $0x108] sm:$0xf]
        %v3191 = vld [vmem:[#allocation9 + $0x10c] sm:$0xf]
        %v3192 = vld [vmem:[#allocation9 + $0x110] sm:$0xf]
        %v3193 = vld [vmem:[#allocation9 + $0x114] sm:$0xf]
        %v3194 = vld [vmem:[#allocation9 + $0x118] sm:$0xf]
        %v3195 = vld [vmem:[#allocation9 + $0x11c] sm:$0xf]
        %v3196 = vld [vmem:[#allocation9 + $0x120] sm:$0xf]
        %v3197 = vld [vmem:[#allocation9 + $0x124] sm:$0xf]
        %v3198 = vld [vmem:[#allocation9 + $0x128] sm:$0xf]
        %v3199 = vld [vmem:[#allocation9 + $0x12c] sm:$0xf]
        %v3200 = vld [vmem:[#allocation9 + $0x130] sm:$0xf]
        %v3201 = vld [vmem:[#allocation9 + $0x134] sm:$0xf]
        %v3202 = vld [vmem:[#allocation9 + $0x138] sm:$0xf]
        %v3203 = vld [vmem:[#allocation9 + $0x13c] sm:$0xf]
        %v3204 = vld [vmem:[#allocation9 + $0x140] sm:$0xf]
        %v3205 = vld [vmem:[#allocation9 + $0x144] sm:$0xf]
        %v3206 = vld [vmem:[#allocation9 + $0x148] sm:$0xf]
        %v3207 = vld [vmem:[#allocation9 + $0x14c] sm:$0xf]
        %v3208 = vld [vmem:[#allocation9 + $0x150] sm:$0xf]
        %v3209 = vld [vmem:[#allocation9 + $0x154] sm:$0xf]
        %v3210 = vld [vmem:[#allocation9 + $0x158] sm:$0xf]
        %v3211 = vld [vmem:[#allocation9 + $0x15c] sm:$0xf]
        %v3212 = vld [vmem:[#allocation9 + $0x160] sm:$0xf]
        %v3213 = vld [vmem:[#allocation9 + $0x164] sm:$0xf]
        %v3214 = vld [vmem:[#allocation9 + $0x168] sm:$0xf]
        %v3215 = vld [vmem:[#allocation9 + $0x16c] sm:$0xf]
        %v3216 = vld [vmem:[#allocation9 + $0x170] sm:$0xf]
        %v3217 = vld [vmem:[#allocation9 + $0x174] sm:$0xf]
        %v3218 = vld [vmem:[#allocation9 + $0x178] sm:$0xf]
        %v3219 = vld [vmem:[#allocation9 + $0x17c] sm:$0xf]
        %v3220 = vld [vmem:[#allocation9 + $0x180] sm:$0xf]
        %v3221 = vld [vmem:[#allocation9 + $0x184] sm:$0xf]
        %v3222 = vld [vmem:[#allocation9 + $0x188] sm:$0xf]
        %v3223 = vld [vmem:[#allocation9 + $0x18c] sm:$0xf]
        %v3224 = vld [vmem:[#allocation9 + $0x190] sm:$0xf]
        %v3225 = vld [vmem:[#allocation9 + $0x194] sm:$0xf]
        %v3226 = vld [vmem:[#allocation9 + $0x198] sm:$0xf]
        %v3227 = vld [vmem:[#allocation9 + $0x19c] sm:$0xf]
        %v3228 = vld [vmem:[#allocation9 + $0x1a0] sm:$0xf]
        %v3229 = vld [vmem:[#allocation9 + $0x1a4] sm:$0xf]
        %v3230 = vld [vmem:[#allocation9 + $0x1a8] sm:$0xf]
        %v3231 = vld [vmem:[#allocation9 + $0x1ac] sm:$0xf]
        %v3232 = vld [vmem:[#allocation9 + $0x1b0] sm:$0xf]
        %v3233 = vld [vmem:[#allocation9 + $0x1b4] sm:$0xf]
        %v3234 = vld [vmem:[#allocation9 + $0x1b8] sm:$0xf]
        %v3235 = vld [vmem:[#allocation9 + $0x1bc] sm:$0xf]
        %v3236 = vld [vmem:[#allocation9 + $0x1c0] sm:$0xf]
        %v3237 = vld [vmem:[#allocation9 + $0x1c4] sm:$0xf]
        %v3238 = vld [vmem:[#allocation9 + $0x1c8] sm:$0xf]
        %v3239 = vld [vmem:[#allocation9 + $0x1cc] sm:$0xf]
        %v3240 = vld [vmem:[#allocation9 + $0x1d0] sm:$0xf]
        %v3241 = vld [vmem:[#allocation9 + $0x1d4] sm:$0xf]
        %v3242 = vld [vmem:[#allocation9 + $0x1d8] sm:$0xf]
        %v3243 = vld [vmem:[#allocation9 + $0x1dc] sm:$0xf]
        %v3244 = vld [vmem:[#allocation9 + $0x1e0] sm:$0xf]
        %v3245 = vld [vmem:[#allocation9 + $0x1e4] sm:$0xf]
        %v3246 = vld [vmem:[#allocation9 + $0x1e8] sm:$0xf]
        %v3247 = vld [vmem:[#allocation9 + $0x1ec] sm:$0xf]
        %v3248 = vld [vmem:[#allocation9 + $0x1f0] sm:$0xf]
        %v3249 = vld [vmem:[#allocation9 + $0x1f4] sm:$0xf]
        %v3250 = vld [vmem:[#allocation9 + $0x1f8] sm:$0xf]
        %v3251 = vld [vmem:[#allocation9 + $0x1fc] sm:$0xf]
        %v3252 = vld [vmem:[#allocation9 + $0x200] sm:$0xf]
        %v3253 = vld [vmem:[#allocation9 + $0x204] sm:$0xf]
        %v3254 = vld [vmem:[#allocation9 + $0x208] sm:$0xf]
        %v3255 = vld [vmem:[#allocation9 + $0x20c] sm:$0xf]
        %v3256 = vld [vmem:[#allocation9 + $0x210] sm:$0xf]
        %v3257 = vld [vmem:[#allocation9 + $0x214] sm:$0xf]
        %v3258 = vld [vmem:[#allocation9 + $0x218] sm:$0xf]
        %v3259 = vld [vmem:[#allocation9 + $0x21c] sm:$0xf]
        %v3260 = vld [vmem:[#allocation9 + $0x220] sm:$0xf]
        %v3261 = vld [vmem:[#allocation9 + $0x224] sm:$0xf]
        %v3262 = vld [vmem:[#allocation9 + $0x228] sm:$0xf]
        %v3263 = vld [vmem:[#allocation9 + $0x22c] sm:$0xf]
        %v3264 = vld [vmem:[#allocation9 + $0x230] sm:$0xf]
        %v3265 = vld [vmem:[#allocation9 + $0x234] sm:$0xf]
        %v3266 = vld [vmem:[#allocation9 + $0x238] sm:$0xf]
        %v3267 = vld [vmem:[#allocation9 + $0x23c] sm:$0xf]
        %v3269 = vlaneseq
        %v3270 = vshrl.u32 %v3269, 7
        %v3271 = vsub.s32 0, %v3270
        %v3272 = vrot.slane %v2659, %v3271
        %v3418 = vunpack.c.l.b16 %v3124
        %v3419 = vunpack.c.l.b16 %v3125
        %v3420 = vunpack.c.l.b16 %v3126
        %v3421 = vunpack.c.l.b16 %v3127
        %v3422 = vunpack.c.l.b16 %v3128
        %v3423 = vunpack.c.l.b16 %v3129
        %v3424 = vunpack.c.l.b16 %v3130
        %v3425 = vunpack.c.l.b16 %v3131
        %v3426 = vunpack.c.l.b16 %v3132
        %v3427 = vunpack.c.l.b16 %v3133
        %v3428 = vunpack.c.l.b16 %v3134
        %v3429 = vunpack.c.l.b16 %v3135
        %v3430 = vunpack.c.l.b16 %v3136
        %v3431 = vunpack.c.l.b16 %v3137
        %v3432 = vunpack.c.l.b16 %v3138
        %v3433 = vunpack.c.l.b16 %v3139
        %v3434 = vunpack.c.l.b16 %v3140
        %v3435 = vunpack.c.l.b16 %v3141
        %v3436 = vunpack.c.l.b16 %v3142
        %v3437 = vunpack.c.l.b16 %v3143
        %v3438 = vunpack.c.l.b16 %v3144
        %v3439 = vunpack.c.l.b16 %v3145
        %v3440 = vunpack.c.l.b16 %v3146
        %v3441 = vunpack.c.l.b16 %v3147
        %v3442 = vunpack.c.l.b16 %v3148
        %v3443 = vunpack.c.l.b16 %v3149
        %v3444 = vunpack.c.l.b16 %v3150
        %v3445 = vunpack.c.l.b16 %v3151
        %v3446 = vunpack.c.l.b16 %v3152
        %v3447 = vunpack.c.l.b16 %v3153
        %v3448 = vunpack.c.l.b16 %v3154
        %v3449 = vunpack.c.l.b16 %v3155
        %v3450 = vunpack.c.l.b16 %v3156
        %v3451 = vunpack.c.l.b16 %v3157
        %v3452 = vunpack.c.l.b16 %v3158
        %v3453 = vunpack.c.l.b16 %v3159
        %v3454 = vunpack.c.l.b16 %v3160
        %v3455 = vunpack.c.l.b16 %v3161
        %v3456 = vunpack.c.l.b16 %v3162
        %v3457 = vunpack.c.l.b16 %v3163
        %v3458 = vunpack.c.l.b16 %v3164
        %v3459 = vunpack.c.l.b16 %v3165
        %v3460 = vunpack.c.l.b16 %v3166
        %v3461 = vunpack.c.l.b16 %v3167
        %v3462 = vunpack.c.l.b16 %v3168
        %v3463 = vunpack.c.l.b16 %v3169
        %v3464 = vunpack.c.l.b16 %v3170
        %v3465 = vunpack.c.l.b16 %v3171
        %v3466 = vunpack.c.l.b16 %v3172
        %v3467 = vunpack.c.l.b16 %v3173
        %v3468 = vunpack.c.l.b16 %v3174
        %v3469 = vunpack.c.l.b16 %v3175
        %v3470 = vunpack.c.l.b16 %v3176
        %v3471 = vunpack.c.l.b16 %v3177
        %v3472 = vunpack.c.l.b16 %v3178
        %v3473 = vunpack.c.l.b16 %v3179
        %v3474 = vunpack.c.l.b16 %v3180
        %v3475 = vunpack.c.l.b16 %v3181
        %v3476 = vunpack.c.l.b16 %v3182
        %v3477 = vunpack.c.l.b16 %v3183
        %v3478 = vunpack.c.l.b16 %v3184
        %v3479 = vunpack.c.l.b16 %v3185
        %v3480 = vunpack.c.l.b16 %v3186
        %v3481 = vunpack.c.l.b16 %v3187
        %v3482 = vunpack.c.l.b16 %v3188
        %v3483 = vunpack.c.l.b16 %v3189
        %v3484 = vunpack.c.l.b16 %v3190
        %v3485 = vunpack.c.l.b16 %v3191
        %v3486 = vunpack.c.l.b16 %v3192
        %v3487 = vunpack.c.l.b16 %v3193
        %v3488 = vunpack.c.l.b16 %v3194
        %v3489 = vunpack.c.l.b16 %v3195
        %v3490 = vunpack.c.l.b16 %v3196
        %v3491 = vunpack.c.l.b16 %v3197
        %v3492 = vunpack.c.l.b16 %v3198
        %v3493 = vunpack.c.l.b16 %v3199
        %v3494 = vunpack.c.l.b16 %v3200
        %v3495 = vunpack.c.l.b16 %v3201
        %v3496 = vunpack.c.l.b16 %v3202
        %v3497 = vunpack.c.l.b16 %v3203
        %v3498 = vunpack.c.l.b16 %v3204
        %v3499 = vunpack.c.l.b16 %v3205
        %v3500 = vunpack.c.l.b16 %v3206
        %v3501 = vunpack.c.l.b16 %v3207
        %v3502 = vunpack.c.l.b16 %v3208
        %v3503 = vunpack.c.l.b16 %v3209
        %v3504 = vunpack.c.l.b16 %v3210
        %v3505 = vunpack.c.l.b16 %v3211
        %v3506 = vunpack.c.l.b16 %v3212
        %v3507 = vunpack.c.l.b16 %v3213
        %v3508 = vunpack.c.l.b16 %v3214
        %v3509 = vunpack.c.l.b16 %v3215
        %v3510 = vunpack.c.l.b16 %v3216
        %v3511 = vunpack.c.l.b16 %v3217
        %v3512 = vunpack.c.l.b16 %v3218
        %v3513 = vunpack.c.l.b16 %v3219
        %v3514 = vunpack.c.l.b16 %v3220
        %v3515 = vunpack.c.l.b16 %v3221
        %v3516 = vunpack.c.l.b16 %v3222
        %v3517 = vunpack.c.l.b16 %v3223
        %v3518 = vunpack.c.l.b16 %v3224
        %v3519 = vunpack.c.l.b16 %v3225
        %v3520 = vunpack.c.l.b16 %v3226
        %v3521 = vunpack.c.l.b16 %v3227
        %v3522 = vunpack.c.l.b16 %v3228
        %v3523 = vunpack.c.l.b16 %v3229
        %v3524 = vunpack.c.l.b16 %v3230
        %v3525 = vunpack.c.l.b16 %v3231
        %v3526 = vunpack.c.l.b16 %v3232
        %v3527 = vunpack.c.l.b16 %v3233
        %v3528 = vunpack.c.l.b16 %v3234
        %v3529 = vunpack.c.l.b16 %v3235
        %v3530 = vunpack.c.l.b16 %v3236
        %v3531 = vunpack.c.l.b16 %v3237
        %v3532 = vunpack.c.l.b16 %v3238
        %v3533 = vunpack.c.l.b16 %v3239
        %v3534 = vunpack.c.l.b16 %v3240
        %v3535 = vunpack.c.l.b16 %v3241
        %v3536 = vunpack.c.l.b16 %v3242
        %v3537 = vunpack.c.l.b16 %v3243
        %v3538 = vunpack.c.l.b16 %v3244
        %v3539 = vunpack.c.l.b16 %v3245
        %v3540 = vunpack.c.l.b16 %v3246
        %v3541 = vunpack.c.l.b16 %v3247
        %v3542 = vunpack.c.l.b16 %v3248
        %v3543 = vunpack.c.l.b16 %v3249
        %v3544 = vunpack.c.l.b16 %v3250
        %v3545 = vunpack.c.l.b16 %v3251
        %v3546 = vunpack.c.l.b16 %v3252
        %v3547 = vunpack.c.l.b16 %v3253
        %v3548 = vunpack.c.l.b16 %v3254
        %v3549 = vunpack.c.l.b16 %v3255
        %v3550 = vunpack.c.l.b16 %v3256
        %v3551 = vunpack.c.l.b16 %v3257
        %v3552 = vunpack.c.l.b16 %v3258
        %v3553 = vunpack.c.l.b16 %v3259
        %v3554 = vunpack.c.l.b16 %v3260
        %v3555 = vunpack.c.l.b16 %v3261
        %v3556 = vunpack.c.l.b16 %v3262
        %v3557 = vunpack.c.l.b16 %v3263
        %v3558 = vunpack.c.l.b16 %v3264
        %v3559 = vunpack.c.l.b16 %v3265
        %v3560 = vunpack.c.l.b16 %v3266
        %v3561 = vunpack.c.l.b16 %v3267
        %v3562 = vpack.c.b16 %v3419, %v3418
        %v3563 = vpack.c.b16 %v3421, %v3420
        %v3564 = vpack.c.b16 %v3423, %v3422
        %v3565 = vpack.c.b16 %v3425, %v3424
        %v3566 = vpack.c.b16 %v3427, %v3426
        %v3567 = vpack.c.b16 %v3429, %v3428
        %v3568 = vpack.c.b16 %v3431, %v3430
        %v3569 = vpack.c.b16 %v3433, %v3432
        %v3570 = vpack.c.b16 %v3435, %v3434
        %v3571 = vpack.c.b16 %v3437, %v3436
        %v3572 = vpack.c.b16 %v3439, %v3438
        %v3573 = vpack.c.b16 %v3441, %v3440
        %v3574 = vpack.c.b16 %v3443, %v3442
        %v3575 = vpack.c.b16 %v3445, %v3444
        %v3576 = vpack.c.b16 %v3447, %v3446
        %v3577 = vpack.c.b16 %v3449, %v3448
        %v3578 = vpack.c.b16 %v3451, %v3450
        %v3579 = vpack.c.b16 %v3453, %v3452
        %v3580 = vpack.c.b16 %v3455, %v3454
        %v3581 = vpack.c.b16 %v3457, %v3456
        %v3582 = vpack.c.b16 %v3459, %v3458
        %v3583 = vpack.c.b16 %v3461, %v3460
        %v3584 = vpack.c.b16 %v3463, %v3462
        %v3585 = vpack.c.b16 %v3465, %v3464
        %v3586 = vpack.c.b16 %v3467, %v3466
        %v3587 = vpack.c.b16 %v3469, %v3468
        %v3588 = vpack.c.b16 %v3471, %v3470
        %v3589 = vpack.c.b16 %v3473, %v3472
        %v3590 = vpack.c.b16 %v3475, %v3474
        %v3591 = vpack.c.b16 %v3477, %v3476
        %v3592 = vpack.c.b16 %v3479, %v3478
        %v3593 = vpack.c.b16 %v3481, %v3480
        %v3594 = vpack.c.b16 %v3483, %v3482
        %v3595 = vpack.c.b16 %v3485, %v3484
        %v3596 = vpack.c.b16 %v3487, %v3486
        %v3597 = vpack.c.b16 %v3489, %v3488
        %v3598 = vpack.c.b16 %v3491, %v3490
        %v3599 = vpack.c.b16 %v3493, %v3492
        %v3600 = vpack.c.b16 %v3495, %v3494
        %v3601 = vpack.c.b16 %v3497, %v3496
        %v3602 = vpack.c.b16 %v3499, %v3498
        %v3603 = vpack.c.b16 %v3501, %v3500
        %v3604 = vpack.c.b16 %v3503, %v3502
        %v3605 = vpack.c.b16 %v3505, %v3504
        %v3606 = vpack.c.b16 %v3507, %v3506
        %v3607 = vpack.c.b16 %v3509, %v3508
        %v3608 = vpack.c.b16 %v3511, %v3510
        %v3609 = vpack.c.b16 %v3513, %v3512
        %v3610 = vpack.c.b16 %v3515, %v3514
        %v3611 = vpack.c.b16 %v3517, %v3516
        %v3612 = vpack.c.b16 %v3519, %v3518
        %v3613 = vpack.c.b16 %v3521, %v3520
        %v3614 = vpack.c.b16 %v3523, %v3522
        %v3615 = vpack.c.b16 %v3525, %v3524
        %v3616 = vpack.c.b16 %v3527, %v3526
        %v3617 = vpack.c.b16 %v3529, %v3528
        %v3618 = vpack.c.b16 %v3531, %v3530
        %v3619 = vpack.c.b16 %v3533, %v3532
        %v3620 = vpack.c.b16 %v3535, %v3534
        %v3621 = vpack.c.b16 %v3537, %v3536
        %v3622 = vpack.c.b16 %v3539, %v3538
        %v3623 = vpack.c.b16 %v3541, %v3540
        %v3624 = vpack.c.b16 %v3543, %v3542
        %v3625 = vpack.c.b16 %v3545, %v3544
        %v3626 = vpack.c.b16 %v3547, %v3546
        %v3627 = vpack.c.b16 %v3549, %v3548
        %v3628 = vpack.c.b16 %v3551, %v3550
        %v3629 = vpack.c.b16 %v3553, %v3552
        %v3630 = vpack.c.b16 %v3555, %v3554
        %v3631 = vpack.c.b16 %v3557, %v3556
        %v3632 = vpack.c.b16 %v3559, %v3558
        %v3633 = vpack.c.b16 %v3561, %v3560
        %3706 = vmatprep.subr.bf16.mxu0 0
        %3707 = vmatpush1.bf16.msra.mxu0 %v3562
        %3708 = vmatprep.subr.bf16.mxu0 0
        %3709 = vmatpush1.bf16.msra.mxu0 %v3563
        %3710 = vmatprep.subr.bf16.mxu0 0
        %3711 = vmatpush1.bf16.msra.mxu0 %v3564
        %3712 = vmatprep.subr.bf16.mxu0 0
        %3713 = vmatpush1.bf16.msra.mxu0 %v3565
        %3714 = vmatprep.subr.bf16.mxu0 0
        %3715 = vmatpush1.bf16.msra.mxu0 %v3566
        %3716 = vmatprep.subr.bf16.mxu0 0
        %3717 = vmatpush1.bf16.msra.mxu0 %v3567
        %3718 = vmatprep.subr.bf16.mxu0 0
        %3719 = vmatpush1.bf16.msra.mxu0 %v3568
        %3720 = vmatprep.subr.bf16.mxu0 0
        %3721 = vmatpush1.bf16.msra.mxu0 %v3569
        %3722 = vmatprep.subr.bf16.mxu0 0
        %3723 = vmatpush1.bf16.msra.mxu0 %v3570
        %3724 = vmatprep.subr.bf16.mxu0 0
        %3725 = vmatpush1.bf16.msra.mxu0 %v3571
        %3726 = vmatprep.subr.bf16.mxu0 0
        %3727 = vmatpush1.bf16.msra.mxu0 %v3572
        %3728 = vmatprep.subr.bf16.mxu0 0
        %3729 = vmatpush1.bf16.msra.mxu0 %v3573
        %3730 = vmatprep.subr.bf16.mxu0 0
        %3731 = vmatpush1.bf16.msra.mxu0 %v3574
        %3732 = vmatprep.subr.bf16.mxu0 0
        %3733 = vmatpush1.bf16.msra.mxu0 %v3575
        %3734 = vmatprep.subr.bf16.mxu0 0
        %3735 = vmatpush1.bf16.msra.mxu0 %v3576
        %3736 = vmatprep.subr.bf16.mxu0 0
        %3737 = vmatpush1.bf16.msra.mxu0 %v3577
        %3738 = vmatprep.mubr.bf16.mxu0 %v2981
        %3739 = vmatmul.mubr.bf16.gmra.mrb[0].mxu0 %v2980
        %v3740 = vpop.f32.mrb[0].mxu0
        %v3741 = vadd.f32 %v3272, %v3740
        %v3742 = vpop.f32.mrb[0].mxu0
        %v3743 = vpop.f32.mrb[0].mxu0
        %v3744 = vadd.f32 %v3272, %v3743
        %v3745 = vpop.f32.mrb[0].mxu0
        %3746 = vmatprep.mubr.bf16.mxu0 %v2990
        %3747 = vmatmul.mubr.bf16.gmra.mrb[0].mxu0 %v2989
        %v3748 = vpop.f32.mrb[0].mxu0
        %v3749 = vadd.f32 %v3272, %v3748
        %v3750 = vpop.f32.mrb[0].mxu0
        %v3751 = vpop.f32.mrb[0].mxu0
        %v3752 = vadd.f32 %v3272, %v3751
        %v3753 = vpop.f32.mrb[0].mxu0
        %3754 = vmatprep.mubr.bf16.mxu0 %v2999
        %3755 = vmatmul.mubr.bf16.gmra.mrb[0].mxu0 %v2998
        %v3756 = vpop.f32.mrb[0].mxu0
        %v3757 = vadd.f32 %v3272, %v3756
        %v3758 = vpop.f32.mrb[0].mxu0
        %v3759 = vpop.f32.mrb[0].mxu0
        %v3760 = vadd.f32 %v3272, %v3759
        %v3761 = vpop.f32.mrb[0].mxu0
        %3762 = vmatprep.mubr.bf16.mxu0 %v3008
        %3763 = vmatmul.mubr.bf16.gmra.mrb[0].mxu0 %v3007
        %v3764 = vpop.f32.mrb[0].mxu0
        %v3765 = vadd.f32 %v3272, %v3764
        %v3766 = vpop.f32.mrb[0].mxu0
        %v3767 = vpop.f32.mrb[0].mxu0
        %v3768 = vadd.f32 %v3272, %v3767
        %v3769 = vpop.f32.mrb[0].mxu0
        %3770 = vmatprep.mubr.bf16.mxu0 %v3017
        %3771 = vmatmul.mubr.bf16.gmra.mrb[0].mxu0 %v3016
        %v3772 = vpop.f32.mrb[0].mxu0
        %v3773 = vadd.f32 %v3272, %v3772
        %v3774 = vpop.f32.mrb[0].mxu0
        %v3775 = vpop.f32.mrb[0].mxu0
        %v3776 = vadd.f32 %v3272, %v3775
        %v3777 = vpop.f32.mrb[0].mxu0
        %3778 = vmatprep.mubr.bf16.mxu0 %v3026
        %3779 = vmatmul.mubr.bf16.gmra.mrb[0].mxu0 %v3025
        %v3780 = vpop.f32.mrb[0].mxu0
        %v3781 = vadd.f32 %v3272, %v3780
        %v3782 = vpop.f32.mrb[0].mxu0
        %v3783 = vpop.f32.mrb[0].mxu0
        %v3784 = vadd.f32 %v3272, %v3783
        %v3785 = vpop.f32.mrb[0].mxu0
        %3786 = vmatprep.mubr.bf16.mxu0 %v3035
        %3787 = vmatmul.mubr.bf16.gmra.mrb[0].mxu0 %v3034
        %v3788 = vpop.f32.mrb[0].mxu0
        %v3789 = vadd.f32 %v3272, %v3788
        %v3790 = vpop.f32.mrb[0].mxu0
        %v3791 = vpop.f32.mrb[0].mxu0
        %v3792 = vadd.f32 %v3272, %v3791
        %v3793 = vpop.f32.mrb[0].mxu0
        %3794 = vmatprep.mubr.bf16.mxu0 %v3044
        %3795 = vmatmul.mubr.bf16.gmra.mrb[0].mxu0 %v3043
        %v3796 = vpop.f32.mrb[0].mxu0
        %v3797 = vadd.f32 %v3272, %v3796
        %v3798 = vpop.f32.mrb[0].mxu0
        %v3799 = vpop.f32.mrb[0].mxu0
        %v3800 = vadd.f32 %v3272, %v3799
        %v3801 = vpop.f32.mrb[0].mxu0
        %3802 = vmatprep.mubr.bf16.mxu0 %v3053
        %3803 = vmatmul.mubr.bf16.gmra.mrb[0].mxu0 %v3052
        %v3804 = vpop.f32.mrb[0].mxu0
        %v3805 = vadd.f32 %v3272, %v3804
        %v3806 = vpop.f32.mrb[0].mxu0
        %v3807 = vpop.f32.mrb[0].mxu0
        %v3808 = vadd.f32 %v3272, %v3807
        %v3809 = vpop.f32.mrb[0].mxu0
        %3810 = vmatprep.mubr.bf16.mxu0 %v3062
        %3811 = vmatmul.mubr.bf16.gmra.mrb[0].mxu0 %v3061
        %v3812 = vpop.f32.mrb[0].mxu0
        %v3813 = vadd.f32 %v3272, %v3812
        %v3814 = vpop.f32.mrb[0].mxu0
        %v3815 = vpop.f32.mrb[0].mxu0
        %v3816 = vadd.f32 %v3272, %v3815
        %v3817 = vpop.f32.mrb[0].mxu0
        %3818 = vmatprep.mubr.bf16.mxu0 %v3071
        %3819 = vmatmul.mubr.bf16.gmra.mrb[0].mxu0 %v3070
        %v3820 = vpop.f32.mrb[0].mxu0
        %v3821 = vadd.f32 %v3272, %v3820
        %v3822 = vpop.f32.mrb[0].mxu0
        %v3823 = vpop.f32.mrb[0].mxu0
        %v3824 = vadd.f32 %v3272, %v3823
        %v3825 = vpop.f32.mrb[0].mxu0
        %3826 = vmatprep.mubr.bf16.mxu0 %v3080
        %3827 = vmatmul.mubr.bf16.gmra.mrb[0].mxu0 %v3079
        %v3828 = vpop.f32.mrb[0].mxu0
        %v3829 = vadd.f32 %v3272, %v3828
        %v3830 = vpop.f32.mrb[0].mxu0
        %v3831 = vpop.f32.mrb[0].mxu0
        %v3832 = vadd.f32 %v3272, %v3831
        %v3833 = vpop.f32.mrb[0].mxu0
        %3834 = vmatprep.mubr.bf16.mxu0 %v3089
        %3835 = vmatmul.mubr.bf16.gmra.mrb[0].mxu0 %v3088
        %v3836 = vpop.f32.mrb[0].mxu0
        %v3837 = vadd.f32 %v3272, %v3836
        %v3838 = vpop.f32.mrb[0].mxu0
        %v3839 = vpop.f32.mrb[0].mxu0
        %v3840 = vadd.f32 %v3272, %v3839
        %v3841 = vpop.f32.mrb[0].mxu0
        %3842 = vmatprep.mubr.bf16.mxu0 %v3098
        %3843 = vmatmul.mubr.bf16.gmra.mrb[0].mxu0 %v3097
        %v3844 = vpop.f32.mrb[0].mxu0
        %v3845 = vadd.f32 %v3272, %v3844
        %v3846 = vpop.f32.mrb[0].mxu0
        %v3847 = vpop.f32.mrb[0].mxu0
        %v3848 = vadd.f32 %v3272, %v3847
        %v3849 = vpop.f32.mrb[0].mxu0
        %3850 = vmatprep.mubr.bf16.mxu0 %v3107
        %3851 = vmatmul.mubr.bf16.gmra.mrb[0].mxu0 %v3106
        %v3852 = vpop.f32.mrb[0].mxu0
        %v3853 = vadd.f32 %v3272, %v3852
        %v3854 = vpop.f32.mrb[0].mxu0
        %v3855 = vpop.f32.mrb[0].mxu0
        %v3856 = vadd.f32 %v3272, %v3855
        %v3857 = vpop.f32.mrb[0].mxu0
        %3858 = vmatprep.mubr.bf16.mxu0 %v3116
        %3859 = vmatmul.mubr.bf16.gmra.mrb[0].mxu0 %v3115
        %v3860 = vpop.f32.mrb[0].mxu0
        %v3861 = vadd.f32 %v3272, %v3860
        %v3862 = vpop.f32.mrb[0].mxu0
        %v3863 = vpop.f32.mrb[0].mxu0
        %v3864 = vadd.f32 %v3272, %v3863
        %v3865 = vpop.f32.mrb[0].mxu0
        %3866 = vdwg.mxu0
        %3867 = vmatprep.subr.bf16.mxu0 0
        %3868 = vmatpush1.bf16.msra.mxu0 %v3578
        %3869 = vmatprep.subr.bf16.mxu0 0
        %3870 = vmatpush1.bf16.msra.mxu0 %v3579
        %3871 = vmatprep.subr.bf16.mxu0 0
        %3872 = vmatpush1.bf16.msra.mxu0 %v3580
        %3873 = vmatprep.subr.bf16.mxu0 0
        %3874 = vmatpush1.bf16.msra.mxu0 %v3581
        %3875 = vmatprep.subr.bf16.mxu0 0
        %3876 = vmatpush1.bf16.msra.mxu0 %v3582
        %3877 = vmatprep.subr.bf16.mxu0 0
        %3878 = vmatpush1.bf16.msra.mxu0 %v3583
        %3879 = vmatprep.subr.bf16.mxu0 0
        %3880 = vmatpush1.bf16.msra.mxu0 %v3584
        %3881 = vmatprep.subr.bf16.mxu0 0
        %3882 = vmatpush1.bf16.msra.mxu0 %v3585
        %3883 = vmatprep.subr.bf16.mxu0 0
        %3884 = vmatpush1.bf16.msra.mxu0 %v3586
        %3885 = vmatprep.subr.bf16.mxu0 0
        %3886 = vmatpush1.bf16.msra.mxu0 %v3587
        %3887 = vmatprep.subr.bf16.mxu0 0
        %3888 = vmatpush1.bf16.msra.mxu0 %v3588
        %3889 = vmatprep.subr.bf16.mxu0 0
        %3890 = vmatpush1.bf16.msra.mxu0 %v3589
        %3891 = vmatprep.subr.bf16.mxu0 0
        %3892 = vmatpush1.bf16.msra.mxu0 %v3590
        %3893 = vmatprep.subr.bf16.mxu0 0
        %3894 = vmatpush1.bf16.msra.mxu0 %v3591
        %3895 = vmatprep.subr.bf16.mxu0 0
        %3896 = vmatpush1.bf16.msra.mxu0 %v3592
        %3897 = vmatprep.subr.bf16.mxu0 0
        %3898 = vmatpush1.bf16.msra.mxu0 %v3593
        %3899 = vmatprep.mubr.bf16.mxu0 %v2983
        %3900 = vmatmul.mubr.bf16.gmra.mrb[0].mxu0 %v2982
        %v3901 = vpop.f32.mrb[0].mxu0
        %v3902 = vadd.f32 %v3741, %v3901
        %v3903 = vpop.f32.mrb[0].mxu0
        %v3904 = vpop.f32.mrb[0].mxu0
        %v3905 = vadd.f32 %v3744, %v3904
        %v3906 = vpop.f32.mrb[0].mxu0
        %3907 = vmatprep.mubr.bf16.mxu0 %v2992
        %3908 = vmatmul.mubr.bf16.gmra.mrb[0].mxu0 %v2991
        %v3909 = vpop.f32.mrb[0].mxu0
        %v3910 = vadd.f32 %v3749, %v3909
        %v3911 = vpop.f32.mrb[0].mxu0
        %v3912 = vpop.f32.mrb[0].mxu0
        %v3913 = vadd.f32 %v3752, %v3912
        %v3914 = vpop.f32.mrb[0].mxu0
        %3915 = vmatprep.mubr.bf16.mxu0 %v3001
        %3916 = vmatmul.mubr.bf16.gmra.mrb[0].mxu0 %v3000
        %v3917 = vpop.f32.mrb[0].mxu0
        %v3918 = vadd.f32 %v3757, %v3917
        %v3919 = vpop.f32.mrb[0].mxu0
        %v3920 = vpop.f32.mrb[0].mxu0
        %v3921 = vadd.f32 %v3760, %v3920
        %v3922 = vpop.f32.mrb[0].mxu0
        %3923 = vmatprep.mubr.bf16.mxu0 %v3010
        %3924 = vmatmul.mubr.bf16.gmra.mrb[0].mxu0 %v3009
        %v3925 = vpop.f32.mrb[0].mxu0
        %v3926 = vadd.f32 %v3765, %v3925
        %v3927 = vpop.f32.mrb[0].mxu0
        %v3928 = vpop.f32.mrb[0].mxu0
        %v3929 = vadd.f32 %v3768, %v3928
        %v3930 = vpop.f32.mrb[0].mxu0
        %3931 = vmatprep.mubr.bf16.mxu0 %v3019
        %3932 = vmatmul.mubr.bf16.gmra.mrb[0].mxu0 %v3018
        %v3933 = vpop.f32.mrb[0].mxu0
        %v3934 = vadd.f32 %v3773, %v3933
        %v3935 = vpop.f32.mrb[0].mxu0
        %v3936 = vpop.f32.mrb[0].mxu0
        %v3937 = vadd.f32 %v3776, %v3936
        %v3938 = vpop.f32.mrb[0].mxu0
        %3939 = vmatprep.mubr.bf16.mxu0 %v3028
        %3940 = vmatmul.mubr.bf16.gmra.mrb[0].mxu0 %v3027
        %v3941 = vpop.f32.mrb[0].mxu0
        %v3942 = vadd.f32 %v3781, %v3941
        %v3943 = vpop.f32.mrb[0].mxu0
        %v3944 = vpop.f32.mrb[0].mxu0
        %v3945 = vadd.f32 %v3784, %v3944
        %v3946 = vpop.f32.mrb[0].mxu0
        %3947 = vmatprep.mubr.bf16.mxu0 %v3037
        %3948 = vmatmul.mubr.bf16.gmra.mrb[0].mxu0 %v3036
        %v3949 = vpop.f32.mrb[0].mxu0
        %v3950 = vadd.f32 %v3789, %v3949
        %v3951 = vpop.f32.mrb[0].mxu0
        %v3952 = vpop.f32.mrb[0].mxu0
        %v3953 = vadd.f32 %v3792, %v3952
        %v3954 = vpop.f32.mrb[0].mxu0
        %3955 = vmatprep.mubr.bf16.mxu0 %v3046
        %3956 = vmatmul.mubr.bf16.gmra.mrb[0].mxu0 %v3045
        %v3957 = vpop.f32.mrb[0].mxu0
        %v3958 = vadd.f32 %v3797, %v3957
        %v3959 = vpop.f32.mrb[0].mxu0
        %v3960 = vpop.f32.mrb[0].mxu0
        %v3961 = vadd.f32 %v3800, %v3960
        %v3962 = vpop.f32.mrb[0].mxu0
        %3963 = vmatprep.mubr.bf16.mxu0 %v3055
        %3964 = vmatmul.mubr.bf16.gmra.mrb[0].mxu0 %v3054
        %v3965 = vpop.f32.mrb[0].mxu0
        %v3966 = vadd.f32 %v3805, %v3965
        %v3967 = vpop.f32.mrb[0].mxu0
        %v3968 = vpop.f32.mrb[0].mxu0
        %v3969 = vadd.f32 %v3808, %v3968
        %v3970 = vpop.f32.mrb[0].mxu0
        %3971 = vmatprep.mubr.bf16.mxu0 %v3064
        %3972 = vmatmul.mubr.bf16.gmra.mrb[0].mxu0 %v3063
        %v3973 = vpop.f32.mrb[0].mxu0
        %v3974 = vadd.f32 %v3813, %v3973
        %v3975 = vpop.f32.mrb[0].mxu0
        %v3976 = vpop.f32.mrb[0].mxu0
        %v3977 = vadd.f32 %v3816, %v3976
        %v3978 = vpop.f32.mrb[0].mxu0
        %3979 = vmatprep.mubr.bf16.mxu0 %v3073
        %3980 = vmatmul.mubr.bf16.gmra.mrb[0].mxu0 %v3072
        %v3981 = vpop.f32.mrb[0].mxu0
        %v3982 = vadd.f32 %v3821, %v3981
        %v3983 = vpop.f32.mrb[0].mxu0
        %v3984 = vpop.f32.mrb[0].mxu0
        %v3985 = vadd.f32 %v3824, %v3984
        %v3986 = vpop.f32.mrb[0].mxu0
        %3987 = vmatprep.mubr.bf16.mxu0 %v3082
        %3988 = vmatmul.mubr.bf16.gmra.mrb[0].mxu0 %v3081
        %v3989 = vpop.f32.mrb[0].mxu0
        %v3990 = vadd.f32 %v3829, %v3989
        %v3991 = vpop.f32.mrb[0].mxu0
        %v3992 = vpop.f32.mrb[0].mxu0
        %v3993 = vadd.f32 %v3832, %v3992
        %v3994 = vpop.f32.mrb[0].mxu0
        %3995 = vmatprep.mubr.bf16.mxu0 %v3091
        %3996 = vmatmul.mubr.bf16.gmra.mrb[0].mxu0 %v3090
        %v3997 = vpop.f32.mrb[0].mxu0
        %v3998 = vadd.f32 %v3837, %v3997
        %v3999 = vpop.f32.mrb[0].mxu0
        %v4000 = vpop.f32.mrb[0].mxu0
        %v4001 = vadd.f32 %v3840, %v4000
        %v4002 = vpop.f32.mrb[0].mxu0
        %4003 = vmatprep.mubr.bf16.mxu0 %v3100
        %4004 = vmatmul.mubr.bf16.gmra.mrb[0].mxu0 %v3099
        %v4005 = vpop.f32.mrb[0].mxu0
        %v4006 = vadd.f32 %v3845, %v4005
        %v4007 = vpop.f32.mrb[0].mxu0
        %v4008 = vpop.f32.mrb[0].mxu0
        %v4009 = vadd.f32 %v3848, %v4008
        %v4010 = vpop.f32.mrb[0].mxu0
        %4011 = vmatprep.mubr.bf16.mxu0 %v3109
        %4012 = vmatmul.mubr.bf16.gmra.mrb[0].mxu0 %v3108
        %v4013 = vpop.f32.mrb[0].mxu0
        %v4014 = vadd.f32 %v3853, %v4013
        %v4015 = vpop.f32.mrb[0].mxu0
        %v4016 = vpop.f32.mrb[0].mxu0
        %v4017 = vadd.f32 %v3856, %v4016
        %v4018 = vpop.f32.mrb[0].mxu0
        %4019 = vmatprep.mubr.bf16.mxu0 %v3118
        %4020 = vmatmul.mubr.bf16.gmra.mrb[0].mxu0 %v3117
        %v4021 = vpop.f32.mrb[0].mxu0
        %v4022 = vadd.f32 %v3861, %v4021
        %v4023 = vpop.f32.mrb[0].mxu0
        %v4024 = vpop.f32.mrb[0].mxu0
        %v4025 = vadd.f32 %v3864, %v4024
        %v4026 = vpop.f32.mrb[0].mxu0
        %4027 = vdwg.mxu0
        %4028 = vmatprep.subr.bf16.mxu0 0
        %4029 = vmatpush1.bf16.msra.mxu0 %v3594
        %4030 = vmatprep.subr.bf16.mxu0 0
        %4031 = vmatpush1.bf16.msra.mxu0 %v3595
        %4032 = vmatprep.subr.bf16.mxu0 0
        %4033 = vmatpush1.bf16.msra.mxu0 %v3596
        %4034 = vmatprep.subr.bf16.mxu0 0
        %4035 = vmatpush1.bf16.msra.mxu0 %v3597
        %4036 = vmatprep.subr.bf16.mxu0 0
        %4037 = vmatpush1.bf16.msra.mxu0 %v3598
        %4038 = vmatprep.subr.bf16.mxu0 0
        %4039 = vmatpush1.bf16.msra.mxu0 %v3599
        %4040 = vmatprep.subr.bf16.mxu0 0
        %4041 = vmatpush1.bf16.msra.mxu0 %v3600
        %4042 = vmatprep.subr.bf16.mxu0 0
        %4043 = vmatpush1.bf16.msra.mxu0 %v3601
        %4044 = vmatprep.subr.bf16.mxu0 0
        %4045 = vmatpush1.bf16.msra.mxu0 %v3602
        %4046 = vmatprep.subr.bf16.mxu0 0
        %4047 = vmatpush1.bf16.msra.mxu0 %v3603
        %4048 = vmatprep.subr.bf16.mxu0 0
        %4049 = vmatpush1.bf16.msra.mxu0 %v3604
        %4050 = vmatprep.subr.bf16.mxu0 0
        %4051 = vmatpush1.bf16.msra.mxu0 %v3605
        %4052 = vmatprep.subr.bf16.mxu0 0
        %4053 = vmatpush1.bf16.msra.mxu0 %v3606
        %4054 = vmatprep.subr.bf16.mxu0 0
        %4055 = vmatpush1.bf16.msra.mxu0 %v3607
        %4056 = vmatprep.subr.bf16.mxu0 0
        %4057 = vmatpush1.bf16.msra.mxu0 %v3608
        %4058 = vmatprep.subr.bf16.mxu0 0
        %4059 = vmatpush1.bf16.msra.mxu0 %v3609
        %4060 = vmatprep.mubr.bf16.mxu0 %v2985
        %4061 = vmatmul.mubr.bf16.gmra.mrb[0].mxu0 %v2984
        %v4062 = vpop.f32.mrb[0].mxu0
        %v4063 = vadd.f32 %v3902, %v4062
        %v4064 = vpop.f32.mrb[0].mxu0
        %v4065 = vpop.f32.mrb[0].mxu0
        %v4066 = vadd.f32 %v3905, %v4065
        %v4067 = vpop.f32.mrb[0].mxu0
        %4068 = vmatprep.mubr.bf16.mxu0 %v2994
        %4069 = vmatmul.mubr.bf16.gmra.mrb[0].mxu0 %v2993
        %v4070 = vpop.f32.mrb[0].mxu0
        %v4071 = vadd.f32 %v3910, %v4070
        %v4072 = vpop.f32.mrb[0].mxu0
        %v4073 = vpop.f32.mrb[0].mxu0
        %v4074 = vadd.f32 %v3913, %v4073
        %v4075 = vpop.f32.mrb[0].mxu0
        %4076 = vmatprep.mubr.bf16.mxu0 %v3003
        %4077 = vmatmul.mubr.bf16.gmra.mrb[0].mxu0 %v3002
        %v4078 = vpop.f32.mrb[0].mxu0
        %v4079 = vadd.f32 %v3918, %v4078
        %v4080 = vpop.f32.mrb[0].mxu0
        %v4081 = vpop.f32.mrb[0].mxu0
        %v4082 = vadd.f32 %v3921, %v4081
        %v4083 = vpop.f32.mrb[0].mxu0
        %4084 = vmatprep.mubr.bf16.mxu0 %v3012
        %4085 = vmatmul.mubr.bf16.gmra.mrb[0].mxu0 %v3011
        %v4086 = vpop.f32.mrb[0].mxu0
        %v4087 = vadd.f32 %v3926, %v4086
        %v4088 = vpop.f32.mrb[0].mxu0
        %v4089 = vpop.f32.mrb[0].mxu0
        %v4090 = vadd.f32 %v3929, %v4089
        %v4091 = vpop.f32.mrb[0].mxu0
        %4092 = vmatprep.mubr.bf16.mxu0 %v3021
        %4093 = vmatmul.mubr.bf16.gmra.mrb[0].mxu0 %v3020
        %v4094 = vpop.f32.mrb[0].mxu0
        %v4095 = vadd.f32 %v3934, %v4094
        %v4096 = vpop.f32.mrb[0].mxu0
        %v4097 = vpop.f32.mrb[0].mxu0
        %v4098 = vadd.f32 %v3937, %v4097
        %v4099 = vpop.f32.mrb[0].mxu0
        %4100 = vmatprep.mubr.bf16.mxu0 %v3030
        %4101 = vmatmul.mubr.bf16.gmra.mrb[0].mxu0 %v3029
        %v4102 = vpop.f32.mrb[0].mxu0
        %v4103 = vadd.f32 %v3942, %v4102
        %v4104 = vpop.f32.mrb[0].mxu0
        %v4105 = vpop.f32.mrb[0].mxu0
        %v4106 = vadd.f32 %v3945, %v4105
        %v4107 = vpop.f32.mrb[0].mxu0
        %4108 = vmatprep.mubr.bf16.mxu0 %v3039
        %4109 = vmatmul.mubr.bf16.gmra.mrb[0].mxu0 %v3038
        %v4110 = vpop.f32.mrb[0].mxu0
        %v4111 = vadd.f32 %v3950, %v4110
        %v4112 = vpop.f32.mrb[0].mxu0
        %v4113 = vpop.f32.mrb[0].mxu0
        %v4114 = vadd.f32 %v3953, %v4113
        %v4115 = vpop.f32.mrb[0].mxu0
        %4116 = vmatprep.mubr.bf16.mxu0 %v3048
        %4117 = vmatmul.mubr.bf16.gmra.mrb[0].mxu0 %v3047
        %v4118 = vpop.f32.mrb[0].mxu0
        %v4119 = vadd.f32 %v3958, %v4118
        %v4120 = vpop.f32.mrb[0].mxu0
        %v4121 = vpop.f32.mrb[0].mxu0
        %v4122 = vadd.f32 %v3961, %v4121
        %v4123 = vpop.f32.mrb[0].mxu0
        %4124 = vmatprep.mubr.bf16.mxu0 %v3057
        %4125 = vmatmul.mubr.bf16.gmra.mrb[0].mxu0 %v3056
        %v4126 = vpop.f32.mrb[0].mxu0
        %v4127 = vadd.f32 %v3966, %v4126
        %v4128 = vpop.f32.mrb[0].mxu0
        %v4129 = vpop.f32.mrb[0].mxu0
        %v4130 = vadd.f32 %v3969, %v4129
        %v4131 = vpop.f32.mrb[0].mxu0
        %4132 = vmatprep.mubr.bf16.mxu0 %v3066
        %4133 = vmatmul.mubr.bf16.gmra.mrb[0].mxu0 %v3065
        %v4134 = vpop.f32.mrb[0].mxu0
        %v4135 = vadd.f32 %v3974, %v4134
        %v4136 = vpop.f32.mrb[0].mxu0
        %v4137 = vpop.f32.mrb[0].mxu0
        %v4138 = vadd.f32 %v3977, %v4137
        %v4139 = vpop.f32.mrb[0].mxu0
        %4140 = vmatprep.mubr.bf16.mxu0 %v3075
        %4141 = vmatmul.mubr.bf16.gmra.mrb[0].mxu0 %v3074
        %v4142 = vpop.f32.mrb[0].mxu0
        %v4143 = vadd.f32 %v3982, %v4142
        %v4144 = vpop.f32.mrb[0].mxu0
        %v4145 = vpop.f32.mrb[0].mxu0
        %v4146 = vadd.f32 %v3985, %v4145
        %v4147 = vpop.f32.mrb[0].mxu0
        %4148 = vmatprep.mubr.bf16.mxu0 %v3084
        %4149 = vmatmul.mubr.bf16.gmra.mrb[0].mxu0 %v3083
        %v4150 = vpop.f32.mrb[0].mxu0
        %v4151 = vadd.f32 %v3990, %v4150
        %v4152 = vpop.f32.mrb[0].mxu0
        %v4153 = vpop.f32.mrb[0].mxu0
        %v4154 = vadd.f32 %v3993, %v4153
        %v4155 = vpop.f32.mrb[0].mxu0
        %4156 = vmatprep.mubr.bf16.mxu0 %v3093
        %4157 = vmatmul.mubr.bf16.gmra.mrb[0].mxu0 %v3092
        %v4158 = vpop.f32.mrb[0].mxu0
        %v4159 = vadd.f32 %v3998, %v4158
        %v4160 = vpop.f32.mrb[0].mxu0
        %v4161 = vpop.f32.mrb[0].mxu0
        %v4162 = vadd.f32 %v4001, %v4161
        %v4163 = vpop.f32.mrb[0].mxu0
        %4164 = vmatprep.mubr.bf16.mxu0 %v3102
        %4165 = vmatmul.mubr.bf16.gmra.mrb[0].mxu0 %v3101
        %v4166 = vpop.f32.mrb[0].mxu0
        %v4167 = vadd.f32 %v4006, %v4166
        %v4168 = vpop.f32.mrb[0].mxu0
        %v4169 = vpop.f32.mrb[0].mxu0
        %v4170 = vadd.f32 %v4009, %v4169
        %v4171 = vpop.f32.mrb[0].mxu0
        %4172 = vmatprep.mubr.bf16.mxu0 %v3111
        %4173 = vmatmul.mubr.bf16.gmra.mrb[0].mxu0 %v3110
        %v4174 = vpop.f32.mrb[0].mxu0
        %v4175 = vadd.f32 %v4014, %v4174
        %v4176 = vpop.f32.mrb[0].mxu0
        %v4177 = vpop.f32.mrb[0].mxu0
        %v4178 = vadd.f32 %v4017, %v4177
        %v4179 = vpop.f32.mrb[0].mxu0
        %4180 = vmatprep.mubr.bf16.mxu0 %v3120
        %4181 = vmatmul.mubr.bf16.gmra.mrb[0].mxu0 %v3119
        %v4182 = vpop.f32.mrb[0].mxu0
        %v4183 = vadd.f32 %v4022, %v4182
        %v4184 = vpop.f32.mrb[0].mxu0
        %v4185 = vpop.f32.mrb[0].mxu0
        %v4186 = vadd.f32 %v4025, %v4185
        %v4187 = vpop.f32.mrb[0].mxu0
        %4188 = vdwg.mxu0
        %4189 = vmatprep.subr.bf16.mxu0 0
        %4190 = vmatpush1.bf16.msra.mxu0 %v3610
        %4191 = vmatprep.subr.bf16.mxu0 0
        %4192 = vmatpush1.bf16.msra.mxu0 %v3611
        %4193 = vmatprep.subr.bf16.mxu0 0
        %4194 = vmatpush1.bf16.msra.mxu0 %v3612
        %4195 = vmatprep.subr.bf16.mxu0 0
        %4196 = vmatpush1.bf16.msra.mxu0 %v3613
        %4197 = vmatprep.subr.bf16.mxu0 0
        %4198 = vmatpush1.bf16.msra.mxu0 %v3614
        %4199 = vmatprep.subr.bf16.mxu0 0
        %4200 = vmatpush1.bf16.msra.mxu0 %v3615
        %4201 = vmatprep.subr.bf16.mxu0 0
        %4202 = vmatpush1.bf16.msra.mxu0 %v3616
        %4203 = vmatprep.subr.bf16.mxu0 0
        %4204 = vmatpush1.bf16.msra.mxu0 %v3617
        %4205 = vmatprep.subr.bf16.mxu0 0
        %4206 = vmatpush1.bf16.msra.mxu0 %v3618
        %4207 = vmatprep.subr.bf16.mxu0 0
        %4208 = vmatpush1.bf16.msra.mxu0 %v3619
        %4209 = vmatprep.subr.bf16.mxu0 0
        %4210 = vmatpush1.bf16.msra.mxu0 %v3620
        %4211 = vmatprep.subr.bf16.mxu0 0
        %4212 = vmatpush1.bf16.msra.mxu0 %v3621
        %4213 = vmatprep.subr.bf16.mxu0 0
        %4214 = vmatpush1.bf16.msra.mxu0 %v3622
        %4215 = vmatprep.subr.bf16.mxu0 0
        %4216 = vmatpush1.bf16.msra.mxu0 %v3623
        %4217 = vmatprep.subr.bf16.mxu0 0
        %4218 = vmatpush1.bf16.msra.mxu0 %v3624
        %4219 = vmatprep.subr.bf16.mxu0 0
        %4220 = vmatpush1.bf16.msra.mxu0 %v3625
        %4221 = vmatprep.mubr.bf16.mxu0 %v2987
        %4222 = vmatmul.mubr.bf16.gmra.mrb[0].mxu0 %v2986
        %v4223 = vpop.f32.mrb[0].mxu0
        %v4224 = vadd.f32 %v4063, %v4223
        %v4225 = vpop.f32.mrb[0].mxu0
        %v4226 = vpop.f32.mrb[0].mxu0
        %v4227 = vadd.f32 %v4066, %v4226
        %v4228 = vpop.f32.mrb[0].mxu0
        %4229 = vmatprep.mubr.bf16.mxu0 %v2996
        %4230 = vmatmul.mubr.bf16.gmra.mrb[0].mxu0 %v2995
        %v4231 = vpop.f32.mrb[0].mxu0
        %v4232 = vadd.f32 %v4071, %v4231
        %v4233 = vpop.f32.mrb[0].mxu0
        %v4234 = vpop.f32.mrb[0].mxu0
        %v4235 = vadd.f32 %v4074, %v4234
        %v4236 = vpop.f32.mrb[0].mxu0
        %4237 = vmatprep.mubr.bf16.mxu0 %v3005
        %4238 = vmatmul.mubr.bf16.gmra.mrb[0].mxu0 %v3004
        %v4239 = vpop.f32.mrb[0].mxu0
        %v4240 = vadd.f32 %v4079, %v4239
        %v4241 = vpop.f32.mrb[0].mxu0
        %v4242 = vpop.f32.mrb[0].mxu0
        %v4243 = vadd.f32 %v4082, %v4242
        %v4244 = vpop.f32.mrb[0].mxu0
        %4245 = vmatprep.mubr.bf16.mxu0 %v3014
        %4246 = vmatmul.mubr.bf16.gmra.mrb[0].mxu0 %v3013
        %v4247 = vpop.f32.mrb[0].mxu0
        %v4248 = vadd.f32 %v4087, %v4247
        %v4249 = vpop.f32.mrb[0].mxu0
        %v4250 = vpop.f32.mrb[0].mxu0
        %v4251 = vadd.f32 %v4090, %v4250
        %v4252 = vpop.f32.mrb[0].mxu0
        %4253 = vmatprep.mubr.bf16.mxu0 %v3023
        %4254 = vmatmul.mubr.bf16.gmra.mrb[0].mxu0 %v3022
        %v4255 = vpop.f32.mrb[0].mxu0
        %v4256 = vadd.f32 %v4095, %v4255
        %v4257 = vpop.f32.mrb[0].mxu0
        %v4258 = vpop.f32.mrb[0].mxu0
        %v4259 = vadd.f32 %v4098, %v4258
        %v4260 = vpop.f32.mrb[0].mxu0
        %4261 = vmatprep.mubr.bf16.mxu0 %v3032
        %4262 = vmatmul.mubr.bf16.gmra.mrb[0].mxu0 %v3031
        %v4263 = vpop.f32.mrb[0].mxu0
        %v4264 = vadd.f32 %v4103, %v4263
        %v4265 = vpop.f32.mrb[0].mxu0
        %v4266 = vpop.f32.mrb[0].mxu0
        %v4267 = vadd.f32 %v4106, %v4266
        %v4268 = vpop.f32.mrb[0].mxu0
        %4269 = vmatprep.mubr.bf16.mxu0 %v3041
        %4270 = vmatmul.mubr.bf16.gmra.mrb[0].mxu0 %v3040
        %v4271 = vpop.f32.mrb[0].mxu0
        %v4272 = vadd.f32 %v4111, %v4271
        %v4273 = vpop.f32.mrb[0].mxu0
        %v4274 = vpop.f32.mrb[0].mxu0
        %v4275 = vadd.f32 %v4114, %v4274
        %v4276 = vpop.f32.mrb[0].mxu0
        %4277 = vmatprep.mubr.bf16.mxu0 %v3050
        %4278 = vmatmul.mubr.bf16.gmra.mrb[0].mxu0 %v3049
        %v4279 = vpop.f32.mrb[0].mxu0
        %v4280 = vadd.f32 %v4119, %v4279
        %v4281 = vpop.f32.mrb[0].mxu0
        %v4282 = vpop.f32.mrb[0].mxu0
        %v4283 = vadd.f32 %v4122, %v4282
        %v4284 = vpop.f32.mrb[0].mxu0
        %4285 = vmatprep.mubr.bf16.mxu0 %v3059
        %4286 = vmatmul.mubr.bf16.gmra.mrb[0].mxu0 %v3058
        %v4287 = vpop.f32.mrb[0].mxu0
        %v4288 = vadd.f32 %v4127, %v4287
        %v4289 = vpop.f32.mrb[0].mxu0
        %v4290 = vpop.f32.mrb[0].mxu0
        %v4291 = vadd.f32 %v4130, %v4290
        %v4292 = vpop.f32.mrb[0].mxu0
        %4293 = vmatprep.mubr.bf16.mxu0 %v3068
        %4294 = vmatmul.mubr.bf16.gmra.mrb[0].mxu0 %v3067
        %v4295 = vpop.f32.mrb[0].mxu0
        %v4296 = vadd.f32 %v4135, %v4295
        %v4297 = vpop.f32.mrb[0].mxu0
        %v4298 = vpop.f32.mrb[0].mxu0
        %v4299 = vadd.f32 %v4138, %v4298
        %v4300 = vpop.f32.mrb[0].mxu0
        %4301 = vmatprep.mubr.bf16.mxu0 %v3077
        %4302 = vmatmul.mubr.bf16.gmra.mrb[0].mxu0 %v3076
        %v4303 = vpop.f32.mrb[0].mxu0
        %v4304 = vadd.f32 %v4143, %v4303
        %v4305 = vpop.f32.mrb[0].mxu0
        %v4306 = vpop.f32.mrb[0].mxu0
        %v4307 = vadd.f32 %v4146, %v4306
        %v4308 = vpop.f32.mrb[0].mxu0
        %4309 = vmatprep.mubr.bf16.mxu0 %v3086
        %4310 = vmatmul.mubr.bf16.gmra.mrb[0].mxu0 %v3085
        %v4311 = vpop.f32.mrb[0].mxu0
        %v4312 = vadd.f32 %v4151, %v4311
        %v4313 = vpop.f32.mrb[0].mxu0
        %v4314 = vpop.f32.mrb[0].mxu0
        %v4315 = vadd.f32 %v4154, %v4314
        %v4316 = vpop.f32.mrb[0].mxu0
        %4317 = vmatprep.mubr.bf16.mxu0 %v3095
        %4318 = vmatmul.mubr.bf16.gmra.mrb[0].mxu0 %v3094
        %v4319 = vpop.f32.mrb[0].mxu0
        %v4320 = vadd.f32 %v4159, %v4319
        %v4321 = vpop.f32.mrb[0].mxu0
        %v4322 = vpop.f32.mrb[0].mxu0
        %v4323 = vadd.f32 %v4162, %v4322
        %v4324 = vpop.f32.mrb[0].mxu0
        %4325 = vmatprep.mubr.bf16.mxu0 %v3104
        %4326 = vmatmul.mubr.bf16.gmra.mrb[0].mxu0 %v3103
        %v4327 = vpop.f32.mrb[0].mxu0
        %v4328 = vadd.f32 %v4167, %v4327
        %v4329 = vpop.f32.mrb[0].mxu0
        %v4330 = vpop.f32.mrb[0].mxu0
        %v4331 = vadd.f32 %v4170, %v4330
        %v4332 = vpop.f32.mrb[0].mxu0
        %4333 = vmatprep.mubr.bf16.mxu0 %v3113
        %4334 = vmatmul.mubr.bf16.gmra.mrb[0].mxu0 %v3112
        %v4335 = vpop.f32.mrb[0].mxu0
        %v4336 = vadd.f32 %v4175, %v4335
        %v4337 = vpop.f32.mrb[0].mxu0
        %v4338 = vpop.f32.mrb[0].mxu0
        %v4339 = vadd.f32 %v4178, %v4338
        %v4340 = vpop.f32.mrb[0].mxu0
        %4341 = vmatprep.mubr.bf16.mxu0 %v3122
        %4342 = vmatmul.mubr.bf16.gmra.mrb[0].mxu0 %v3121
        %v4343 = vpop.f32.mrb[0].mxu0
        %v4344 = vadd.f32 %v4183, %v4343
        %v4345 = vpop.f32.mrb[0].mxu0
        %v4346 = vpop.f32.mrb[0].mxu0
        %v4347 = vadd.f32 %v4186, %v4346
        %v4348 = vpop.f32.mrb[0].mxu0
        %4349 = vdwg.mxu0
        %4350 = vmatprep.subr.bf16.mxu0 0
        %4351 = vmatpush1.bf16.msra.mxu0 %v3626
        %4352 = vmatprep.subr.bf16.mxu0 0
        %4353 = vmatpush1.bf16.msra.mxu0 %v3627
        %4354 = vmatprep.subr.bf16.mxu0 0
        %4355 = vmatpush1.bf16.msra.mxu0 %v3628
        %4356 = vmatprep.subr.bf16.mxu0 0
        %4357 = vmatpush1.bf16.msra.mxu0 %v3629
        %4358 = vmatprep.subr.bf16.mxu0 0
        %4359 = vmatpush1.bf16.msra.mxu0 %v3630
        %4360 = vmatprep.subr.bf16.mxu0 0
        %4361 = vmatpush1.bf16.msra.mxu0 %v3631
        %4362 = vmatprep.subr.bf16.mxu0 0
        %4363 = vmatpush1.bf16.msra.mxu0 %v3632
        %4364 = vmatprep.subr.bf16.mxu0 0
        %4365 = vmatpush1.bf16.msra.mxu0 %v3633
        %4366 = vmatprep.subr.bf16.mxu0 0
        %4367 = vmatpush1.bf16.msra.mxu0 0
        %4368 = vmatprep.subr.bf16.mxu0 0
        %4369 = vmatpush1.bf16.msra.mxu0 0
        %4370 = vmatprep.subr.bf16.mxu0 0
        %4371 = vmatpush1.bf16.msra.mxu0 0
        %4372 = vmatprep.subr.bf16.mxu0 0
        %4373 = vmatpush1.bf16.msra.mxu0 0
        %4374 = vmatprep.subr.bf16.mxu0 0
        %4375 = vmatpush1.bf16.msra.mxu0 0
        %4376 = vmatprep.subr.bf16.mxu0 0
        %4377 = vmatpush1.bf16.msra.mxu0 0
        %4378 = vmatprep.subr.bf16.mxu0 0
        %4379 = vmatpush1.bf16.msra.mxu0 0
        %4380 = vmatprep.subr.bf16.mxu0 0
        %4381 = vmatpush1.bf16.msra.mxu0 0
        %4382 = vmatprep.mubr.bf16.mxu0 0
        %4383 = vmatmul.mubr.bf16.gmra.mrb[0].mxu0 %v2988
        %v4384 = vpop.f32.mrb[0].mxu0
        %v4385 = vadd.f32 %v4224, %v4384
        %v4386 = vpop.f32.mrb[0].mxu0
        %v4387 = vpop.f32.mrb[0].mxu0
        %v4388 = vadd.f32 %v4227, %v4387
        %v4389 = vpop.f32.mrb[0].mxu0
        %4390 = vmatprep.mubr.bf16.mxu0 0
        %4391 = vmatmul.mubr.bf16.gmra.mrb[0].mxu0 %v2997
        %v4392 = vpop.f32.mrb[0].mxu0
        %v4393 = vadd.f32 %v4232, %v4392
        %v4394 = vpop.f32.mrb[0].mxu0
        %v4395 = vpop.f32.mrb[0].mxu0
        %v4396 = vadd.f32 %v4235, %v4395
        %v4397 = vpop.f32.mrb[0].mxu0
        %4398 = vmatprep.mubr.bf16.mxu0 0
        %4399 = vmatmul.mubr.bf16.gmra.mrb[0].mxu0 %v3006
        %v4400 = vpop.f32.mrb[0].mxu0
        %v4401 = vadd.f32 %v4240, %v4400
        %v4402 = vpop.f32.mrb[0].mxu0
        %v4403 = vpop.f32.mrb[0].mxu0
        %v4404 = vadd.f32 %v4243, %v4403
        %v4405 = vpop.f32.mrb[0].mxu0
        %4406 = vmatprep.mubr.bf16.mxu0 0
        %4407 = vmatmul.mubr.bf16.gmra.mrb[0].mxu0 %v3015
        %v4408 = vpop.f32.mrb[0].mxu0
        %v4409 = vadd.f32 %v4248, %v4408
        %v4410 = vpop.f32.mrb[0].mxu0
        %v4411 = vpop.f32.mrb[0].mxu0
        %v4412 = vadd.f32 %v4251, %v4411
        %v4413 = vpop.f32.mrb[0].mxu0
        %4414 = vmatprep.mubr.bf16.mxu0 0
        %4415 = vmatmul.mubr.bf16.gmra.mrb[0].mxu0 %v3024
        %v4416 = vpop.f32.mrb[0].mxu0
        %v4417 = vadd.f32 %v4256, %v4416
        %v4418 = vpop.f32.mrb[0].mxu0
        %v4419 = vpop.f32.mrb[0].mxu0
        %v4420 = vadd.f32 %v4259, %v4419
        %v4421 = vpop.f32.mrb[0].mxu0
        %4422 = vmatprep.mubr.bf16.mxu0 0
        %4423 = vmatmul.mubr.bf16.gmra.mrb[0].mxu0 %v3033
        %v4424 = vpop.f32.mrb[0].mxu0
        %v4425 = vadd.f32 %v4264, %v4424
        %v4426 = vpop.f32.mrb[0].mxu0
        %v4427 = vpop.f32.mrb[0].mxu0
        %v4428 = vadd.f32 %v4267, %v4427
        %v4429 = vpop.f32.mrb[0].mxu0
        %4430 = vmatprep.mubr.bf16.mxu0 0
        %4431 = vmatmul.mubr.bf16.gmra.mrb[0].mxu0 %v3042
        %v4432 = vpop.f32.mrb[0].mxu0
        %v4433 = vadd.f32 %v4272, %v4432
        %v4434 = vpop.f32.mrb[0].mxu0
        %v4435 = vpop.f32.mrb[0].mxu0
        %v4436 = vadd.f32 %v4275, %v4435
        %v4437 = vpop.f32.mrb[0].mxu0
        %4438 = vmatprep.mubr.bf16.mxu0 0
        %4439 = vmatmul.mubr.bf16.gmra.mrb[0].mxu0 %v3051
        %v4440 = vpop.f32.mrb[0].mxu0
        %v4441 = vadd.f32 %v4280, %v4440
        %v4442 = vpop.f32.mrb[0].mxu0
        %v4443 = vpop.f32.mrb[0].mxu0
        %v4444 = vadd.f32 %v4283, %v4443
        %v4445 = vpop.f32.mrb[0].mxu0
        %4446 = vmatprep.mubr.bf16.mxu0 0
        %4447 = vmatmul.mubr.bf16.gmra.mrb[0].mxu0 %v3060
        %v4448 = vpop.f32.mrb[0].mxu0
        %v4449 = vadd.f32 %v4288, %v4448
        %v4450 = vpop.f32.mrb[0].mxu0
        %v4451 = vpop.f32.mrb[0].mxu0
        %v4452 = vadd.f32 %v4291, %v4451
        %v4453 = vpop.f32.mrb[0].mxu0
        %4454 = vmatprep.mubr.bf16.mxu0 0
        %4455 = vmatmul.mubr.bf16.gmra.mrb[0].mxu0 %v3069
        %v4456 = vpop.f32.mrb[0].mxu0
        %v4457 = vadd.f32 %v4296, %v4456
        %v4458 = vpop.f32.mrb[0].mxu0
        %v4459 = vpop.f32.mrb[0].mxu0
        %v4460 = vadd.f32 %v4299, %v4459
        %v4461 = vpop.f32.mrb[0].mxu0
        %4462 = vmatprep.mubr.bf16.mxu0 0
        %4463 = vmatmul.mubr.bf16.gmra.mrb[0].mxu0 %v3078
        %v4464 = vpop.f32.mrb[0].mxu0
        %v4465 = vadd.f32 %v4304, %v4464
        %v4466 = vpop.f32.mrb[0].mxu0
        %v4467 = vpop.f32.mrb[0].mxu0
        %v4468 = vadd.f32 %v4307, %v4467
        %v4469 = vpop.f32.mrb[0].mxu0
        %4470 = vmatprep.mubr.bf16.mxu0 0
        %4471 = vmatmul.mubr.bf16.gmra.mrb[0].mxu0 %v3087
        %v4472 = vpop.f32.mrb[0].mxu0
        %v4473 = vadd.f32 %v4312, %v4472
        %v4474 = vpop.f32.mrb[0].mxu0
        %v4475 = vpop.f32.mrb[0].mxu0
        %v4476 = vadd.f32 %v4315, %v4475
        %v4477 = vpop.f32.mrb[0].mxu0
        %4478 = vmatprep.mubr.bf16.mxu0 0
        %4479 = vmatmul.mubr.bf16.gmra.mrb[0].mxu0 %v3096
        %v4480 = vpop.f32.mrb[0].mxu0
        %v4481 = vadd.f32 %v4320, %v4480
        %v4482 = vpop.f32.mrb[0].mxu0
        %v4483 = vpop.f32.mrb[0].mxu0
        %v4484 = vadd.f32 %v4323, %v4483
        %v4485 = vpop.f32.mrb[0].mxu0
        %4486 = vmatprep.mubr.bf16.mxu0 0
        %4487 = vmatmul.mubr.bf16.gmra.mrb[0].mxu0 %v3105
        %v4488 = vpop.f32.mrb[0].mxu0
        %v4489 = vadd.f32 %v4328, %v4488
        %v4490 = vpop.f32.mrb[0].mxu0
        %v4491 = vpop.f32.mrb[0].mxu0
        %v4492 = vadd.f32 %v4331, %v4491
        %v4493 = vpop.f32.mrb[0].mxu0
        %4494 = vmatprep.mubr.bf16.mxu0 0
        %4495 = vmatmul.mubr.bf16.gmra.mrb[0].mxu0 %v3114
        %v4496 = vpop.f32.mrb[0].mxu0
        %v4497 = vadd.f32 %v4336, %v4496
        %v4498 = vpop.f32.mrb[0].mxu0
        %v4499 = vpop.f32.mrb[0].mxu0
        %v4500 = vadd.f32 %v4339, %v4499
        %v4501 = vpop.f32.mrb[0].mxu0
        %4502 = vmatprep.mubr.bf16.mxu0 0
        %4503 = vmatmul.mubr.bf16.gmra.mrb[0].mxu0 %v3123
        %v4504 = vpop.f32.mrb[0].mxu0
        %v4505 = vadd.f32 %v4344, %v4504
        %v4506 = vpop.f32.mrb[0].mxu0
        %v4507 = vpop.f32.mrb[0].mxu0
        %v4508 = vadd.f32 %v4347, %v4507
        %v4509 = vpop.f32.mrb[0].mxu0
        %4510 = vdwg.mxu0
        %v4511 = vld [vmem:[%s340] sm:$0xff]
        %v4512 = vld [vmem:[%s340 + $0x8] sm:$0xff]
        %v4513 = vld [vmem:[%s340 + $0x10] sm:$0xff]
        %v4514 = vld [vmem:[%s340 + $0x18] sm:$0xff]
        %v4515 = vld [vmem:[%s340 + $0x20] sm:$0xff]
        %v4516 = vld [vmem:[%s340 + $0x28] sm:$0xff]
        %v4517 = vld [vmem:[%s340 + $0x30] sm:$0xff]
        %v4518 = vld [vmem:[%s340 + $0x38] sm:$0xff]
        %v4519 = vld [vmem:[%s340 + $0x40] sm:$0xff]
        %v4520 = vld [vmem:[%s340 + $0x48] sm:$0xff]
        %v4521 = vld [vmem:[%s340 + $0x50] sm:$0xff]
        %v4522 = vld [vmem:[%s340 + $0x58] sm:$0xff]
        %v4523 = vld [vmem:[%s340 + $0x60] sm:$0xff]
        %v4524 = vld [vmem:[%s340 + $0x68] sm:$0xff]
        %v4525 = vld [vmem:[%s340 + $0x70] sm:$0xff]
        %v4526 = vld [vmem:[%s340 + $0x78] sm:$0xff]
        %v4527 = vld [vmem:[%s340 + $0x80] sm:$0xff]
        %v4528 = vld [vmem:[%s340 + $0x88] sm:$0xff]
        %v4529 = vld [vmem:[%s340 + $0x90] sm:$0xff]
        %v4530 = vld [vmem:[%s340 + $0x98] sm:$0xff]
        %v4531 = vld [vmem:[%s340 + $0xa0] sm:$0xff]
        %v4532 = vld [vmem:[%s340 + $0xa8] sm:$0xff]
        %v4533 = vld [vmem:[%s340 + $0xb0] sm:$0xff]
        %v4534 = vld [vmem:[%s340 + $0xb8] sm:$0xff]
        %v4535 = vld [vmem:[%s340 + $0xc0] sm:$0xff]
        %v4536 = vld [vmem:[%s340 + $0xc8] sm:$0xff]
        %v4537 = vld [vmem:[%s340 + $0xd0] sm:$0xff]
        %v4538 = vld [vmem:[%s340 + $0xd8] sm:$0xff]
        %v4539 = vld [vmem:[%s340 + $0xe0] sm:$0xff]
        %v4540 = vld [vmem:[%s340 + $0xe8] sm:$0xff]
        %v4541 = vld [vmem:[%s340 + $0xf0] sm:$0xff]
        %v4542 = vld [vmem:[%s340 + $0xf8] sm:$0xff]
        %v4543 = vadd.f32 %v4385, %v4511
        %v4544 = vadd.f32 %v4388, %v4512
        %v4545 = vadd.f32 %v4393, %v4513
        %v4546 = vadd.f32 %v4396, %v4514
        %v4547 = vadd.f32 %v4401, %v4515
        %v4548 = vadd.f32 %v4404, %v4516
        %v4549 = vadd.f32 %v4409, %v4517
        %v4550 = vadd.f32 %v4412, %v4518
        %v4551 = vadd.f32 %v4417, %v4519
        %v4552 = vadd.f32 %v4420, %v4520
        %v4553 = vadd.f32 %v4425, %v4521
        %v4554 = vadd.f32 %v4428, %v4522
        %v4555 = vadd.f32 %v4433, %v4523
        %v4556 = vadd.f32 %v4436, %v4524
        %v4557 = vadd.f32 %v4441, %v4525
        %v4558 = vadd.f32 %v4444, %v4526
        %v4559 = vadd.f32 %v4449, %v4527
        %v4560 = vadd.f32 %v4452, %v4528
        %v4561 = vadd.f32 %v4457, %v4529
        %v4562 = vadd.f32 %v4460, %v4530
        %v4563 = vadd.f32 %v4465, %v4531
        %v4564 = vadd.f32 %v4468, %v4532
        %v4565 = vadd.f32 %v4473, %v4533
        %v4566 = vadd.f32 %v4476, %v4534
        %v4567 = vadd.f32 %v4481, %v4535
        %v4568 = vadd.f32 %v4484, %v4536
        %v4569 = vadd.f32 %v4489, %v4537
        %v4570 = vadd.f32 %v4492, %v4538
        %v4571 = vadd.f32 %v4497, %v4539
        %v4572 = vadd.f32 %v4500, %v4540
        %v4573 = vadd.f32 %v4505, %v4541
        %v4574 = vadd.f32 %v4508, %v4542
        %v4575 = vmax.f32 %v4543, 0.0
        %v4576 = vmax.f32 %v4544, 0.0
        %v4577 = vmax.f32 %v4545, 0.0
        %v4578 = vmax.f32 %v4546, 0.0
        %v4579 = vmax.f32 %v4547, 0.0
        %v4580 = vmax.f32 %v4548, 0.0
        %v4581 = vmax.f32 %v4549, 0.0
        %v4582 = vmax.f32 %v4550, 0.0
        %v4583 = vmax.f32 %v4551, 0.0
        %v4584 = vmax.f32 %v4552, 0.0
        %v4585 = vmax.f32 %v4553, 0.0
        %v4586 = vmax.f32 %v4554, 0.0
        %v4587 = vmax.f32 %v4555, 0.0
        %v4588 = vmax.f32 %v4556, 0.0
        %v4589 = vmax.f32 %v4557, 0.0
        %v4590 = vmax.f32 %v4558, 0.0
        %v4591 = vmax.f32 %v4559, 0.0
        %v4592 = vmax.f32 %v4560, 0.0
        %v4593 = vmax.f32 %v4561, 0.0
        %v4594 = vmax.f32 %v4562, 0.0
        %v4595 = vmax.f32 %v4563, 0.0
        %v4596 = vmax.f32 %v4564, 0.0
        %v4597 = vmax.f32 %v4565, 0.0
        %v4598 = vmax.f32 %v4566, 0.0
        %v4599 = vmax.f32 %v4567, 0.0
        %v4600 = vmax.f32 %v4568, 0.0
        %v4601 = vmax.f32 %v4569, 0.0
        %v4602 = vmax.f32 %v4570, 0.0
        %v4603 = vmax.f32 %v4571, 0.0
        %v4604 = vmax.f32 %v4572, 0.0
        %v4605 = vmax.f32 %v4573, 0.0
        %v4606 = vmax.f32 %v4574, 0.0
        %4607 = vst [vmem:[%s340] sm:$0xff] %v4575
        %4608 = vst [vmem:[%s340 + $0x8] sm:$0xff] %v4576
        %4609 = vst [vmem:[%s340 + $0x10] sm:$0xff] %v4577
        %4610 = vst [vmem:[%s340 + $0x18] sm:$0xff] %v4578
        %4611 = vst [vmem:[%s340 + $0x20] sm:$0xff] %v4579
        %4612 = vst [vmem:[%s340 + $0x28] sm:$0xff] %v4580
        %4613 = vst [vmem:[%s340 + $0x30] sm:$0xff] %v4581
        %4614 = vst [vmem:[%s340 + $0x38] sm:$0xff] %v4582
        %4615 = vst [vmem:[%s340 + $0x40] sm:$0xff] %v4583
        %4616 = vst [vmem:[%s340 + $0x48] sm:$0xff] %v4584
        %4617 = vst [vmem:[%s340 + $0x50] sm:$0xff] %v4585
        %4618 = vst [vmem:[%s340 + $0x58] sm:$0xff] %v4586
        %4619 = vst [vmem:[%s340 + $0x60] sm:$0xff] %v4587
        %4620 = vst [vmem:[%s340 + $0x68] sm:$0xff] %v4588
        %4621 = vst [vmem:[%s340 + $0x70] sm:$0xff] %v4589
        %4622 = vst [vmem:[%s340 + $0x78] sm:$0xff] %v4590
        %4623 = vst [vmem:[%s340 + $0x80] sm:$0xff] %v4591
        %4624 = vst [vmem:[%s340 + $0x88] sm:$0xff] %v4592
        %4625 = vst [vmem:[%s340 + $0x90] sm:$0xff] %v4593
        %4626 = vst [vmem:[%s340 + $0x98] sm:$0xff] %v4594
        %4627 = vst [vmem:[%s340 + $0xa0] sm:$0xff] %v4595
        %4628 = vst [vmem:[%s340 + $0xa8] sm:$0xff] %v4596
        %4629 = vst [vmem:[%s340 + $0xb0] sm:$0xff] %v4597
        %4630 = vst [vmem:[%s340 + $0xb8] sm:$0xff] %v4598
        %4631 = vst [vmem:[%s340 + $0xc0] sm:$0xff] %v4599
        %4632 = vst [vmem:[%s340 + $0xc8] sm:$0xff] %v4600
        %4633 = vst [vmem:[%s340 + $0xd0] sm:$0xff] %v4601
        %4634 = vst [vmem:[%s340 + $0xd8] sm:$0xff] %v4602
        %4635 = vst [vmem:[%s340 + $0xe0] sm:$0xff] %v4603
        %4636 = vst [vmem:[%s340 + $0xe8] sm:$0xff] %v4604
        %4637 = vst [vmem:[%s340 + $0xf0] sm:$0xff] %v4605
        %4638 = vst [vmem:[%s340 + $0xf8] sm:$0xff] %v4606
        %s4639 = sand.u32 %s186, 1
        %s4640 = scalar_lea.sflag [#allocation5], %s4639
        %s4641 = sand.u32 %s186, 1
        %s4642 = smul.addr %s4641, 256
        %s4643 = scalar_lea.vmem [#allocation11], %s4642
        // Predicated region
        $region65: #{tpu_custom_call.1} parent=47 // pred_check
          %p4644 = pneg %p196
        $region66: #{tpu_custom_call.1} parent=47 // pred_check_branch
          %4646 = sbr.rel (%p4644) target = $region68
        $region67: #{tpu_custom_call.1} parent=47 // pred_region
          %s4648 = ssub.s32 4096, 4096
          %4649 = vsyncadd %s4640, %s4648
          %s4650 = smul.addr %s26, 32
          %s4651 = smul.addr %s4650, 128
          %s4652 = scalar_lea.hbm %s7, %s4651
          %s4653 = sshll.u32 %s4643, 4
          %s4654 = int_to_ptr.vmem [resolvable:$true] %s4653
          %4659 = dma.vmem_to_hbm [thread:$0]  %s4654, 4096, %s4652, %s4640, 128, 128, 8
        $region68: #{tpu_custom_call.1} parent=47 // pred_fallthru
          _
      $region48: #{tpu_custom_call.1} parent=5 // pred_fallthru
        _
      %p4660 = scmp.le.s32.totalorder 2, %s21
      // Predicated region
      $region69: #{tpu_custom_call.1} parent=5 // pred_check
        %p4661 = pneg %p4660
      $region70: #{tpu_custom_call.1} parent=5 // pred_check_branch
        %4663 = sbr.rel (%p4661) target = $region72
      $region71: #{tpu_custom_call.1} parent=5 // pred_region
        %s4664 = ssub.s32 %s21, 2
        // Predicated region
        $region73: #{tpu_custom_call.1} parent=71 // pred_check
          %p4665 = pneg %p202
        $region74: #{tpu_custom_call.1} parent=71 // pred_check_branch
          %4667 = sbr.rel (%p4665) target = $region76
        $region75: #{tpu_custom_call.1} parent=71 // pred_region
          %s4668 = sand.u32 %s187, 1
          %s4669 = scalar_lea.sflag [#allocation5], %s4668
          %s4670 = sand.u32 %s187, 1
          %s4671 = smul.addr %s4670, 256
          %s4672 = scalar_lea.vmem [#allocation11], %s4671
          %4673 = dma.done %s4669, 4096
        $region76: #{tpu_custom_call.1} parent=71 // pred_fallthru
          _
      $region72: #{tpu_custom_call.1} parent=5 // pred_fallthru
        _
    $region6: #{tpu_custom_call.1} parent=1 // loop_footer
      %s25 = sadd.s32 1, %s21
    $region7: #{tpu_custom_call.1} parent=1 // loop_footer_branch
      %20 = sbr.rel target = $region3
    $region8: #{tpu_custom_call.1} parent=1 // loop_exit
      _
    %4674 = vsyncpa [#allocation4], 1
    %s4675 = scalar_lea.sflag [#allocation4], 1
    %4676 = vsyncpa %s4675, 1
    %4677 = vsyncpa [#allocation7], 1
    %4678 = vsyncpa [#allocation10], 1
    %4679 = vsyncpa [#allocation5], 1
    %s4680 = scalar_lea.sflag [#allocation5], 1
    %4681 = vsyncpa %s4680, 1

</llo_original>
